<compile_context>
chip_gen: v7x
topology: tpu7x:2x2x1
jax: 0.10.0
libtpu: 0.0.40
codegen_flags: <defaults>
</compile_context>

<pallas_src>
import functools
import math

import jax
import jax.numpy as jnp
from jax import lax
from jax.experimental import pallas as pl
from jax.experimental.pallas import tpu as pltpu

F32 = jnp.float32
BF16 = jnp.bfloat16
NEG_INF = -1e9
LN_EPS = 1e-5
VMEM_LIMIT = 32 * 1024 * 1024


def _round_up(x, m):
    return ((x + m - 1) // m) * m


def _pick_block(dim, target, quantum):
    """Largest multiple of `quantum` <= target that divides `dim` (falls back to dim)."""
    if dim <= target:
        return dim
    b = (target // quantum) * quantum
    while b >= quantum:
        if dim % b == 0:
            return b
        b -= quantum
    return dim


def _compiler_params(dimension_semantics):
    return pltpu.CompilerParams(
        dimension_semantics=dimension_semantics,
        vmem_limit_bytes=VMEM_LIMIT,
    )


# ----------------------------------------------------------------------------
# In-kernel helpers
# ----------------------------------------------------------------------------
def _masked_layernorm(xv, g, b, d_true):
    """LayerNorm over the first `d_true` columns of xv (pad columns assumed zero).

    Mean/var use the true d_model as divisor; pad columns are excluded from the
    variance via an iota mask and come out exactly zero (gamma/beta pads are zero).
    """
    inv_d = 1.0 / d_true
    mu = jnp.sum(xv, axis=-1, keepdims=True) * inv_d
    col = lax.broadcasted_iota(jnp.int32, xv.shape, xv.ndim - 1) < d_true
    diff = jnp.where(col, xv - mu, 0.0)
    var = jnp.sum(diff * diff, axis=-1, keepdims=True) * inv_d
    return diff * lax.rsqrt(var + LN_EPS) * g + b


def _attend_heads(q, k, v, keep, o_ref, *, n_heads, d_head, scale):
    """q: (Tq, Dp) bf16, k/v: (Tk, Dp) bf16, keep: bool broadcastable to (Tq, Tk).

    Heads occupy the first n_heads*d_head lanes; per-head context is written into
    o_ref[0, :, h*d_head:(h+1)*d_head] after zero-initializing the (padded) block,
    so the HBM-facing store is one lane-dense (Tq, Dp) block.
    """
    o_ref[...] = jnp.zeros_like(o_ref)
    for h in range(n_heads):
        sl = slice(h * d_head, (h + 1) * d_head)
        s = lax.dot_general(q[:, sl], k[:, sl], (((1,), (1,)), ((), ())),
                            preferred_element_type=F32) * scale
        s = jnp.where(keep, s, NEG_INF)
        s = s - jnp.max(s, axis=-1, keepdims=True)
        p = jnp.exp(s)
        p = p * pl.reciprocal(jnp.sum(p, axis=-1, keepdims=True), approx=True)
        ctx = jnp.dot(p.astype(BF16), v[:, sl], preferred_element_type=F32)
        o_ref[0, :, sl] = ctx.astype(o_ref.dtype)


# ----------------------------------------------------------------------------
# Fused self-attention (QKV projection + attention), one grid step per batch elem.
# ----------------------------------------------------------------------------
def _self_attn_kernel(tok_ref, x_ref, wqkv_ref, bqkv_ref, o_ref, *,
                      n_heads, d_head, d_pad, scale, causal):
    x = x_ref[0]                                                   # (T, Dp) bf16
    qkv = jnp.dot(x, wqkv_ref[...], preferred_element_type=F32) + bqkv_ref[...]
    qkv = qkv.astype(BF16)                                         # (T, 3*Dp)
    q = qkv[:, :d_pad]
    k = qkv[:, d_pad:2 * d_pad]
    v = qkv[:, 2 * d_pad:]
    t = x.shape[0]
    if causal:
        # Decoder self-attention: nopeak & target-query validity (reference semantics).
        qi = lax.broadcasted_iota(jnp.int32, (t, t), 0)
        ki = lax.broadcasted_iota(jnp.int32, (t, t), 1)
        keep = (ki <= qi) & (tok_ref[0] != -1)                     # (T,T) & (T,1)
    else:
        # Encoder self-attention: source-key validity.
        keep = tok_ref[0] != -1                                    # (1,T) -> broadcast
    _attend_heads(q, k, v, keep, o_ref, n_heads=n_heads, d_head=d_head, scale=scale)


def pallas_self_attention(x, w_qkv, b_qkv, tok, *, n_heads, d_model, causal):
    B, T, Dp = x.shape
    d_head = d_model // n_heads
    scale = 1.0 / math.sqrt(d_head)
    tok_block = (1,) + tok.shape[1:]
    kernel = functools.partial(_self_attn_kernel, n_heads=n_heads, d_head=d_head,
                               d_pad=Dp, scale=scale, causal=causal)
    return pl.pallas_call(
        kernel,
        out_shape=jax.ShapeDtypeStruct((B, T, Dp), BF16),
        grid=(B,),
        in_specs=[
            pl.BlockSpec(tok_block, lambda b: (b, 0, 0)),
            pl.BlockSpec((1, T, Dp), lambda b: (b, 0, 0)),
            pl.BlockSpec((Dp, 3 * Dp), lambda b: (0, 0)),
            pl.BlockSpec((1, 3 * Dp), lambda b: (0, 0)),
        ],
        out_specs=pl.BlockSpec((1, T, Dp), lambda b: (b, 0, 0)),
        compiler_params=_compiler_params(("parallel",)),
    )(tok, x, w_qkv, b_qkv)


# ----------------------------------------------------------------------------
# Fused cross-attention (Q proj + fused KV proj + attention), one step per batch.
# ----------------------------------------------------------------------------
def _cross_attn_kernel(tok_ref, xq_ref, xe_ref, wq_ref, bq_ref, wkv_ref, bkv_ref, o_ref,
                       *, n_heads, d_head, d_pad, scale):
    xq = xq_ref[0]                                                 # (Tq, Dp) bf16
    xe = xe_ref[0]                                                 # (Tk, Dp) bf16
    q = (jnp.dot(xq, wq_ref[...], preferred_element_type=F32) + bq_ref[...]).astype(BF16)
    kv = (jnp.dot(xe, wkv_ref[...], preferred_element_type=F32) + bkv_ref[...]).astype(BF16)
    k = kv[:, :d_pad]
    v = kv[:, d_pad:]
    keep = tok_ref[0] != -1                                        # (1, Tk) src validity
    _attend_heads(q, k, v, keep, o_ref, n_heads=n_heads, d_head=d_head, scale=scale)


def pallas_cross_attention(x_dec, enc_out, w_q, b_q, w_kv, b_kv, src_tok, *,
                           n_heads, d_model):
    B, Tq, Dp = x_dec.shape
    Tk = enc_out.shape[1]
    d_head = d_model // n_heads
    scale = 1.0 / math.sqrt(d_head)
    kernel = functools.partial(_cross_attn_kernel, n_heads=n_heads, d_head=d_head,
                               d_pad=Dp, scale=scale)
    return pl.pallas_call(
        kernel,
        out_shape=jax.ShapeDtypeStruct((B, Tq, Dp), BF16),
        grid=(B,),
        in_specs=[
            pl.BlockSpec((1, 1, Tk), lambda b: (b, 0, 0)),
            pl.BlockSpec((1, Tq, Dp), lambda b: (b, 0, 0)),
            pl.BlockSpec((1, Tk, Dp), lambda b: (b, 0, 0)),
            pl.BlockSpec((Dp, Dp), lambda b: (0, 0)),
            pl.BlockSpec((1, Dp), lambda b: (0, 0)),
            pl.BlockSpec((Dp, 2 * Dp), lambda b: (0, 0)),
            pl.BlockSpec((1, 2 * Dp), lambda b: (0, 0)),
        ],
        out_specs=pl.BlockSpec((1, Tq, Dp), lambda b: (b, 0, 0)),
        compiler_params=_compiler_params(("parallel",)),
    )(src_tok, x_dec, enc_out, w_q, b_q, w_kv, b_kv)


# ----------------------------------------------------------------------------
# Fused output-projection + residual add + LayerNorm.
# ----------------------------------------------------------------------------
def _proj_res_ln_kernel(a_ref, w_ref, b_ref, r_ref, g_ref, bt_ref, o_ref, *, d_true):
    y = jnp.dot(a_ref[...], w_ref[...], preferred_element_type=F32) + b_ref[...]
    xv = r_ref[...].astype(F32) + y
    o_ref[...] = _masked_layernorm(xv, g_ref[...], bt_ref[...], d_true).astype(o_ref.dtype)


def pallas_proj_residual_ln(a, w, b, resid, gamma, beta, d_true, block_m=512):
    M, Dp = a.shape
    Np = w.shape[1]
    bm = _pick_block(M, block_m, 8)
    kernel = functools.partial(_proj_res_ln_kernel, d_true=d_true)
    return pl.pallas_call(
        kernel,
        out_shape=jax.ShapeDtypeStruct((M, Np), BF16),
        grid=(M // bm,),
        in_specs=[
            pl.BlockSpec((bm, Dp), lambda i: (i, 0)),
            pl.BlockSpec((Dp, Np), lambda i: (0, 0)),
            pl.BlockSpec((1, Np), lambda i: (0, 0)),
            pl.BlockSpec((bm, Np), lambda i: (i, 0)),
            pl.BlockSpec((1, Np), lambda i: (0, 0)),
            pl.BlockSpec((1, Np), lambda i: (0, 0)),
        ],
        out_specs=pl.BlockSpec((bm, Np), lambda i: (i, 0)),
        compiler_params=_compiler_params(("parallel",)),
    )(a, w, b, resid, gamma, beta)


# ----------------------------------------------------------------------------
# Fused FFN (w1 + ReLU + w2) + residual add + LayerNorm (one pallas_call).
# ----------------------------------------------------------------------------
def _ffn_res_ln_kernel(x_ref, w1_ref, b1_ref, w2_ref, b2_ref, g_ref, bt_ref, o_ref, *,
                       d_true):
    xb = x_ref[...]                                                # (bm, Dp) bf16
    h = jnp.dot(xb, w1_ref[...], preferred_element_type=F32) + b1_ref[...]
    h = jnp.maximum(h, 0.0).astype(BF16)
    y = jnp.dot(h, w2_ref[...], preferred_element_type=F32) + b2_ref[...]
    xv = xb.astype(F32) + y
    o_ref[...] = _masked_layernorm(xv, g_ref[...], bt_ref[...], d_true).astype(o_ref.dtype)


def pallas_ffn_residual_ln(x, w1, b1, w2, b2, gamma, beta, d_true, block_m=512):
    M, Dp = x.shape
    Fp = w1.shape[1]
    bm = _pick_block(M, block_m, 8)
    kernel = functools.partial(_ffn_res_ln_kernel, d_true=d_true)
    return pl.pallas_call(
        kernel,
        out_shape=jax.ShapeDtypeStruct((M, Dp), BF16),
        grid=(M // bm,),
        in_specs=[
            pl.BlockSpec((bm, Dp), lambda i: (i, 0)),
            pl.BlockSpec((Dp, Fp), lambda i: (0, 0)),
            pl.BlockSpec((1, Fp), lambda i: (0, 0)),
            pl.BlockSpec((Fp, Dp), lambda i: (0, 0)),
            pl.BlockSpec((1, Dp), lambda i: (0, 0)),
            pl.BlockSpec((1, Dp), lambda i: (0, 0)),
            pl.BlockSpec((1, Dp), lambda i: (0, 0)),
        ],
        out_specs=pl.BlockSpec((bm, Dp), lambda i: (i, 0)),
        compiler_params=_compiler_params(("parallel",)),
    )(x, w1, b1, w2, b2, gamma, beta)


# ----------------------------------------------------------------------------
# LM head: (M, Kp) @ (Kp, Vp) + bias, f32 output accumulated directly in o_ref.
# ----------------------------------------------------------------------------
def _head_kernel(x_ref, w_ref, b_ref, o_ref):
    @pl.when(pl.program_id(2) == 0)
    def _init():
        o_ref[...] = jnp.broadcast_to(b_ref[...], o_ref.shape)

    o_ref[...] += jnp.dot(x_ref[...], w_ref[...], preferred_element_type=F32)


def pallas_lm_head(x, w, b, block_m=512, block_n=512, block_k=512):
    M, Kp = x.shape
    Np = w.shape[1]
    bm = _pick_block(M, block_m, 8)
    bn = _pick_block(Np, block_n, 128)
    bk = _pick_block(Kp, block_k, 128)
    return pl.pallas_call(
        _head_kernel,
        out_shape=jax.ShapeDtypeStruct((M, Np), F32),
        grid=(M // bm, Np // bn, Kp // bk),
        in_specs=[
            pl.BlockSpec((bm, bk), lambda i, j, k: (i, k)),
            pl.BlockSpec((bk, bn), lambda i, j, k: (k, j)),
            pl.BlockSpec((1, bn), lambda i, j, k: (0, j)),
        ],
        out_specs=pl.BlockSpec((bm, bn), lambda i, j, k: (i, j)),
        compiler_params=_compiler_params(("parallel", "parallel", "arbitrary")),
    )(x, w, b)


# ----------------------------------------------------------------------------
# Model glue (everything stays in the 128-padded feature dim, bf16 activations)
# ----------------------------------------------------------------------------
def embed(params, tokens):
    # TODO(synk): no padding_idx handling for -1 tokens (jnp.take clamps to index 0).
    T = tokens.shape[1]
    e = jnp.take(params["tok_emb"], tokens, axis=0) + params["pe"][:T][None]
    return e.astype(BF16)


def encoder_block(p, x, src_tok_k, n_heads, d_model):
    B, T, Dp = x.shape
    a = p["attn"]
    ctx = pallas_self_attention(x, a["w_qkv"], a["b_qkv"], src_tok_k,
                                n_heads=n_heads, d_model=d_model, causal=False)
    x2 = pallas_proj_residual_ln(ctx.reshape(B * T, Dp), a["wo"], a["bo"],
                                 x.reshape(B * T, Dp), p["ln1_g"], p["ln1_b"], d_model)
    x3 = pallas_ffn_residual_ln(x2, p["ff_w1"], p["ff_b1"], p["ff_w2"], p["ff_b2"],
                                p["ln2_g"], p["ln2_b"], d_model)
    return x3.reshape(B, T, Dp)


def decoder_block(p, x, enc_out, src_tok_k, tgt_tok_q, n_heads, d_model):
    B, T, Dp = x.shape
    sa = p["self_attn"]
    ctx = pallas_self_attention(x, sa["w_qkv"], sa["b_qkv"], tgt_tok_q,
                                n_heads=n_heads, d_model=d_model, causal=True)
    x = pallas_proj_residual_ln(ctx.reshape(B * T, Dp), sa["wo"], sa["bo"],
                                x.reshape(B * T, Dp), p["ln1_g"], p["ln1_b"], d_model)
    x = x.reshape(B, T, Dp)

    ca = p["cross_attn"]
    ctx = pallas_cross_attention(x, enc_out, ca["w_q"], ca["b_q"], ca["w_kv"], ca["b_kv"],
                                 src_tok_k, n_heads=n_heads, d_model=d_model)
    x2 = pallas_proj_residual_ln(ctx.reshape(B * T, Dp), ca["wo"], ca["bo"],
                                 x.reshape(B * T, Dp), p["ln2_g"], p["ln2_b"], d_model)
    x3 = pallas_ffn_residual_ln(x2, p["ff_w1"], p["ff_b1"], p["ff_w2"], p["ff_b2"],
                                p["ln3_g"], p["ln3_b"], d_model)
    return x3.reshape(B, T, Dp)


def transformer_forward(params, inputs, outputs, *, n_enc_heads, n_dec_heads,
                        d_model, n_tokens):
    B, S = inputs.shape
    T = outputs.shape[1]
    # Token ids passed straight into the attention kernels; masks built in-kernel.
    src_tok_k = inputs.reshape(B, 1, S).astype(jnp.int32)    # key-axis validity (enc/cross)
    tgt_tok_q = outputs.reshape(B, T, 1).astype(jnp.int32)   # query-axis validity (dec self)

    z = embed(params, inputs)
    for p in params["encoder"]:
        z = encoder_block(p, z, src_tok_k, n_enc_heads, d_model)

    x = embed(params, outputs)
    for p in params["decoder"]:
        x = decoder_block(p, x, z, src_tok_k, tgt_tok_q, n_dec_heads, d_model)

    Dp = x.shape[-1]
    logits = pallas_lm_head(x.reshape(B * T, Dp), params["head_w"], params["head_b"])
    return logits[:, :n_tokens].reshape(B, T, n_tokens)


# ----------------------------------------------------------------------------
# Parameter init (matches _init_weights: N(0, 0.02) Linear/Embedding weights, zero bias,
# LayerNorm gamma=1 / beta=0).  All feature dims zero-padded to multiples of 128 once;
# weights stored bf16, biases / LN params f32.  Fused QKV / KV weights are per-segment
# draws, distributionally identical to separate Linears.
# ----------------------------------------------------------------------------
def sinusoidal_pe(seq_len, d_model, d_pad):
    pos = jnp.arange(seq_len, dtype=F32)[:, None]
    i = jnp.arange(0, d_model, 2, dtype=F32)
    div = jnp.exp(-math.log(10000.0) * i / d_model)
    pe = jnp.zeros((seq_len, d_pad), dtype=F32)
    pe = pe.at[:, 0:d_model:2].set(jnp.sin(pos * div))
    pe = pe.at[:, 1:d_model:2].set(jnp.cos(pos * div))
    return pe


def _init_padded_linear(key, d_in, d_out, in_pad, out_pad):
    w = 0.02 * jax.random.normal(key, (d_in, d_out), F32)
    w = jnp.pad(w, ((0, in_pad - d_in), (0, out_pad - d_out))).astype(BF16)
    b = jnp.zeros((1, out_pad), F32)
    return w, b


def _init_fused_linear(key, d_in, d_out, in_pad, out_pad, n_fused):
    keys = jax.random.split(key, n_fused)
    ws = [_init_padded_linear(k, d_in, d_out, in_pad, out_pad)[0] for k in keys]
    return jnp.concatenate(ws, axis=1), jnp.zeros((1, n_fused * out_pad), F32)


def _init_ln(d, dp):
    g = jnp.pad(jnp.ones((d,), F32), (0, dp - d)).reshape(1, dp)
    b = jnp.zeros((1, dp), F32)
    return g, b


def _init_self_attn(key, d, dp):
    k_qkv, k_o = jax.random.split(key)
    w_qkv, b_qkv = _init_fused_linear(k_qkv, d, d, dp, dp, 3)
    wo, bo = _init_padded_linear(k_o, d, d, dp, dp)
    return {"w_qkv": w_qkv, "b_qkv": b_qkv, "wo": wo, "bo": bo}


def _init_cross_attn(key, d, dp):
    k_q, k_kv, k_o = jax.random.split(key, 3)
    w_q, b_q = _init_padded_linear(k_q, d, d, dp, dp)
    w_kv, b_kv = _init_fused_linear(k_kv, d, d, dp, dp, 2)
    wo, bo = _init_padded_linear(k_o, d, d, dp, dp)
    return {"w_q": w_q, "b_q": b_q, "w_kv": w_kv, "b_kv": b_kv, "wo": wo, "bo": bo}


def _init_enc_block(key, d, dp, d_ff, fp):
    k0, k1, k2 = jax.random.split(key, 3)
    p = {"attn": _init_self_attn(k0, d, dp)}
    p["ff_w1"], p["ff_b1"] = _init_padded_linear(k1, d, d_ff, dp, fp)
    p["ff_w2"], p["ff_b2"] = _init_padded_linear(k2, d_ff, d, fp, dp)
    p["ln1_g"], p["ln1_b"] = _init_ln(d, dp)
    p["ln2_g"], p["ln2_b"] = _init_ln(d, dp)
    return p


def _init_dec_block(key, d, dp, d_ff, fp):
    k0, k1, k2, k3 = jax.random.split(key, 4)
    p = {"self_attn": _init_self_attn(k0, d, dp),
         "cross_attn": _init_cross_attn(k1, d, dp)}
    p["ff_w1"], p["ff_b1"] = _init_padded_linear(k2, d, d_ff, dp, fp)
    p["ff_w2"], p["ff_b2"] = _init_padded_linear(k3, d_ff, d, fp, dp)
    p["ln1_g"], p["ln1_b"] = _init_ln(d, dp)
    p["ln2_g"], p["ln2_b"] = _init_ln(d, dp)
    p["ln3_g"], p["ln3_b"] = _init_ln(d, dp)
    return p


def init_transformer(key, n_tokens, d_model, seq_len, n_enc_blocks, n_dec_blocks, d_ff):
    dp = _round_up(d_model, 128)
    fp = _round_up(d_ff, 128)
    vp = _round_up(n_tokens, 128)
    keys = jax.random.split(key, 3 + n_enc_blocks + n_dec_blocks)
    emb = 0.02 * jax.random.normal(keys[0], (n_tokens, d_model), F32)
    params = {
        "tok_emb": jnp.pad(emb, ((0, 0), (0, dp - d_model))),
        "pe": sinusoidal_pe(seq_len, d_model, dp),
        "encoder": [_init_enc_block(keys[3 + i], d_model, dp, d_ff, fp)
                    for i in range(n_enc_blocks)],
        "decoder": [_init_dec_block(keys[3 + n_enc_blocks + i], d_model, dp, d_ff, fp)
                    for i in range(n_dec_blocks)],
    }
    params["head_w"], params["head_b"] = _init_padded_linear(
        keys[1], d_model, n_tokens, dp, vp)
    return params


# ----------------------------------------------------------------------------
if __name__ == "__main__":
    # Small hyperparameters consistent with the module's constructor.
    n_tokens = 50
    d_model = 32
    seq_len = 8
    n_encoder_blocks = 2
    n_decoder_blocks = 2
    n_encoder_heads = 4
    n_decoder_heads = 4
    d_ff = 64
    batch = 2

    root = jax.random.PRNGKey(0)
    k_params, k_src, k_tgt = jax.random.split(root, 3)

    params = init_transformer(
        k_params, n_tokens, d_model, seq_len, n_encoder_blocks, n_decoder_blocks, d_ff
    )

    inputs = jax.random.randint(k_src, (batch, seq_len), 0, n_tokens, dtype=jnp.int32)
    outputs = jax.random.randint(k_tgt, (batch, seq_len), 0, n_tokens, dtype=jnp.int32)

    fwd = jax.jit(
        functools.partial(
            transformer_forward,
            n_enc_heads=n_encoder_heads,
            n_dec_heads=n_decoder_heads,
            d_model=d_model,
            n_tokens=n_tokens,
        )
    )
    logits = fwd(params, inputs, outputs)
    jax.block_until_ready(logits)
    assert logits.shape == (batch, seq_len, n_tokens)
    assert bool(jnp.all(jnp.isfinite(logits)))
    print("KERNEL_OK")
</pallas_src>

<mosaic_0001>
module attributes {stable_mosaic.version = 11 : i64} {
  func.func @_self_attn_kernel(%arg0: i32, %arg1: memref<1x1x8xi32, #tpu.memory_space<vmem>>, %arg2: memref<1x8x128xbf16, #tpu.memory_space<vmem>>, %arg3: memref<128x384xbf16, #tpu.memory_space<vmem>>, %arg4: memref<1x384xf32, #tpu.memory_space<vmem>>, %arg5: memref<1x8x128xbf16, #tpu.memory_space<vmem>>) attributes {dimension_semantics = [#tpu.dimension_semantics<parallel>], iteration_bounds = array<i64: 2>, scalar_prefetch = 0 : i64, scratch_operands = 0 : i64, tpu.core_type = #tpu.core_type<tc>, window_params = [{transform_indices = @transform_0, window_bounds = array<i64: 1, 1, 8>}, {transform_indices = @transform_1, window_bounds = array<i64: 1, 8, 128>}, {pipeline_mode = #tpu.pipeline_mode<synchronous>, transform_indices = @transform_2, window_bounds = array<i64: 128, 384>}, {pipeline_mode = #tpu.pipeline_mode<synchronous>, transform_indices = @transform_3, window_bounds = array<i64: 1, 384>}, {transform_indices = @transform_4, window_bounds = array<i64: 1, 8, 128>}]} {
    %c0 = arith.constant 0 : index
    %c0_0 = arith.constant 0 : index
    %c0_1 = arith.constant 0 : index
    %0 = vector.load %arg2[%c0, %c0_0, %c0_1] : memref<1x8x128xbf16, #tpu.memory_space<vmem>>, vector<1x8x128xbf16>
    %1 = vector.shape_cast %0 : vector<1x8x128xbf16> to vector<8x128xbf16>
    %c0_2 = arith.constant 0 : index
    %c0_3 = arith.constant 0 : index
    %2 = vector.load %arg3[%c0_2, %c0_3] : memref<128x384xbf16, #tpu.memory_space<vmem>>, vector<128x384xbf16>
    %cst = arith.constant dense<0.000000e+00> : vector<8x384xf32>
    %3 = tpu.matmul %1, %2, %cst {dimension_numbers = #tpu.dot_dimension_numbers<[1], [0], [0], [1], [0, 0, 1, 1], [], []>} : vector<8x128xbf16>, vector<128x384xbf16>, vector<8x384xf32> -> vector<8x384xf32>
    %c0_4 = arith.constant 0 : index
    %c0_5 = arith.constant 0 : index
    %4 = vector.load %arg4[%c0_4, %c0_5] : memref<1x384xf32, #tpu.memory_space<vmem>>, vector<1x384xf32>
    %5 = vector.broadcast %4 : vector<1x384xf32> to vector<8x384xf32>
    %6 = arith.addf %3, %5 : vector<8x384xf32>
    %7 = arith.truncf %6 : vector<8x384xf32> to vector<8x384xbf16>
    %8 = vector.extract_strided_slice %7 {offsets = [0, 0], sizes = [8, 128], strides = [1, 1]} : vector<8x384xbf16> to vector<8x128xbf16>
    %9 = vector.extract_strided_slice %7 {offsets = [0, 128], sizes = [8, 128], strides = [1, 1]} : vector<8x384xbf16> to vector<8x128xbf16>
    %10 = vector.extract_strided_slice %7 {offsets = [0, 256], sizes = [8, 128], strides = [1, 1]} : vector<8x384xbf16> to vector<8x128xbf16>
    %c0_6 = arith.constant 0 : index
    %c0_7 = arith.constant 0 : index
    %c0_8 = arith.constant 0 : index
    %11 = vector.load %arg1[%c0_6, %c0_7, %c0_8] : memref<1x1x8xi32, #tpu.memory_space<vmem>>, vector<1x1x8xi32>
    %12 = vector.shape_cast %11 : vector<1x1x8xi32> to vector<1x8xi32>
    %c-1_i32 = arith.constant -1 : i32
    %13 = vector.broadcast %c-1_i32 : i32 to vector<1x8xi32>
    %14 = arith.cmpi ne, %12, %13 : vector<1x8xi32>
    %cst_9 = arith.constant 0.000000e+00 : bf16
    %15 = vector.broadcast %cst_9 : bf16 to vector<1x8x128xbf16>
    %c0_10 = arith.constant 0 : index
    %c0_11 = arith.constant 0 : index
    %c0_12 = arith.constant 0 : index
    %16 = vector.load %arg5[%c0_10, %c0_11, %c0_12] : memref<1x8x128xbf16, #tpu.memory_space<vmem>>, vector<1x8x128xbf16>
    tpu.vector_store %arg5[%c0_10, %c0_11, %c0_12], %15 {strides = array<i32>} : memref<1x8x128xbf16, #tpu.memory_space<vmem>>, vector<1x8x128xbf16>,
    %17 = vector.extract_strided_slice %8 {offsets = [0, 0], sizes = [8, 8], strides = [1, 1]} : vector<8x128xbf16> to vector<8x8xbf16>
    %18 = vector.extract_strided_slice %9 {offsets = [0, 0], sizes = [8, 8], strides = [1, 1]} : vector<8x128xbf16> to vector<8x8xbf16>
    %cst_13 = arith.constant dense<0.000000e+00> : vector<8x8xf32>
    %19 = tpu.matmul %17, %18, %cst_13 {dimension_numbers = #tpu.dot_dimension_numbers<[1], [1], [0], [0], [0, 0, 1, 0], [], []>} : vector<8x8xbf16>, vector<8x8xbf16>, vector<8x8xf32> -> vector<8x8xf32>
    %cst_14 = arith.constant 0.353553385 : f32
    %20 = vector.broadcast %cst_14 : f32 to vector<8x8xf32>
    %21 = arith.mulf %19, %20 : vector<8x8xf32>
    %cst_15 = arith.constant -1.000000e+09 : f32
    %22 = vector.shape_cast %14 : vector<1x8xi1> to vector<1x8xi1>
    %23 = vector.broadcast %22 : vector<1x8xi1> to vector<8x8xi1>
    %24 = vector.broadcast %cst_15 : f32 to vector<8x8xf32>
    %25 = arith.select %23, %21, %24 : vector<8x8xi1>, vector<8x8xf32>
    %cst_16 = arith.constant dense<0xFF800000> : vector<8xf32>
    %26 = vector.multi_reduction <maximumf>, %25, %cst_16 [1] : vector<8x8xf32> to vector<8xf32>
    %27 = vector.shape_cast %26 : vector<8xf32> to vector<8x1xf32>
    %28 = vector.broadcast %27 : vector<8x1xf32> to vector<8x8xf32>
    %29 = arith.subf %25, %28 : vector<8x8xf32>
    %30 = math.exp %29 : vector<8x8xf32>
    %cst_17 = arith.constant dense<0.000000e+00> : vector<8xf32>
    %31 = vector.multi_reduction <add>, %30, %cst_17 [1] : vector<8x8xf32> to vector<8xf32>
    %32 = vector.shape_cast %31 : vector<8xf32> to vector<8x1xf32>
    %33 = tpu.reciprocal %32 {approx = true} : vector<8x1xf32> -> vector<8x1xf32>
    %34 = vector.broadcast %33 : vector<8x1xf32> to vector<8x8xf32>
    %35 = arith.mulf %30, %34 : vector<8x8xf32>
    %36 = arith.truncf %35 : vector<8x8xf32> to vector<8x8xbf16>
    %37 = vector.extract_strided_slice %10 {offsets = [0, 0], sizes = [8, 8], strides = [1, 1]} : vector<8x128xbf16> to vector<8x8xbf16>
    %cst_18 = arith.constant dense<0.000000e+00> : vector<8x8xf32>
    %38 = tpu.matmul %36, %37, %cst_18 {dimension_numbers = #tpu.dot_dimension_numbers<[1], [0], [0], [1], [0, 0, 1, 1], [], []>} : vector<8x8xbf16>, vector<8x8xbf16>, vector<8x8xf32> -> vector<8x8xf32>
    %39 = arith.truncf %38 : vector<8x8xf32> to vector<8x8xbf16>
    %c0_19 = arith.constant 0 : index
    %c0_20 = arith.constant 0 : index
    %c0_21 = arith.constant 0 : index
    %40 = vector.load %arg5[%c0_19, %c0_20, %c0_21] : memref<1x8x128xbf16, #tpu.memory_space<vmem>>, vector<1x8x8xbf16>
    %41 = vector.shape_cast %40 : vector<1x8x8xbf16> to vector<8x8xbf16>
    %42 = vector.shape_cast %39 : vector<8x8xbf16> to vector<1x8x8xbf16>
    tpu.vector_store %arg5[%c0_19, %c0_20, %c0_21], %42 {strides = array<i32>} : memref<1x8x128xbf16, #tpu.memory_space<vmem>>, vector<1x8x8xbf16>,
    %43 = vector.extract_strided_slice %8 {offsets = [0, 8], sizes = [8, 8], strides = [1, 1]} : vector<8x128xbf16> to vector<8x8xbf16>
    %44 = vector.extract_strided_slice %9 {offsets = [0, 8], sizes = [8, 8], strides = [1, 1]} : vector<8x128xbf16> to vector<8x8xbf16>
    %cst_22 = arith.constant dense<0.000000e+00> : vector<8x8xf32>
    %45 = tpu.matmul %43, %44, %cst_22 {dimension_numbers = #tpu.dot_dimension_numbers<[1], [1], [0], [0], [0, 0, 1, 0], [], []>} : vector<8x8xbf16>, vector<8x8xbf16>, vector<8x8xf32> -> vector<8x8xf32>
    %cst_23 = arith.constant 0.353553385 : f32
    %46 = vector.broadcast %cst_23 : f32 to vector<8x8xf32>
    %47 = arith.mulf %45, %46 : vector<8x8xf32>
    %cst_24 = arith.constant -1.000000e+09 : f32
    %48 = vector.shape_cast %14 : vector<1x8xi1> to vector<1x8xi1>
    %49 = vector.broadcast %48 : vector<1x8xi1> to vector<8x8xi1>
    %50 = vector.broadcast %cst_24 : f32 to vector<8x8xf32>
    %51 = arith.select %49, %47, %50 : vector<8x8xi1>, vector<8x8xf32>
    %cst_25 = arith.constant dense<0xFF800000> : vector<8xf32>
    %52 = vector.multi_reduction <maximumf>, %51, %cst_25 [1] : vector<8x8xf32> to vector<8xf32>
    %53 = vector.shape_cast %52 : vector<8xf32> to vector<8x1xf32>
    %54 = vector.broadcast %53 : vector<8x1xf32> to vector<8x8xf32>
    %55 = arith.subf %51, %54 : vector<8x8xf32>
    %56 = math.exp %55 : vector<8x8xf32>
    %cst_26 = arith.constant dense<0.000000e+00> : vector<8xf32>
    %57 = vector.multi_reduction <add>, %56, %cst_26 [1] : vector<8x8xf32> to vector<8xf32>
    %58 = vector.shape_cast %57 : vector<8xf32> to vector<8x1xf32>
    %59 = tpu.reciprocal %58 {approx = true} : vector<8x1xf32> -> vector<8x1xf32>
    %60 = vector.broadcast %59 : vector<8x1xf32> to vector<8x8xf32>
    %61 = arith.mulf %56, %60 : vector<8x8xf32>
    %62 = arith.truncf %61 : vector<8x8xf32> to vector<8x8xbf16>
    %63 = vector.extract_strided_slice %10 {offsets = [0, 8], sizes = [8, 8], strides = [1, 1]} : vector<8x128xbf16> to vector<8x8xbf16>
    %cst_27 = arith.constant dense<0.000000e+00> : vector<8x8xf32>
    %64 = tpu.matmul %62, %63, %cst_27 {dimension_numbers = #tpu.dot_dimension_numbers<[1], [0], [0], [1], [0, 0, 1, 1], [], []>} : vector<8x8xbf16>, vector<8x8xbf16>, vector<8x8xf32> -> vector<8x8xf32>
    %65 = arith.truncf %64 : vector<8x8xf32> to vector<8x8xbf16>
    %c0_28 = arith.constant 0 : index
    %c0_29 = arith.constant 0 : index
    %c8 = arith.constant 8 : index
    %66 = vector.load %arg5[%c0_28, %c0_29, %c8] : memref<1x8x128xbf16, #tpu.memory_space<vmem>>, vector<1x8x8xbf16>
    %67 = vector.shape_cast %66 : vector<1x8x8xbf16> to vector<8x8xbf16>
    %68 = vector.shape_cast %65 : vector<8x8xbf16> to vector<1x8x8xbf16>
    tpu.vector_store %arg5[%c0_28, %c0_29, %c8], %68 {strides = array<i32>} : memref<1x8x128xbf16, #tpu.memory_space<vmem>>, vector<1x8x8xbf16>,
    %69 = vector.extract_strided_slice %8 {offsets = [0, 16], sizes = [8, 8], strides = [1, 1]} : vector<8x128xbf16> to vector<8x8xbf16>
    %70 = vector.extract_strided_slice %9 {offsets = [0, 16], sizes = [8, 8], strides = [1, 1]} : vector<8x128xbf16> to vector<8x8xbf16>
    %cst_30 = arith.constant dense<0.000000e+00> : vector<8x8xf32>
    %71 = tpu.matmul %69, %70, %cst_30 {dimension_numbers = #tpu.dot_dimension_numbers<[1], [1], [0], [0], [0, 0, 1, 0], [], []>} : vector<8x8xbf16>, vector<8x8xbf16>, vector<8x8xf32> -> vector<8x8xf32>
    %cst_31 = arith.constant 0.353553385 : f32
    %72 = vector.broadcast %cst_31 : f32 to vector<8x8xf32>
    %73 = arith.mulf %71, %72 : vector<8x8xf32>
    %cst_32 = arith.constant -1.000000e+09 : f32
    %74 = vector.shape_cast %14 : vector<1x8xi1> to vector<1x8xi1>
    %75 = vector.broadcast %74 : vector<1x8xi1> to vector<8x8xi1>
    %76 = vector.broadcast %cst_32 : f32 to vector<8x8xf32>
    %77 = arith.select %75, %73, %76 : vector<8x8xi1>, vector<8x8xf32>
    %cst_33 = arith.constant dense<0xFF800000> : vector<8xf32>
    %78 = vector.multi_reduction <maximumf>, %77, %cst_33 [1] : vector<8x8xf32> to vector<8xf32>
    %79 = vector.shape_cast %78 : vector<8xf32> to vector<8x1xf32>
    %80 = vector.broadcast %79 : vector<8x1xf32> to vector<8x8xf32>
    %81 = arith.subf %77, %80 : vector<8x8xf32>
    %82 = math.exp %81 : vector<8x8xf32>
    %cst_34 = arith.constant dense<0.000000e+00> : vector<8xf32>
    %83 = vector.multi_reduction <add>, %82, %cst_34 [1] : vector<8x8xf32> to vector<8xf32>
    %84 = vector.shape_cast %83 : vector<8xf32> to vector<8x1xf32>
    %85 = tpu.reciprocal %84 {approx = true} : vector<8x1xf32> -> vector<8x1xf32>
    %86 = vector.broadcast %85 : vector<8x1xf32> to vector<8x8xf32>
    %87 = arith.mulf %82, %86 : vector<8x8xf32>
    %88 = arith.truncf %87 : vector<8x8xf32> to vector<8x8xbf16>
    %89 = vector.extract_strided_slice %10 {offsets = [0, 16], sizes = [8, 8], strides = [1, 1]} : vector<8x128xbf16> to vector<8x8xbf16>
    %cst_35 = arith.constant dense<0.000000e+00> : vector<8x8xf32>
    %90 = tpu.matmul %88, %89, %cst_35 {dimension_numbers = #tpu.dot_dimension_numbers<[1], [0], [0], [1], [0, 0, 1, 1], [], []>} : vector<8x8xbf16>, vector<8x8xbf16>, vector<8x8xf32> -> vector<8x8xf32>
    %91 = arith.truncf %90 : vector<8x8xf32> to vector<8x8xbf16>
    %c0_36 = arith.constant 0 : index
    %c0_37 = arith.constant 0 : index
    %c16 = arith.constant 16 : index
    %92 = vector.load %arg5[%c0_36, %c0_37, %c16] : memref<1x8x128xbf16, #tpu.memory_space<vmem>>, vector<1x8x8xbf16>
    %93 = vector.shape_cast %92 : vector<1x8x8xbf16> to vector<8x8xbf16>
    %94 = vector.shape_cast %91 : vector<8x8xbf16> to vector<1x8x8xbf16>
    tpu.vector_store %arg5[%c0_36, %c0_37, %c16], %94 {strides = array<i32>} : memref<1x8x128xbf16, #tpu.memory_space<vmem>>, vector<1x8x8xbf16>,
    %95 = vector.extract_strided_slice %8 {offsets = [0, 24], sizes = [8, 8], strides = [1, 1]} : vector<8x128xbf16> to vector<8x8xbf16>
    %96 = vector.extract_strided_slice %9 {offsets = [0, 24], sizes = [8, 8], strides = [1, 1]} : vector<8x128xbf16> to vector<8x8xbf16>
    %cst_38 = arith.constant dense<0.000000e+00> : vector<8x8xf32>
    %97 = tpu.matmul %95, %96, %cst_38 {dimension_numbers = #tpu.dot_dimension_numbers<[1], [1], [0], [0], [0, 0, 1, 0], [], []>} : vector<8x8xbf16>, vector<8x8xbf16>, vector<8x8xf32> -> vector<8x8xf32>
    %cst_39 = arith.constant 0.353553385 : f32
    %98 = vector.broadcast %cst_39 : f32 to vector<8x8xf32>
    %99 = arith.mulf %97, %98 : vector<8x8xf32>
    %cst_40 = arith.constant -1.000000e+09 : f32
    %100 = vector.shape_cast %14 : vector<1x8xi1> to vector<1x8xi1>
    %101 = vector.broadcast %100 : vector<1x8xi1> to vector<8x8xi1>
    %102 = vector.broadcast %cst_40 : f32 to vector<8x8xf32>
    %103 = arith.select %101, %99, %102 : vector<8x8xi1>, vector<8x8xf32>
    %cst_41 = arith.constant dense<0xFF800000> : vector<8xf32>
    %104 = vector.multi_reduction <maximumf>, %103, %cst_41 [1] : vector<8x8xf32> to vector<8xf32>
    %105 = vector.shape_cast %104 : vector<8xf32> to vector<8x1xf32>
    %106 = vector.broadcast %105 : vector<8x1xf32> to vector<8x8xf32>
    %107 = arith.subf %103, %106 : vector<8x8xf32>
    %108 = math.exp %107 : vector<8x8xf32>
    %cst_42 = arith.constant dense<0.000000e+00> : vector<8xf32>
    %109 = vector.multi_reduction <add>, %108, %cst_42 [1] : vector<8x8xf32> to vector<8xf32>
    %110 = vector.shape_cast %109 : vector<8xf32> to vector<8x1xf32>
    %111 = tpu.reciprocal %110 {approx = true} : vector<8x1xf32> -> vector<8x1xf32>
    %112 = vector.broadcast %111 : vector<8x1xf32> to vector<8x8xf32>
    %113 = arith.mulf %108, %112 : vector<8x8xf32>
    %114 = arith.truncf %113 : vector<8x8xf32> to vector<8x8xbf16>
    %115 = vector.extract_strided_slice %10 {offsets = [0, 24], sizes = [8, 8], strides = [1, 1]} : vector<8x128xbf16> to vector<8x8xbf16>
    %cst_43 = arith.constant dense<0.000000e+00> : vector<8x8xf32>
    %116 = tpu.matmul %114, %115, %cst_43 {dimension_numbers = #tpu.dot_dimension_numbers<[1], [0], [0], [1], [0, 0, 1, 1], [], []>} : vector<8x8xbf16>, vector<8x8xbf16>, vector<8x8xf32> -> vector<8x8xf32>
    %117 = arith.truncf %116 : vector<8x8xf32> to vector<8x8xbf16>
    %c0_44 = arith.constant 0 : index
    %c0_45 = arith.constant 0 : index
    %c24 = arith.constant 24 : index
    %118 = vector.load %arg5[%c0_44, %c0_45, %c24] : memref<1x8x128xbf16, #tpu.memory_space<vmem>>, vector<1x8x8xbf16>
    %119 = vector.shape_cast %118 : vector<1x8x8xbf16> to vector<8x8xbf16>
    %120 = vector.shape_cast %117 : vector<8x8xbf16> to vector<1x8x8xbf16>
    tpu.vector_store %arg5[%c0_44, %c0_45, %c24], %120 {strides = array<i32>} : memref<1x8x128xbf16, #tpu.memory_space<vmem>>, vector<1x8x8xbf16>,
    return
  }
  func.func @transform_0(%arg0: i32) -> (i32, i32, i32) {
    %c0_i32 = arith.constant 0 : i32
    %c0_i32_0 = arith.constant 0 : i32
    %c0_i32_1 = arith.constant 0 : i32
    return %arg0, %c0_i32, %c0_i32_0 : i32, i32, i32
  }
  func.func @transform_1(%arg0: i32) -> (i32, i32, i32) {
    %c0_i32 = arith.constant 0 : i32
    %c0_i32_0 = arith.constant 0 : i32
    %c0_i32_1 = arith.constant 0 : i32
    return %arg0, %c0_i32, %c0_i32_0 : i32, i32, i32
  }
  func.func @transform_2(%arg0: i32) -> (i32, i32) {
    %c0_i32 = arith.constant 0 : i32
    %c0_i32_0 = arith.constant 0 : i32
    %c0_i32_1 = arith.constant 0 : i32
    return %c0_i32, %c0_i32_0 : i32, i32
  }
  func.func @transform_3(%arg0: i32) -> (i32, i32) {
    %c0_i32 = arith.constant 0 : i32
    %c0_i32_0 = arith.constant 0 : i32
    %c0_i32_1 = arith.constant 0 : i32
    return %c0_i32, %c0_i32_0 : i32, i32
  }
  func.func @transform_4(%arg0: i32) -> (i32, i32, i32) {
    %c0_i32 = arith.constant 0 : i32
    %c0_i32_0 = arith.constant 0 : i32
    %c0_i32_1 = arith.constant 0 : i32
    return %arg0, %c0_i32, %c0_i32_0 : i32, i32, i32
  }
}

module attributes {stable_mosaic.version = 11 : i64} {
  func.func @_proj_res_ln_kernel(%arg0: i32, %arg1: memref<16x128xbf16, #tpu.memory_space<vmem>>, %arg2: memref<128x128xbf16, #tpu.memory_space<vmem>>, %arg3: memref<1x128xf32, #tpu.memory_space<vmem>>, %arg4: memref<16x128xbf16, #tpu.memory_space<vmem>>, %arg5: memref<1x128xf32, #tpu.memory_space<vmem>>, %arg6: memref<1x128xf32, #tpu.memory_space<vmem>>, %arg7: memref<16x128xbf16, #tpu.memory_space<vmem>>) attributes {dimension_semantics = [#tpu.dimension_semantics<parallel>], iteration_bounds = array<i64: 1>, scalar_prefetch = 0 : i64, scratch_operands = 0 : i64, tpu.core_type = #tpu.core_type<tc>, window_params = [{transform_indices = @transform_0, window_bounds = array<i64: 16, 128>}, {pipeline_mode = #tpu.pipeline_mode<synchronous>, transform_indices = @transform_1, window_bounds = array<i64: 128, 128>}, {pipeline_mode = #tpu.pipeline_mode<synchronous>, transform_indices = @transform_2, window_bounds = array<i64: 1, 128>}, {transform_indices = @transform_3, window_bounds = array<i64: 16, 128>}, {pipeline_mode = #tpu.pipeline_mode<synchronous>, transform_indices = @transform_4, window_bounds = array<i64: 1, 128>}, {pipeline_mode = #tpu.pipeline_mode<synchronous>, transform_indices = @transform_5, window_bounds = array<i64: 1, 128>}, {transform_indices = @transform_6, window_bounds = array<i64: 16, 128>}]} {
    %c0 = arith.constant 0 : index
    %c0_0 = arith.constant 0 : index
    %0 = vector.load %arg1[%c0, %c0_0] : memref<16x128xbf16, #tpu.memory_space<vmem>>, vector<16x128xbf16>
    %c0_1 = arith.constant 0 : index
    %c0_2 = arith.constant 0 : index
    %1 = vector.load %arg2[%c0_1, %c0_2] : memref<128x128xbf16, #tpu.memory_space<vmem>>, vector<128x128xbf16>
    %cst = arith.constant dense<0.000000e+00> : vector<16x128xf32>
    %2 = tpu.matmul %0, %1, %cst {dimension_numbers = #tpu.dot_dimension_numbers<[1], [0], [0], [1], [0, 0, 1, 1], [], []>} : vector<16x128xbf16>, vector<128x128xbf16>, vector<16x128xf32> -> vector<16x128xf32>
    %c0_3 = arith.constant 0 : index
    %c0_4 = arith.constant 0 : index
    %3 = vector.load %arg3[%c0_3, %c0_4] : memref<1x128xf32, #tpu.memory_space<vmem>>, vector<1x128xf32>
    %4 = vector.broadcast %3 : vector<1x128xf32> to vector<16x128xf32>
    %5 = arith.addf %2, %4 : vector<16x128xf32>
    %c0_5 = arith.constant 0 : index
    %c0_6 = arith.constant 0 : index
    %6 = vector.load %arg4[%c0_5, %c0_6] : memref<16x128xbf16, #tpu.memory_space<vmem>>, vector<16x128xbf16>
    %7 = arith.extf %6 : vector<16x128xbf16> to vector<16x128xf32>
    %8 = arith.addf %7, %5 : vector<16x128xf32>
    %c0_7 = arith.constant 0 : index
    %c0_8 = arith.constant 0 : index
    %9 = vector.load %arg5[%c0_7, %c0_8] : memref<1x128xf32, #tpu.memory_space<vmem>>, vector<1x128xf32>
    %c0_9 = arith.constant 0 : index
    %c0_10 = arith.constant 0 : index
    %10 = vector.load %arg6[%c0_9, %c0_10] : memref<1x128xf32, #tpu.memory_space<vmem>>, vector<1x128xf32>
    %cst_11 = arith.constant dense<0.000000e+00> : vector<16xf32>
    %11 = vector.multi_reduction <add>, %8, %cst_11 [1] : vector<16x128xf32> to vector<16xf32>
    %12 = vector.shape_cast %11 : vector<16xf32> to vector<16x1xf32>
    %cst_12 = arith.constant 3.125000e-02 : f32
    %13 = vector.broadcast %cst_12 : f32 to vector<16x1xf32>
    %14 = arith.mulf %12, %13 : vector<16x1xf32>
    %15 = tpu.iota {dimensions = array<i32: 1>} : vector<16x128xi32>
    %c32_i32 = arith.constant 32 : i32
    %16 = vector.broadcast %c32_i32 : i32 to vector<16x128xi32>
    %17 = arith.cmpi slt, %15, %16 : vector<16x128xi32>
    %18 = vector.broadcast %14 : vector<16x1xf32> to vector<16x128xf32>
    %19 = arith.subf %8, %18 : vector<16x128xf32>
    %cst_13 = arith.constant 0.000000e+00 : f32
    %20 = vector.broadcast %cst_13 : f32 to vector<16x128xf32>
    %21 = arith.select %17, %19, %20 : vector<16x128xi1>, vector<16x128xf32>
    %22 = arith.mulf %21, %21 : vector<16x128xf32>
    %cst_14 = arith.constant dense<0.000000e+00> : vector<16xf32>
    %23 = vector.multi_reduction <add>, %22, %cst_14 [1] : vector<16x128xf32> to vector<16xf32>
    %24 = vector.shape_cast %23 : vector<16xf32> to vector<16x1xf32>
    %cst_15 = arith.constant 3.125000e-02 : f32
    %25 = vector.broadcast %cst_15 : f32 to vector<16x1xf32>
    %26 = arith.mulf %24, %25 : vector<16x1xf32>
    %cst_16 = arith.constant 9.99999974E-6 : f32
    %27 = vector.broadcast %cst_16 : f32 to vector<16x1xf32>
    %28 = arith.addf %26, %27 : vector<16x1xf32>
    %29 = math.rsqrt %28 : vector<16x1xf32>
    %30 = vector.broadcast %29 : vector<16x1xf32> to vector<16x128xf32>
    %31 = arith.mulf %21, %30 : vector<16x128xf32>
    %32 = vector.broadcast %9 : vector<1x128xf32> to vector<16x128xf32>
    %33 = arith.mulf %31, %32 : vector<16x128xf32>
    %34 = vector.broadcast %10 : vector<1x128xf32> to vector<16x128xf32>
    %35 = arith.addf %33, %34 : vector<16x128xf32>
    %36 = arith.truncf %35 : vector<16x128xf32> to vector<16x128xbf16>
    %c0_17 = arith.constant 0 : index
    %c0_18 = arith.constant 0 : index
    %37 = vector.load %arg7[%c0_17, %c0_18] : memref<16x128xbf16, #tpu.memory_space<vmem>>, vector<16x128xbf16>
    tpu.vector_store %arg7[%c0_17, %c0_18], %36 {strides = array<i32>} : memref<16x128xbf16, #tpu.memory_space<vmem>>, vector<16x128xbf16>,
    return
  }
  func.func @transform_0(%arg0: i32) -> (i32, i32) {
    %c0_i32 = arith.constant 0 : i32
    %c0_i32_0 = arith.constant 0 : i32
    return %arg0, %c0_i32 : i32, i32
  }
  func.func @transform_1(%arg0: i32) -> (i32, i32) {
    %c0_i32 = arith.constant 0 : i32
    %c0_i32_0 = arith.constant 0 : i32
    %c0_i32_1 = arith.constant 0 : i32
    return %c0_i32, %c0_i32_0 : i32, i32
  }
  func.func @transform_2(%arg0: i32) -> (i32, i32) {
    %c0_i32 = arith.constant 0 : i32
    %c0_i32_0 = arith.constant 0 : i32
    %c0_i32_1 = arith.constant 0 : i32
    return %c0_i32, %c0_i32_0 : i32, i32
  }
  func.func @transform_3(%arg0: i32) -> (i32, i32) {
    %c0_i32 = arith.constant 0 : i32
    %c0_i32_0 = arith.constant 0 : i32
    return %arg0, %c0_i32 : i32, i32
  }
  func.func @transform_4(%arg0: i32) -> (i32, i32) {
    %c0_i32 = arith.constant 0 : i32
    %c0_i32_0 = arith.constant 0 : i32
    %c0_i32_1 = arith.constant 0 : i32
    return %c0_i32, %c0_i32_0 : i32, i32
  }
  func.func @transform_5(%arg0: i32) -> (i32, i32) {
    %c0_i32 = arith.constant 0 : i32
    %c0_i32_0 = arith.constant 0 : i32
    %c0_i32_1 = arith.constant 0 : i32
    return %c0_i32, %c0_i32_0 : i32, i32
  }
  func.func @transform_6(%arg0: i32) -> (i32, i32) {
    %c0_i32 = arith.constant 0 : i32
    %c0_i32_0 = arith.constant 0 : i32
    return %arg0, %c0_i32 : i32, i32
  }
}

module attributes {stable_mosaic.version = 11 : i64} {
  func.func @_ffn_res_ln_kernel(%arg0: i32, %arg1: memref<16x128xbf16, #tpu.memory_space<vmem>>, %arg2: memref<128x128xbf16, #tpu.memory_space<vmem>>, %arg3: memref<1x128xf32, #tpu.memory_space<vmem>>, %arg4: memref<128x128xbf16, #tpu.memory_space<vmem>>, %arg5: memref<1x128xf32, #tpu.memory_space<vmem>>, %arg6: memref<1x128xf32, #tpu.memory_space<vmem>>, %arg7: memref<1x128xf32, #tpu.memory_space<vmem>>, %arg8: memref<16x128xbf16, #tpu.memory_space<vmem>>) attributes {dimension_semantics = [#tpu.dimension_semantics<parallel>], iteration_bounds = array<i64: 1>, scalar_prefetch = 0 : i64, scratch_operands = 0 : i64, tpu.core_type = #tpu.core_type<tc>, window_params = [{transform_indices = @transform_0, window_bounds = array<i64: 16, 128>}, {pipeline_mode = #tpu.pipeline_mode<synchronous>, transform_indices = @transform_1, window_bounds = array<i64: 128, 128>}, {pipeline_mode = #tpu.pipeline_mode<synchronous>, transform_indices = @transform_2, window_bounds = array<i64: 1, 128>}, {pipeline_mode = #tpu.pipeline_mode<synchronous>, transform_indices = @transform_3, window_bounds = array<i64: 128, 128>}, {pipeline_mode = #tpu.pipeline_mode<synchronous>, transform_indices = @transform_4, window_bounds = array<i64: 1, 128>}, {pipeline_mode = #tpu.pipeline_mode<synchronous>, transform_indices = @transform_5, window_bounds = array<i64: 1, 128>}, {pipeline_mode = #tpu.pipeline_mode<synchronous>, transform_indices = @transform_6, window_bounds = array<i64: 1, 128>}, {transform_indices = @transform_7, window_bounds = array<i64: 16, 128>}]} {
    %c0 = arith.constant 0 : index
    %c0_0 = arith.constant 0 : index
    %0 = vector.load %arg1[%c0, %c0_0] : memref<16x128xbf16, #tpu.memory_space<vmem>>, vector<16x128xbf16>
    %c0_1 = arith.constant 0 : index
    %c0_2 = arith.constant 0 : index
    %1 = vector.load %arg2[%c0_1, %c0_2] : memref<128x128xbf16, #tpu.memory_space<vmem>>, vector<128x128xbf16>
    %cst = arith.constant dense<0.000000e+00> : vector<16x128xf32>
    %2 = tpu.matmul %0, %1, %cst {dimension_numbers = #tpu.dot_dimension_numbers<[1], [0], [0], [1], [0, 0, 1, 1], [], []>} : vector<16x128xbf16>, vector<128x128xbf16>, vector<16x128xf32> -> vector<16x128xf32>
    %c0_3 = arith.constant 0 : index
    %c0_4 = arith.constant 0 : index
    %3 = vector.load %arg3[%c0_3, %c0_4] : memref<1x128xf32, #tpu.memory_space<vmem>>, vector<1x128xf32>
    %4 = vector.broadcast %3 : vector<1x128xf32> to vector<16x128xf32>
    %5 = arith.addf %2, %4 : vector<16x128xf32>
    %cst_5 = arith.constant 0.000000e+00 : f32
    %6 = vector.broadcast %cst_5 : f32 to vector<16x128xf32>
    %7 = arith.maximumf %5, %6 : vector<16x128xf32>
    %8 = arith.truncf %7 : vector<16x128xf32> to vector<16x128xbf16>
    %c0_6 = arith.constant 0 : index
    %c0_7 = arith.constant 0 : index
    %9 = vector.load %arg4[%c0_6, %c0_7] : memref<128x128xbf16, #tpu.memory_space<vmem>>, vector<128x128xbf16>
    %cst_8 = arith.constant dense<0.000000e+00> : vector<16x128xf32>
    %10 = tpu.matmul %8, %9, %cst_8 {dimension_numbers = #tpu.dot_dimension_numbers<[1], [0], [0], [1], [0, 0, 1, 1], [], []>} : vector<16x128xbf16>, vector<128x128xbf16>, vector<16x128xf32> -> vector<16x128xf32>
    %c0_9 = arith.constant 0 : index
    %c0_10 = arith.constant 0 : index
    %11 = vector.load %arg5[%c0_9, %c0_10] : memref<1x128xf32, #tpu.memory_space<vmem>>, vector<1x128xf32>
    %12 = vector.broadcast %11 : vector<1x128xf32> to vector<16x128xf32>
    %13 = arith.addf %10, %12 : vector<16x128xf32>
    %14 = arith.extf %0 : vector<16x128xbf16> to vector<16x128xf32>
    %15 = arith.addf %14, %13 : vector<16x128xf32>
    %c0_11 = arith.constant 0 : index
    %c0_12 = arith.constant 0 : index
    %16 = vector.load %arg6[%c0_11, %c0_12] : memref<1x128xf32, #tpu.memory_space<vmem>>, vector<1x128xf32>
    %c0_13 = arith.constant 0 : index
    %c0_14 = arith.constant 0 : index
    %17 = vector.load %arg7[%c0_13, %c0_14] : memref<1x128xf32, #tpu.memory_space<vmem>>, vector<1x128xf32>
    %cst_15 = arith.constant dense<0.000000e+00> : vector<16xf32>
    %18 = vector.multi_reduction <add>, %15, %cst_15 [1] : vector<16x128xf32> to vector<16xf32>
    %19 = vector.shape_cast %18 : vector<16xf32> to vector<16x1xf32>
    %cst_16 = arith.constant 3.125000e-02 : f32
    %20 = vector.broadcast %cst_16 : f32 to vector<16x1xf32>
    %21 = arith.mulf %19, %20 : vector<16x1xf32>
    %22 = tpu.iota {dimensions = array<i32: 1>} : vector<16x128xi32>
    %c32_i32 = arith.constant 32 : i32
    %23 = vector.broadcast %c32_i32 : i32 to vector<16x128xi32>
    %24 = arith.cmpi slt, %22, %23 : vector<16x128xi32>
    %25 = vector.broadcast %21 : vector<16x1xf32> to vector<16x128xf32>
    %26 = arith.subf %15, %25 : vector<16x128xf32>
    %cst_17 = arith.constant 0.000000e+00 : f32
    %27 = vector.broadcast %cst_17 : f32 to vector<16x128xf32>
    %28 = arith.select %24, %26, %27 : vector<16x128xi1>, vector<16x128xf32>
    %29 = arith.mulf %28, %28 : vector<16x128xf32>
    %cst_18 = arith.constant dense<0.000000e+00> : vector<16xf32>
    %30 = vector.multi_reduction <add>, %29, %cst_18 [1] : vector<16x128xf32> to vector<16xf32>
    %31 = vector.shape_cast %30 : vector<16xf32> to vector<16x1xf32>
    %cst_19 = arith.constant 3.125000e-02 : f32
    %32 = vector.broadcast %cst_19 : f32 to vector<16x1xf32>
    %33 = arith.mulf %31, %32 : vector<16x1xf32>
    %cst_20 = arith.constant 9.99999974E-6 : f32
    %34 = vector.broadcast %cst_20 : f32 to vector<16x1xf32>
    %35 = arith.addf %33, %34 : vector<16x1xf32>
    %36 = math.rsqrt %35 : vector<16x1xf32>
    %37 = vector.broadcast %36 : vector<16x1xf32> to vector<16x128xf32>
    %38 = arith.mulf %28, %37 : vector<16x128xf32>
    %39 = vector.broadcast %16 : vector<1x128xf32> to vector<16x128xf32>
    %40 = arith.mulf %38, %39 : vector<16x128xf32>
    %41 = vector.broadcast %17 : vector<1x128xf32> to vector<16x128xf32>
    %42 = arith.addf %40, %41 : vector<16x128xf32>
    %43 = arith.truncf %42 : vector<16x128xf32> to vector<16x128xbf16>
    %c0_21 = arith.constant 0 : index
    %c0_22 = arith.constant 0 : index
    %44 = vector.load %arg8[%c0_21, %c0_22] : memref<16x128xbf16, #tpu.memory_space<vmem>>, vector<16x128xbf16>
    tpu.vector_store %arg8[%c0_21, %c0_22], %43 {strides = array<i32>} : memref<16x128xbf16, #tpu.memory_space<vmem>>, vector<16x128xbf16>,
    return
  }
  func.func @transform_0(%arg0: i32) -> (i32, i32) {
    %c0_i32 = arith.constant 0 : i32
    %c0_i32_0 = arith.constant 0 : i32
    return %arg0, %c0_i32 : i32, i32
  }
  func.func @transform_1(%arg0: i32) -> (i32, i32) {
    %c0_i32 = arith.constant 0 : i32
    %c0_i32_0 = arith.constant 0 : i32
    %c0_i32_1 = arith.constant 0 : i32
    return %c0_i32, %c0_i32_0 : i32, i32
  }
  func.func @transform_2(%arg0: i32) -> (i32, i32) {
    %c0_i32 = arith.constant 0 : i32
    %c0_i32_0 = arith.constant 0 : i32
    %c0_i32_1 = arith.constant 0 : i32
    return %c0_i32, %c0_i32_0 : i32, i32
  }
  func.func @transform_3(%arg0: i32) -> (i32, i32) {
    %c0_i32 = arith.constant 0 : i32
    %c0_i32_0 = arith.constant 0 : i32
    %c0_i32_1 = arith.constant 0 : i32
    return %c0_i32, %c0_i32_0 : i32, i32
  }
  func.func @transform_4(%arg0: i32) -> (i32, i32) {
    %c0_i32 = arith.constant 0 : i32
    %c0_i32_0 = arith.constant 0 : i32
    %c0_i32_1 = arith.constant 0 : i32
    return %c0_i32, %c0_i32_0 : i32, i32
  }
  func.func @transform_5(%arg0: i32) -> (i32, i32) {
    %c0_i32 = arith.constant 0 : i32
    %c0_i32_0 = arith.constant 0 : i32
    %c0_i32_1 = arith.constant 0 : i32
    return %c0_i32, %c0_i32_0 : i32, i32
  }
  func.func @transform_6(%arg0: i32) -> (i32, i32) {
    %c0_i32 = arith.constant 0 : i32
    %c0_i32_0 = arith.constant 0 : i32
    %c0_i32_1 = arith.constant 0 : i32
    return %c0_i32, %c0_i32_0 : i32, i32
  }
  func.func @transform_7(%arg0: i32) -> (i32, i32) {
    %c0_i32 = arith.constant 0 : i32
    %c0_i32_0 = arith.constant 0 : i32
    return %arg0, %c0_i32 : i32, i32
  }
}

module attributes {stable_mosaic.version = 11 : i64} {
  func.func @_self_attn_kernel(%arg0: i32, %arg1: memref<1x8x1xi32, #tpu.memory_space<vmem>>, %arg2: memref<1x8x128xbf16, #tpu.memory_space<vmem>>, %arg3: memref<128x384xbf16, #tpu.memory_space<vmem>>, %arg4: memref<1x384xf32, #tpu.memory_space<vmem>>, %arg5: memref<1x8x128xbf16, #tpu.memory_space<vmem>>) attributes {dimension_semantics = [#tpu.dimension_semantics<parallel>], iteration_bounds = array<i64: 2>, scalar_prefetch = 0 : i64, scratch_operands = 0 : i64, tpu.core_type = #tpu.core_type<tc>, window_params = [{transform_indices = @transform_0, window_bounds = array<i64: 1, 8, 1>}, {transform_indices = @transform_1, window_bounds = array<i64: 1, 8, 128>}, {pipeline_mode = #tpu.pipeline_mode<synchronous>, transform_indices = @transform_2, window_bounds = array<i64: 128, 384>}, {pipeline_mode = #tpu.pipeline_mode<synchronous>, transform_indices = @transform_3, window_bounds = array<i64: 1, 384>}, {transform_indices = @transform_4, window_bounds = array<i64: 1, 8, 128>}]} {
    %c0 = arith.constant 0 : index
    %c0_0 = arith.constant 0 : index
    %c0_1 = arith.constant 0 : index
    %0 = vector.load %arg2[%c0, %c0_0, %c0_1] : memref<1x8x128xbf16, #tpu.memory_space<vmem>>, vector<1x8x128xbf16>
    %1 = vector.shape_cast %0 : vector<1x8x128xbf16> to vector<8x128xbf16>
    %c0_2 = arith.constant 0 : index
    %c0_3 = arith.constant 0 : index
    %2 = vector.load %arg3[%c0_2, %c0_3] : memref<128x384xbf16, #tpu.memory_space<vmem>>, vector<128x384xbf16>
    %cst = arith.constant dense<0.000000e+00> : vector<8x384xf32>
    %3 = tpu.matmul %1, %2, %cst {dimension_numbers = #tpu.dot_dimension_numbers<[1], [0], [0], [1], [0, 0, 1, 1], [], []>} : vector<8x128xbf16>, vector<128x384xbf16>, vector<8x384xf32> -> vector<8x384xf32>
    %c0_4 = arith.constant 0 : index
    %c0_5 = arith.constant 0 : index
    %4 = vector.load %arg4[%c0_4, %c0_5] : memref<1x384xf32, #tpu.memory_space<vmem>>, vector<1x384xf32>
    %5 = vector.broadcast %4 : vector<1x384xf32> to vector<8x384xf32>
    %6 = arith.addf %3, %5 : vector<8x384xf32>
    %7 = arith.truncf %6 : vector<8x384xf32> to vector<8x384xbf16>
    %8 = vector.extract_strided_slice %7 {offsets = [0, 0], sizes = [8, 128], strides = [1, 1]} : vector<8x384xbf16> to vector<8x128xbf16>
    %9 = vector.extract_strided_slice %7 {offsets = [0, 128], sizes = [8, 128], strides = [1, 1]} : vector<8x384xbf16> to vector<8x128xbf16>
    %10 = vector.extract_strided_slice %7 {offsets = [0, 256], sizes = [8, 128], strides = [1, 1]} : vector<8x384xbf16> to vector<8x128xbf16>
    %11 = tpu.iota {dimensions = array<i32: 0>} : vector<8x8xi32>
    %12 = tpu.iota {dimensions = array<i32: 1>} : vector<8x8xi32>
    %13 = arith.cmpi sle, %12, %11 : vector<8x8xi32>
    %c0_6 = arith.constant 0 : index
    %c0_7 = arith.constant 0 : index
    %c0_8 = arith.constant 0 : index
    %14 = vector.load %arg1[%c0_6, %c0_7, %c0_8] : memref<1x8x1xi32, #tpu.memory_space<vmem>>, vector<1x8x1xi32>
    %15 = vector.shape_cast %14 : vector<1x8x1xi32> to vector<8x1xi32>
    %c-1_i32 = arith.constant -1 : i32
    %16 = vector.broadcast %c-1_i32 : i32 to vector<8x1xi32>
    %17 = arith.cmpi ne, %15, %16 : vector<8x1xi32>
    %18 = vector.broadcast %17 : vector<8x1xi1> to vector<8x8xi1>
    %19 = arith.andi %13, %18 : vector<8x8xi1>
    %cst_9 = arith.constant 0.000000e+00 : bf16
    %20 = vector.broadcast %cst_9 : bf16 to vector<1x8x128xbf16>
    %c0_10 = arith.constant 0 : index
    %c0_11 = arith.constant 0 : index
    %c0_12 = arith.constant 0 : index
    %21 = vector.load %arg5[%c0_10, %c0_11, %c0_12] : memref<1x8x128xbf16, #tpu.memory_space<vmem>>, vector<1x8x128xbf16>
    tpu.vector_store %arg5[%c0_10, %c0_11, %c0_12], %20 {strides = array<i32>} : memref<1x8x128xbf16, #tpu.memory_space<vmem>>, vector<1x8x128xbf16>,
    %22 = vector.extract_strided_slice %8 {offsets = [0, 0], sizes = [8, 8], strides = [1, 1]} : vector<8x128xbf16> to vector<8x8xbf16>
    %23 = vector.extract_strided_slice %9 {offsets = [0, 0], sizes = [8, 8], strides = [1, 1]} : vector<8x128xbf16> to vector<8x8xbf16>
    %cst_13 = arith.constant dense<0.000000e+00> : vector<8x8xf32>
    %24 = tpu.matmul %22, %23, %cst_13 {dimension_numbers = #tpu.dot_dimension_numbers<[1], [1], [0], [0], [0, 0, 1, 0], [], []>} : vector<8x8xbf16>, vector<8x8xbf16>, vector<8x8xf32> -> vector<8x8xf32>
    %cst_14 = arith.constant 0.353553385 : f32
    %25 = vector.broadcast %cst_14 : f32 to vector<8x8xf32>
    %26 = arith.mulf %24, %25 : vector<8x8xf32>
    %cst_15 = arith.constant -1.000000e+09 : f32
    %27 = vector.broadcast %cst_15 : f32 to vector<8x8xf32>
    %28 = arith.select %19, %26, %27 : vector<8x8xi1>, vector<8x8xf32>
    %cst_16 = arith.constant dense<0xFF800000> : vector<8xf32>
    %29 = vector.multi_reduction <maximumf>, %28, %cst_16 [1] : vector<8x8xf32> to vector<8xf32>
    %30 = vector.shape_cast %29 : vector<8xf32> to vector<8x1xf32>
    %31 = vector.broadcast %30 : vector<8x1xf32> to vector<8x8xf32>
    %32 = arith.subf %28, %31 : vector<8x8xf32>
    %33 = math.exp %32 : vector<8x8xf32>
    %cst_17 = arith.constant dense<0.000000e+00> : vector<8xf32>
    %34 = vector.multi_reduction <add>, %33, %cst_17 [1] : vector<8x8xf32> to vector<8xf32>
    %35 = vector.shape_cast %34 : vector<8xf32> to vector<8x1xf32>
    %36 = tpu.reciprocal %35 {approx = true} : vector<8x1xf32> -> vector<8x1xf32>
    %37 = vector.broadcast %36 : vector<8x1xf32> to vector<8x8xf32>
    %38 = arith.mulf %33, %37 : vector<8x8xf32>
    %39 = arith.truncf %38 : vector<8x8xf32> to vector<8x8xbf16>
    %40 = vector.extract_strided_slice %10 {offsets = [0, 0], sizes = [8, 8], strides = [1, 1]} : vector<8x128xbf16> to vector<8x8xbf16>
    %cst_18 = arith.constant dense<0.000000e+00> : vector<8x8xf32>
    %41 = tpu.matmul %39, %40, %cst_18 {dimension_numbers = #tpu.dot_dimension_numbers<[1], [0], [0], [1], [0, 0, 1, 1], [], []>} : vector<8x8xbf16>, vector<8x8xbf16>, vector<8x8xf32> -> vector<8x8xf32>
    %42 = arith.truncf %41 : vector<8x8xf32> to vector<8x8xbf16>
    %c0_19 = arith.constant 0 : index
    %c0_20 = arith.constant 0 : index
    %c0_21 = arith.constant 0 : index
    %43 = vector.load %arg5[%c0_19, %c0_20, %c0_21] : memref<1x8x128xbf16, #tpu.memory_space<vmem>>, vector<1x8x8xbf16>
    %44 = vector.shape_cast %43 : vector<1x8x8xbf16> to vector<8x8xbf16>
    %45 = vector.shape_cast %42 : vector<8x8xbf16> to vector<1x8x8xbf16>
    tpu.vector_store %arg5[%c0_19, %c0_20, %c0_21], %45 {strides = array<i32>} : memref<1x8x128xbf16, #tpu.memory_space<vmem>>, vector<1x8x8xbf16>,
    %46 = vector.extract_strided_slice %8 {offsets = [0, 8], sizes = [8, 8], strides = [1, 1]} : vector<8x128xbf16> to vector<8x8xbf16>
    %47 = vector.extract_strided_slice %9 {offsets = [0, 8], sizes = [8, 8], strides = [1, 1]} : vector<8x128xbf16> to vector<8x8xbf16>
    %cst_22 = arith.constant dense<0.000000e+00> : vector<8x8xf32>
    %48 = tpu.matmul %46, %47, %cst_22 {dimension_numbers = #tpu.dot_dimension_numbers<[1], [1], [0], [0], [0, 0, 1, 0], [], []>} : vector<8x8xbf16>, vector<8x8xbf16>, vector<8x8xf32> -> vector<8x8xf32>
    %cst_23 = arith.constant 0.353553385 : f32
    %49 = vector.broadcast %cst_23 : f32 to vector<8x8xf32>
    %50 = arith.mulf %48, %49 : vector<8x8xf32>
    %cst_24 = arith.constant -1.000000e+09 : f32
    %51 = vector.broadcast %cst_24 : f32 to vector<8x8xf32>
    %52 = arith.select %19, %50, %51 : vector<8x8xi1>, vector<8x8xf32>
    %cst_25 = arith.constant dense<0xFF800000> : vector<8xf32>
    %53 = vector.multi_reduction <maximumf>, %52, %cst_25 [1] : vector<8x8xf32> to vector<8xf32>
    %54 = vector.shape_cast %53 : vector<8xf32> to vector<8x1xf32>
    %55 = vector.broadcast %54 : vector<8x1xf32> to vector<8x8xf32>
    %56 = arith.subf %52, %55 : vector<8x8xf32>
    %57 = math.exp %56 : vector<8x8xf32>
    %cst_26 = arith.constant dense<0.000000e+00> : vector<8xf32>
    %58 = vector.multi_reduction <add>, %57, %cst_26 [1] : vector<8x8xf32> to vector<8xf32>
    %59 = vector.shape_cast %58 : vector<8xf32> to vector<8x1xf32>
    %60 = tpu.reciprocal %59 {approx = true} : vector<8x1xf32> -> vector<8x1xf32>
    %61 = vector.broadcast %60 : vector<8x1xf32> to vector<8x8xf32>
    %62 = arith.mulf %57, %61 : vector<8x8xf32>
    %63 = arith.truncf %62 : vector<8x8xf32> to vector<8x8xbf16>
    %64 = vector.extract_strided_slice %10 {offsets = [0, 8], sizes = [8, 8], strides = [1, 1]} : vector<8x128xbf16> to vector<8x8xbf16>
    %cst_27 = arith.constant dense<0.000000e+00> : vector<8x8xf32>
    %65 = tpu.matmul %63, %64, %cst_27 {dimension_numbers = #tpu.dot_dimension_numbers<[1], [0], [0], [1], [0, 0, 1, 1], [], []>} : vector<8x8xbf16>, vector<8x8xbf16>, vector<8x8xf32> -> vector<8x8xf32>
    %66 = arith.truncf %65 : vector<8x8xf32> to vector<8x8xbf16>
    %c0_28 = arith.constant 0 : index
    %c0_29 = arith.constant 0 : index
    %c8 = arith.constant 8 : index
    %67 = vector.load %arg5[%c0_28, %c0_29, %c8] : memref<1x8x128xbf16, #tpu.memory_space<vmem>>, vector<1x8x8xbf16>
    %68 = vector.shape_cast %67 : vector<1x8x8xbf16> to vector<8x8xbf16>
    %69 = vector.shape_cast %66 : vector<8x8xbf16> to vector<1x8x8xbf16>
    tpu.vector_store %arg5[%c0_28, %c0_29, %c8], %69 {strides = array<i32>} : memref<1x8x128xbf16, #tpu.memory_space<vmem>>, vector<1x8x8xbf16>,
    %70 = vector.extract_strided_slice %8 {offsets = [0, 16], sizes = [8, 8], strides = [1, 1]} : vector<8x128xbf16> to vector<8x8xbf16>
    %71 = vector.extract_strided_slice %9 {offsets = [0, 16], sizes = [8, 8], strides = [1, 1]} : vector<8x128xbf16> to vector<8x8xbf16>
    %cst_30 = arith.constant dense<0.000000e+00> : vector<8x8xf32>
    %72 = tpu.matmul %70, %71, %cst_30 {dimension_numbers = #tpu.dot_dimension_numbers<[1], [1], [0], [0], [0, 0, 1, 0], [], []>} : vector<8x8xbf16>, vector<8x8xbf16>, vector<8x8xf32> -> vector<8x8xf32>
    %cst_31 = arith.constant 0.353553385 : f32
    %73 = vector.broadcast %cst_31 : f32 to vector<8x8xf32>
    %74 = arith.mulf %72, %73 : vector<8x8xf32>
    %cst_32 = arith.constant -1.000000e+09 : f32
    %75 = vector.broadcast %cst_32 : f32 to vector<8x8xf32>
    %76 = arith.select %19, %74, %75 : vector<8x8xi1>, vector<8x8xf32>
    %cst_33 = arith.constant dense<0xFF800000> : vector<8xf32>
    %77 = vector.multi_reduction <maximumf>, %76, %cst_33 [1] : vector<8x8xf32> to vector<8xf32>
    %78 = vector.shape_cast %77 : vector<8xf32> to vector<8x1xf32>
    %79 = vector.broadcast %78 : vector<8x1xf32> to vector<8x8xf32>
    %80 = arith.subf %76, %79 : vector<8x8xf32>
    %81 = math.exp %80 : vector<8x8xf32>
    %cst_34 = arith.constant dense<0.000000e+00> : vector<8xf32>
    %82 = vector.multi_reduction <add>, %81, %cst_34 [1] : vector<8x8xf32> to vector<8xf32>
    %83 = vector.shape_cast %82 : vector<8xf32> to vector<8x1xf32>
    %84 = tpu.reciprocal %83 {approx = true} : vector<8x1xf32> -> vector<8x1xf32>
    %85 = vector.broadcast %84 : vector<8x1xf32> to vector<8x8xf32>
    %86 = arith.mulf %81, %85 : vector<8x8xf32>
    %87 = arith.truncf %86 : vector<8x8xf32> to vector<8x8xbf16>
    %88 = vector.extract_strided_slice %10 {offsets = [0, 16], sizes = [8, 8], strides = [1, 1]} : vector<8x128xbf16> to vector<8x8xbf16>
    %cst_35 = arith.constant dense<0.000000e+00> : vector<8x8xf32>
    %89 = tpu.matmul %87, %88, %cst_35 {dimension_numbers = #tpu.dot_dimension_numbers<[1], [0], [0], [1], [0, 0, 1, 1], [], []>} : vector<8x8xbf16>, vector<8x8xbf16>, vector<8x8xf32> -> vector<8x8xf32>
    %90 = arith.truncf %89 : vector<8x8xf32> to vector<8x8xbf16>
    %c0_36 = arith.constant 0 : index
    %c0_37 = arith.constant 0 : index
    %c16 = arith.constant 16 : index
    %91 = vector.load %arg5[%c0_36, %c0_37, %c16] : memref<1x8x128xbf16, #tpu.memory_space<vmem>>, vector<1x8x8xbf16>
    %92 = vector.shape_cast %91 : vector<1x8x8xbf16> to vector<8x8xbf16>
    %93 = vector.shape_cast %90 : vector<8x8xbf16> to vector<1x8x8xbf16>
    tpu.vector_store %arg5[%c0_36, %c0_37, %c16], %93 {strides = array<i32>} : memref<1x8x128xbf16, #tpu.memory_space<vmem>>, vector<1x8x8xbf16>,
    %94 = vector.extract_strided_slice %8 {offsets = [0, 24], sizes = [8, 8], strides = [1, 1]} : vector<8x128xbf16> to vector<8x8xbf16>
    %95 = vector.extract_strided_slice %9 {offsets = [0, 24], sizes = [8, 8], strides = [1, 1]} : vector<8x128xbf16> to vector<8x8xbf16>
    %cst_38 = arith.constant dense<0.000000e+00> : vector<8x8xf32>
    %96 = tpu.matmul %94, %95, %cst_38 {dimension_numbers = #tpu.dot_dimension_numbers<[1], [1], [0], [0], [0, 0, 1, 0], [], []>} : vector<8x8xbf16>, vector<8x8xbf16>, vector<8x8xf32> -> vector<8x8xf32>
    %cst_39 = arith.constant 0.353553385 : f32
    %97 = vector.broadcast %cst_39 : f32 to vector<8x8xf32>
    %98 = arith.mulf %96, %97 : vector<8x8xf32>
    %cst_40 = arith.constant -1.000000e+09 : f32
    %99 = vector.broadcast %cst_40 : f32 to vector<8x8xf32>
    %100 = arith.select %19, %98, %99 : vector<8x8xi1>, vector<8x8xf32>
    %cst_41 = arith.constant dense<0xFF800000> : vector<8xf32>
    %101 = vector.multi_reduction <maximumf>, %100, %cst_41 [1] : vector<8x8xf32> to vector<8xf32>
    %102 = vector.shape_cast %101 : vector<8xf32> to vector<8x1xf32>
    %103 = vector.broadcast %102 : vector<8x1xf32> to vector<8x8xf32>
    %104 = arith.subf %100, %103 : vector<8x8xf32>
    %105 = math.exp %104 : vector<8x8xf32>
    %cst_42 = arith.constant dense<0.000000e+00> : vector<8xf32>
    %106 = vector.multi_reduction <add>, %105, %cst_42 [1] : vector<8x8xf32> to vector<8xf32>
    %107 = vector.shape_cast %106 : vector<8xf32> to vector<8x1xf32>
    %108 = tpu.reciprocal %107 {approx = true} : vector<8x1xf32> -> vector<8x1xf32>
    %109 = vector.broadcast %108 : vector<8x1xf32> to vector<8x8xf32>
    %110 = arith.mulf %105, %109 : vector<8x8xf32>
    %111 = arith.truncf %110 : vector<8x8xf32> to vector<8x8xbf16>
    %112 = vector.extract_strided_slice %10 {offsets = [0, 24], sizes = [8, 8], strides = [1, 1]} : vector<8x128xbf16> to vector<8x8xbf16>
    %cst_43 = arith.constant dense<0.000000e+00> : vector<8x8xf32>
    %113 = tpu.matmul %111, %112, %cst_43 {dimension_numbers = #tpu.dot_dimension_numbers<[1], [0], [0], [1], [0, 0, 1, 1], [], []>} : vector<8x8xbf16>, vector<8x8xbf16>, vector<8x8xf32> -> vector<8x8xf32>
    %114 = arith.truncf %113 : vector<8x8xf32> to vector<8x8xbf16>
    %c0_44 = arith.constant 0 : index
    %c0_45 = arith.constant 0 : index
    %c24 = arith.constant 24 : index
    %115 = vector.load %arg5[%c0_44, %c0_45, %c24] : memref<1x8x128xbf16, #tpu.memory_space<vmem>>, vector<1x8x8xbf16>
    %116 = vector.shape_cast %115 : vector<1x8x8xbf16> to vector<8x8xbf16>
    %117 = vector.shape_cast %114 : vector<8x8xbf16> to vector<1x8x8xbf16>
    tpu.vector_store %arg5[%c0_44, %c0_45, %c24], %117 {strides = array<i32>} : memref<1x8x128xbf16, #tpu.memory_space<vmem>>, vector<1x8x8xbf16>,
    return
  }
  func.func @transform_0(%arg0: i32) -> (i32, i32, i32) {
    %c0_i32 = arith.constant 0 : i32
    %c0_i32_0 = arith.constant 0 : i32
    %c0_i32_1 = arith.constant 0 : i32
    return %arg0, %c0_i32, %c0_i32_0 : i32, i32, i32
  }
  func.func @transform_1(%arg0: i32) -> (i32, i32, i32) {
    %c0_i32 = arith.constant 0 : i32
    %c0_i32_0 = arith.constant 0 : i32
    %c0_i32_1 = arith.constant 0 : i32
    return %arg0, %c0_i32, %c0_i32_0 : i32, i32, i32
  }
  func.func @transform_2(%arg0: i32) -> (i32, i32) {
    %c0_i32 = arith.constant 0 : i32
    %c0_i32_0 = arith.constant 0 : i32
    %c0_i32_1 = arith.constant 0 : i32
    return %c0_i32, %c0_i32_0 : i32, i32
  }
  func.func @transform_3(%arg0: i32) -> (i32, i32) {
    %c0_i32 = arith.constant 0 : i32
    %c0_i32_0 = arith.constant 0 : i32
    %c0_i32_1 = arith.constant 0 : i32
    return %c0_i32, %c0_i32_0 : i32, i32
  }
  func.func @transform_4(%arg0: i32) -> (i32, i32, i32) {
    %c0_i32 = arith.constant 0 : i32
    %c0_i32_0 = arith.constant 0 : i32
    %c0_i32_1 = arith.constant 0 : i32
    return %arg0, %c0_i32, %c0_i32_0 : i32, i32, i32
  }
}

module attributes {stable_mosaic.version = 11 : i64} {
  func.func @_head_kernel(%arg0: i32, %arg1: i32, %arg2: i32, %arg3: memref<16x128xbf16, #tpu.memory_space<vmem>>, %arg4: memref<128x128xbf16, #tpu.memory_space<vmem>>, %arg5: memref<1x128xf32, #tpu.memory_space<vmem>>, %arg6: memref<16x128xf32, #tpu.memory_space<vmem>>) attributes {dimension_semantics = [#tpu.dimension_semantics<parallel>, #tpu.dimension_semantics<parallel>, #tpu.dimension_semantics<arbitrary>], iteration_bounds = array<i64: 1, 1, 1>, scalar_prefetch = 0 : i64, scratch_operands = 0 : i64, tpu.core_type = #tpu.core_type<tc>, window_params = [{transform_indices = @transform_0, window_bounds = array<i64: 16, 128>}, {transform_indices = @transform_1, window_bounds = array<i64: 128, 128>}, {transform_indices = @transform_2, window_bounds = array<i64: 1, 128>}, {transform_indices = @transform_3, window_bounds = array<i64: 16, 128>}]} {
    %c0_i32 = arith.constant 0 : i32
    %0 = arith.cmpi eq, %arg2, %c0_i32 : i32
    %1 = arith.extui %0 : i1 to i32
    %c0_i32_0 = arith.constant 0 : i32
    %2 = arith.cmpi ne, %1, %c0_i32_0 : i32
    scf.if %2 {
      %c0_8 = arith.constant 0 : index
      %c0_9 = arith.constant 0 : index
      %9 = vector.load %arg5[%c0_8, %c0_9] : memref<1x128xf32, #tpu.memory_space<vmem>>, vector<1x128xf32>
      %10 = vector.shape_cast %9 : vector<1x128xf32> to vector<1x128xf32>
      %11 = vector.broadcast %10 : vector<1x128xf32> to vector<16x128xf32>
      %c0_10 = arith.constant 0 : index
      %c0_11 = arith.constant 0 : index
      %12 = vector.load %arg6[%c0_10, %c0_11] : memref<16x128xf32, #tpu.memory_space<vmem>>, vector<16x128xf32>
      tpu.vector_store %arg6[%c0_10, %c0_11], %11 {strides = array<i32>} : memref<16x128xf32, #tpu.memory_space<vmem>>, vector<16x128xf32>,
    } else {
    }
    %c0 = arith.constant 0 : index
    %c0_1 = arith.constant 0 : index
    %3 = vector.load %arg6[%c0, %c0_1] : memref<16x128xf32, #tpu.memory_space<vmem>>, vector<16x128xf32>
    %c0_2 = arith.constant 0 : index
    %c0_3 = arith.constant 0 : index
    %4 = vector.load %arg3[%c0_2, %c0_3] : memref<16x128xbf16, #tpu.memory_space<vmem>>, vector<16x128xbf16>
    %c0_4 = arith.constant 0 : index
    %c0_5 = arith.constant 0 : index
    %5 = vector.load %arg4[%c0_4, %c0_5] : memref<128x128xbf16, #tpu.memory_space<vmem>>, vector<128x128xbf16>
    %cst = arith.constant dense<0.000000e+00> : vector<16x128xf32>
    %6 = tpu.matmul %4, %5, %cst {dimension_numbers = #tpu.dot_dimension_numbers<[1], [0], [0], [1], [0, 0, 1, 1], [], []>} : vector<16x128xbf16>, vector<128x128xbf16>, vector<16x128xf32> -> vector<16x128xf32>
    %7 = arith.addf %3, %6 : vector<16x128xf32>
    %c0_6 = arith.constant 0 : index
    %c0_7 = arith.constant 0 : index
    %8 = vector.load %arg6[%c0_6, %c0_7] : memref<16x128xf32, #tpu.memory_space<vmem>>, vector<16x128xf32>
    tpu.vector_store %arg6[%c0_6, %c0_7], %7 {strides = array<i32>} : memref<16x128xf32, #tpu.memory_space<vmem>>, vector<16x128xf32>,
    return
  }
  func.func @transform_0(%arg0: i32, %arg1: i32, %arg2: i32) -> (i32, i32) {
    %c0_i32 = arith.constant 0 : i32
    return %arg0, %arg2 : i32, i32
  }
  func.func @transform_1(%arg0: i32, %arg1: i32, %arg2: i32) -> (i32, i32) {
    %c0_i32 = arith.constant 0 : i32
    return %arg2, %arg1 : i32, i32
  }
  func.func @transform_2(%arg0: i32, %arg1: i32, %arg2: i32) -> (i32, i32) {
    %c0_i32 = arith.constant 0 : i32
    %c0_i32_0 = arith.constant 0 : i32
    return %c0_i32, %arg1 : i32, i32
  }
  func.func @transform_3(%arg0: i32, %arg1: i32, %arg2: i32) -> (i32, i32) {
    %c0_i32 = arith.constant 0 : i32
    return %arg0, %arg1 : i32, i32
  }
}

module attributes {stable_mosaic.version = 11 : i64} {
  func.func @_cross_attn_kernel(%arg0: i32, %arg1: memref<1x1x8xi32, #tpu.memory_space<vmem>>, %arg2: memref<1x8x128xbf16, #tpu.memory_space<vmem>>, %arg3: memref<1x8x128xbf16, #tpu.memory_space<vmem>>, %arg4: memref<128x128xbf16, #tpu.memory_space<vmem>>, %arg5: memref<1x128xf32, #tpu.memory_space<vmem>>, %arg6: memref<128x256xbf16, #tpu.memory_space<vmem>>, %arg7: memref<1x256xf32, #tpu.memory_space<vmem>>, %arg8: memref<1x8x128xbf16, #tpu.memory_space<vmem>>) attributes {dimension_semantics = [#tpu.dimension_semantics<parallel>], iteration_bounds = array<i64: 2>, scalar_prefetch = 0 : i64, scratch_operands = 0 : i64, tpu.core_type = #tpu.core_type<tc>, window_params = [{transform_indices = @transform_0, window_bounds = array<i64: 1, 1, 8>}, {transform_indices = @transform_1, window_bounds = array<i64: 1, 8, 128>}, {transform_indices = @transform_2, window_bounds = array<i64: 1, 8, 128>}, {pipeline_mode = #tpu.pipeline_mode<synchronous>, transform_indices = @transform_3, window_bounds = array<i64: 128, 128>}, {pipeline_mode = #tpu.pipeline_mode<synchronous>, transform_indices = @transform_4, window_bounds = array<i64: 1, 128>}, {pipeline_mode = #tpu.pipeline_mode<synchronous>, transform_indices = @transform_5, window_bounds = array<i64: 128, 256>}, {pipeline_mode = #tpu.pipeline_mode<synchronous>, transform_indices = @transform_6, window_bounds = array<i64: 1, 256>}, {transform_indices = @transform_7, window_bounds = array<i64: 1, 8, 128>}]} {
    %c0 = arith.constant 0 : index
    %c0_0 = arith.constant 0 : index
    %c0_1 = arith.constant 0 : index
    %0 = vector.load %arg2[%c0, %c0_0, %c0_1] : memref<1x8x128xbf16, #tpu.memory_space<vmem>>, vector<1x8x128xbf16>
    %1 = vector.shape_cast %0 : vector<1x8x128xbf16> to vector<8x128xbf16>
    %c0_2 = arith.constant 0 : index
    %c0_3 = arith.constant 0 : index
    %c0_4 = arith.constant 0 : index
    %2 = vector.load %arg3[%c0_2, %c0_3, %c0_4] : memref<1x8x128xbf16, #tpu.memory_space<vmem>>, vector<1x8x128xbf16>
    %3 = vector.shape_cast %2 : vector<1x8x128xbf16> to vector<8x128xbf16>
    %c0_5 = arith.constant 0 : index
    %c0_6 = arith.constant 0 : index
    %4 = vector.load %arg4[%c0_5, %c0_6] : memref<128x128xbf16, #tpu.memory_space<vmem>>, vector<128x128xbf16>
    %cst = arith.constant dense<0.000000e+00> : vector<8x128xf32>
    %5 = tpu.matmul %1, %4, %cst {dimension_numbers = #tpu.dot_dimension_numbers<[1], [0], [0], [1], [0, 0, 1, 1], [], []>} : vector<8x128xbf16>, vector<128x128xbf16>, vector<8x128xf32> -> vector<8x128xf32>
    %c0_7 = arith.constant 0 : index
    %c0_8 = arith.constant 0 : index
    %6 = vector.load %arg5[%c0_7, %c0_8] : memref<1x128xf32, #tpu.memory_space<vmem>>, vector<1x128xf32>
    %7 = vector.broadcast %6 : vector<1x128xf32> to vector<8x128xf32>
    %8 = arith.addf %5, %7 : vector<8x128xf32>
    %9 = arith.truncf %8 : vector<8x128xf32> to vector<8x128xbf16>
    %c0_9 = arith.constant 0 : index
    %c0_10 = arith.constant 0 : index
    %10 = vector.load %arg6[%c0_9, %c0_10] : memref<128x256xbf16, #tpu.memory_space<vmem>>, vector<128x256xbf16>
    %cst_11 = arith.constant dense<0.000000e+00> : vector<8x256xf32>
    %11 = tpu.matmul %3, %10, %cst_11 {dimension_numbers = #tpu.dot_dimension_numbers<[1], [0], [0], [1], [0, 0, 1, 1], [], []>} : vector<8x128xbf16>, vector<128x256xbf16>, vector<8x256xf32> -> vector<8x256xf32>
    %c0_12 = arith.constant 0 : index
    %c0_13 = arith.constant 0 : index
    %12 = vector.load %arg7[%c0_12, %c0_13] : memref<1x256xf32, #tpu.memory_space<vmem>>, vector<1x256xf32>
    %13 = vector.broadcast %12 : vector<1x256xf32> to vector<8x256xf32>
    %14 = arith.addf %11, %13 : vector<8x256xf32>
    %15 = arith.truncf %14 : vector<8x256xf32> to vector<8x256xbf16>
    %16 = vector.extract_strided_slice %15 {offsets = [0, 0], sizes = [8, 128], strides = [1, 1]} : vector<8x256xbf16> to vector<8x128xbf16>
    %17 = vector.extract_strided_slice %15 {offsets = [0, 128], sizes = [8, 128], strides = [1, 1]} : vector<8x256xbf16> to vector<8x128xbf16>
    %c0_14 = arith.constant 0 : index
    %c0_15 = arith.constant 0 : index
    %c0_16 = arith.constant 0 : index
    %18 = vector.load %arg1[%c0_14, %c0_15, %c0_16] : memref<1x1x8xi32, #tpu.memory_space<vmem>>, vector<1x1x8xi32>
    %19 = vector.shape_cast %18 : vector<1x1x8xi32> to vector<1x8xi32>
    %c-1_i32 = arith.constant -1 : i32
    %20 = vector.broadcast %c-1_i32 : i32 to vector<1x8xi32>
    %21 = arith.cmpi ne, %19, %20 : vector<1x8xi32>
    %cst_17 = arith.constant 0.000000e+00 : bf16
    %22 = vector.broadcast %cst_17 : bf16 to vector<1x8x128xbf16>
    %c0_18 = arith.constant 0 : index
    %c0_19 = arith.constant 0 : index
    %c0_20 = arith.constant 0 : index
    %23 = vector.load %arg8[%c0_18, %c0_19, %c0_20] : memref<1x8x128xbf16, #tpu.memory_space<vmem>>, vector<1x8x128xbf16>
    tpu.vector_store %arg8[%c0_18, %c0_19, %c0_20], %22 {strides = array<i32>} : memref<1x8x128xbf16, #tpu.memory_space<vmem>>, vector<1x8x128xbf16>,
    %24 = vector.extract_strided_slice %9 {offsets = [0, 0], sizes = [8, 8], strides = [1, 1]} : vector<8x128xbf16> to vector<8x8xbf16>
    %25 = vector.extract_strided_slice %16 {offsets = [0, 0], sizes = [8, 8], strides = [1, 1]} : vector<8x128xbf16> to vector<8x8xbf16>
    %cst_21 = arith.constant dense<0.000000e+00> : vector<8x8xf32>
    %26 = tpu.matmul %24, %25, %cst_21 {dimension_numbers = #tpu.dot_dimension_numbers<[1], [1], [0], [0], [0, 0, 1, 0], [], []>} : vector<8x8xbf16>, vector<8x8xbf16>, vector<8x8xf32> -> vector<8x8xf32>
    %cst_22 = arith.constant 0.353553385 : f32
    %27 = vector.broadcast %cst_22 : f32 to vector<8x8xf32>
    %28 = arith.mulf %26, %27 : vector<8x8xf32>
    %cst_23 = arith.constant -1.000000e+09 : f32
    %29 = vector.shape_cast %21 : vector<1x8xi1> to vector<1x8xi1>
    %30 = vector.broadcast %29 : vector<1x8xi1> to vector<8x8xi1>
    %31 = vector.broadcast %cst_23 : f32 to vector<8x8xf32>
    %32 = arith.select %30, %28, %31 : vector<8x8xi1>, vector<8x8xf32>
    %cst_24 = arith.constant dense<0xFF800000> : vector<8xf32>
    %33 = vector.multi_reduction <maximumf>, %32, %cst_24 [1] : vector<8x8xf32> to vector<8xf32>
    %34 = vector.shape_cast %33 : vector<8xf32> to vector<8x1xf32>
    %35 = vector.broadcast %34 : vector<8x1xf32> to vector<8x8xf32>
    %36 = arith.subf %32, %35 : vector<8x8xf32>
    %37 = math.exp %36 : vector<8x8xf32>
    %cst_25 = arith.constant dense<0.000000e+00> : vector<8xf32>
    %38 = vector.multi_reduction <add>, %37, %cst_25 [1] : vector<8x8xf32> to vector<8xf32>
    %39 = vector.shape_cast %38 : vector<8xf32> to vector<8x1xf32>
    %40 = tpu.reciprocal %39 {approx = true} : vector<8x1xf32> -> vector<8x1xf32>
    %41 = vector.broadcast %40 : vector<8x1xf32> to vector<8x8xf32>
    %42 = arith.mulf %37, %41 : vector<8x8xf32>
    %43 = arith.truncf %42 : vector<8x8xf32> to vector<8x8xbf16>
    %44 = vector.extract_strided_slice %17 {offsets = [0, 0], sizes = [8, 8], strides = [1, 1]} : vector<8x128xbf16> to vector<8x8xbf16>
    %cst_26 = arith.constant dense<0.000000e+00> : vector<8x8xf32>
    %45 = tpu.matmul %43, %44, %cst_26 {dimension_numbers = #tpu.dot_dimension_numbers<[1], [0], [0], [1], [0, 0, 1, 1], [], []>} : vector<8x8xbf16>, vector<8x8xbf16>, vector<8x8xf32> -> vector<8x8xf32>
    %46 = arith.truncf %45 : vector<8x8xf32> to vector<8x8xbf16>
    %c0_27 = arith.constant 0 : index
    %c0_28 = arith.constant 0 : index
    %c0_29 = arith.constant 0 : index
    %47 = vector.load %arg8[%c0_27, %c0_28, %c0_29] : memref<1x8x128xbf16, #tpu.memory_space<vmem>>, vector<1x8x8xbf16>
    %48 = vector.shape_cast %47 : vector<1x8x8xbf16> to vector<8x8xbf16>
    %49 = vector.shape_cast %46 : vector<8x8xbf16> to vector<1x8x8xbf16>
    tpu.vector_store %arg8[%c0_27, %c0_28, %c0_29], %49 {strides = array<i32>} : memref<1x8x128xbf16, #tpu.memory_space<vmem>>, vector<1x8x8xbf16>,
    %50 = vector.extract_strided_slice %9 {offsets = [0, 8], sizes = [8, 8], strides = [1, 1]} : vector<8x128xbf16> to vector<8x8xbf16>
    %51 = vector.extract_strided_slice %16 {offsets = [0, 8], sizes = [8, 8], strides = [1, 1]} : vector<8x128xbf16> to vector<8x8xbf16>
    %cst_30 = arith.constant dense<0.000000e+00> : vector<8x8xf32>
    %52 = tpu.matmul %50, %51, %cst_30 {dimension_numbers = #tpu.dot_dimension_numbers<[1], [1], [0], [0], [0, 0, 1, 0], [], []>} : vector<8x8xbf16>, vector<8x8xbf16>, vector<8x8xf32> -> vector<8x8xf32>
    %cst_31 = arith.constant 0.353553385 : f32
    %53 = vector.broadcast %cst_31 : f32 to vector<8x8xf32>
    %54 = arith.mulf %52, %53 : vector<8x8xf32>
    %cst_32 = arith.constant -1.000000e+09 : f32
    %55 = vector.shape_cast %21 : vector<1x8xi1> to vector<1x8xi1>
    %56 = vector.broadcast %55 : vector<1x8xi1> to vector<8x8xi1>
    %57 = vector.broadcast %cst_32 : f32 to vector<8x8xf32>
    %58 = arith.select %56, %54, %57 : vector<8x8xi1>, vector<8x8xf32>
    %cst_33 = arith.constant dense<0xFF800000> : vector<8xf32>
    %59 = vector.multi_reduction <maximumf>, %58, %cst_33 [1] : vector<8x8xf32> to vector<8xf32>
    %60 = vector.shape_cast %59 : vector<8xf32> to vector<8x1xf32>
    %61 = vector.broadcast %60 : vector<8x1xf32> to vector<8x8xf32>
    %62 = arith.subf %58, %61 : vector<8x8xf32>
    %63 = math.exp %62 : vector<8x8xf32>
    %cst_34 = arith.constant dense<0.000000e+00> : vector<8xf32>
    %64 = vector.multi_reduction <add>, %63, %cst_34 [1] : vector<8x8xf32> to vector<8xf32>
    %65 = vector.shape_cast %64 : vector<8xf32> to vector<8x1xf32>
    %66 = tpu.reciprocal %65 {approx = true} : vector<8x1xf32> -> vector<8x1xf32>
    %67 = vector.broadcast %66 : vector<8x1xf32> to vector<8x8xf32>
    %68 = arith.mulf %63, %67 : vector<8x8xf32>
    %69 = arith.truncf %68 : vector<8x8xf32> to vector<8x8xbf16>
    %70 = vector.extract_strided_slice %17 {offsets = [0, 8], sizes = [8, 8], strides = [1, 1]} : vector<8x128xbf16> to vector<8x8xbf16>
    %cst_35 = arith.constant dense<0.000000e+00> : vector<8x8xf32>
    %71 = tpu.matmul %69, %70, %cst_35 {dimension_numbers = #tpu.dot_dimension_numbers<[1], [0], [0], [1], [0, 0, 1, 1], [], []>} : vector<8x8xbf16>, vector<8x8xbf16>, vector<8x8xf32> -> vector<8x8xf32>
    %72 = arith.truncf %71 : vector<8x8xf32> to vector<8x8xbf16>
    %c0_36 = arith.constant 0 : index
    %c0_37 = arith.constant 0 : index
    %c8 = arith.constant 8 : index
    %73 = vector.load %arg8[%c0_36, %c0_37, %c8] : memref<1x8x128xbf16, #tpu.memory_space<vmem>>, vector<1x8x8xbf16>
    %74 = vector.shape_cast %73 : vector<1x8x8xbf16> to vector<8x8xbf16>
    %75 = vector.shape_cast %72 : vector<8x8xbf16> to vector<1x8x8xbf16>
    tpu.vector_store %arg8[%c0_36, %c0_37, %c8], %75 {strides = array<i32>} : memref<1x8x128xbf16, #tpu.memory_space<vmem>>, vector<1x8x8xbf16>,
    %76 = vector.extract_strided_slice %9 {offsets = [0, 16], sizes = [8, 8], strides = [1, 1]} : vector<8x128xbf16> to vector<8x8xbf16>
    %77 = vector.extract_strided_slice %16 {offsets = [0, 16], sizes = [8, 8], strides = [1, 1]} : vector<8x128xbf16> to vector<8x8xbf16>
    %cst_38 = arith.constant dense<0.000000e+00> : vector<8x8xf32>
    %78 = tpu.matmul %76, %77, %cst_38 {dimension_numbers = #tpu.dot_dimension_numbers<[1], [1], [0], [0], [0, 0, 1, 0], [], []>} : vector<8x8xbf16>, vector<8x8xbf16>, vector<8x8xf32> -> vector<8x8xf32>
    %cst_39 = arith.constant 0.353553385 : f32
    %79 = vector.broadcast %cst_39 : f32 to vector<8x8xf32>
    %80 = arith.mulf %78, %79 : vector<8x8xf32>
    %cst_40 = arith.constant -1.000000e+09 : f32
    %81 = vector.shape_cast %21 : vector<1x8xi1> to vector<1x8xi1>
    %82 = vector.broadcast %81 : vector<1x8xi1> to vector<8x8xi1>
    %83 = vector.broadcast %cst_40 : f32 to vector<8x8xf32>
    %84 = arith.select %82, %80, %83 : vector<8x8xi1>, vector<8x8xf32>
    %cst_41 = arith.constant dense<0xFF800000> : vector<8xf32>
    %85 = vector.multi_reduction <maximumf>, %84, %cst_41 [1] : vector<8x8xf32> to vector<8xf32>
    %86 = vector.shape_cast %85 : vector<8xf32> to vector<8x1xf32>
    %87 = vector.broadcast %86 : vector<8x1xf32> to vector<8x8xf32>
    %88 = arith.subf %84, %87 : vector<8x8xf32>
    %89 = math.exp %88 : vector<8x8xf32>
    %cst_42 = arith.constant dense<0.000000e+00> : vector<8xf32>
    %90 = vector.multi_reduction <add>, %89, %cst_42 [1] : vector<8x8xf32> to vector<8xf32>
    %91 = vector.shape_cast %90 : vector<8xf32> to vector<8x1xf32>
    %92 = tpu.reciprocal %91 {approx = true} : vector<8x1xf32> -> vector<8x1xf32>
    %93 = vector.broadcast %92 : vector<8x1xf32> to vector<8x8xf32>
    %94 = arith.mulf %89, %93 : vector<8x8xf32>
    %95 = arith.truncf %94 : vector<8x8xf32> to vector<8x8xbf16>
    %96 = vector.extract_strided_slice %17 {offsets = [0, 16], sizes = [8, 8], strides = [1, 1]} : vector<8x128xbf16> to vector<8x8xbf16>
    %cst_43 = arith.constant dense<0.000000e+00> : vector<8x8xf32>
    %97 = tpu.matmul %95, %96, %cst_43 {dimension_numbers = #tpu.dot_dimension_numbers<[1], [0], [0], [1], [0, 0, 1, 1], [], []>} : vector<8x8xbf16>, vector<8x8xbf16>, vector<8x8xf32> -> vector<8x8xf32>
    %98 = arith.truncf %97 : vector<8x8xf32> to vector<8x8xbf16>
    %c0_44 = arith.constant 0 : index
    %c0_45 = arith.constant 0 : index
    %c16 = arith.constant 16 : index
    %99 = vector.load %arg8[%c0_44, %c0_45, %c16] : memref<1x8x128xbf16, #tpu.memory_space<vmem>>, vector<1x8x8xbf16>
    %100 = vector.shape_cast %99 : vector<1x8x8xbf16> to vector<8x8xbf16>
    %101 = vector.shape_cast %98 : vector<8x8xbf16> to vector<1x8x8xbf16>
    tpu.vector_store %arg8[%c0_44, %c0_45, %c16], %101 {strides = array<i32>} : memref<1x8x128xbf16, #tpu.memory_space<vmem>>, vector<1x8x8xbf16>,
    %102 = vector.extract_strided_slice %9 {offsets = [0, 24], sizes = [8, 8], strides = [1, 1]} : vector<8x128xbf16> to vector<8x8xbf16>
    %103 = vector.extract_strided_slice %16 {offsets = [0, 24], sizes = [8, 8], strides = [1, 1]} : vector<8x128xbf16> to vector<8x8xbf16>
    %cst_46 = arith.constant dense<0.000000e+00> : vector<8x8xf32>
    %104 = tpu.matmul %102, %103, %cst_46 {dimension_numbers = #tpu.dot_dimension_numbers<[1], [1], [0], [0], [0, 0, 1, 0], [], []>} : vector<8x8xbf16>, vector<8x8xbf16>, vector<8x8xf32> -> vector<8x8xf32>
    %cst_47 = arith.constant 0.353553385 : f32
    %105 = vector.broadcast %cst_47 : f32 to vector<8x8xf32>
    %106 = arith.mulf %104, %105 : vector<8x8xf32>
    %cst_48 = arith.constant -1.000000e+09 : f32
    %107 = vector.shape_cast %21 : vector<1x8xi1> to vector<1x8xi1>
    %108 = vector.broadcast %107 : vector<1x8xi1> to vector<8x8xi1>
    %109 = vector.broadcast %cst_48 : f32 to vector<8x8xf32>
    %110 = arith.select %108, %106, %109 : vector<8x8xi1>, vector<8x8xf32>
    %cst_49 = arith.constant dense<0xFF800000> : vector<8xf32>
    %111 = vector.multi_reduction <maximumf>, %110, %cst_49 [1] : vector<8x8xf32> to vector<8xf32>
    %112 = vector.shape_cast %111 : vector<8xf32> to vector<8x1xf32>
    %113 = vector.broadcast %112 : vector<8x1xf32> to vector<8x8xf32>
    %114 = arith.subf %110, %113 : vector<8x8xf32>
    %115 = math.exp %114 : vector<8x8xf32>
    %cst_50 = arith.constant dense<0.000000e+00> : vector<8xf32>
    %116 = vector.multi_reduction <add>, %115, %cst_50 [1] : vector<8x8xf32> to vector<8xf32>
    %117 = vector.shape_cast %116 : vector<8xf32> to vector<8x1xf32>
    %118 = tpu.reciprocal %117 {approx = true} : vector<8x1xf32> -> vector<8x1xf32>
    %119 = vector.broadcast %118 : vector<8x1xf32> to vector<8x8xf32>
    %120 = arith.mulf %115, %119 : vector<8x8xf32>
    %121 = arith.truncf %120 : vector<8x8xf32> to vector<8x8xbf16>
    %122 = vector.extract_strided_slice %17 {offsets = [0, 24], sizes = [8, 8], strides = [1, 1]} : vector<8x128xbf16> to vector<8x8xbf16>
    %cst_51 = arith.constant dense<0.000000e+00> : vector<8x8xf32>
    %123 = tpu.matmul %121, %122, %cst_51 {dimension_numbers = #tpu.dot_dimension_numbers<[1], [0], [0], [1], [0, 0, 1, 1], [], []>} : vector<8x8xbf16>, vector<8x8xbf16>, vector<8x8xf32> -> vector<8x8xf32>
    %124 = arith.truncf %123 : vector<8x8xf32> to vector<8x8xbf16>
    %c0_52 = arith.constant 0 : index
    %c0_53 = arith.constant 0 : index
    %c24 = arith.constant 24 : index
    %125 = vector.load %arg8[%c0_52, %c0_53, %c24] : memref<1x8x128xbf16, #tpu.memory_space<vmem>>, vector<1x8x8xbf16>
    %126 = vector.shape_cast %125 : vector<1x8x8xbf16> to vector<8x8xbf16>
    %127 = vector.shape_cast %124 : vector<8x8xbf16> to vector<1x8x8xbf16>
    tpu.vector_store %arg8[%c0_52, %c0_53, %c24], %127 {strides = array<i32>} : memref<1x8x128xbf16, #tpu.memory_space<vmem>>, vector<1x8x8xbf16>,
    return
  }
  func.func @transform_0(%arg0: i32) -> (i32, i32, i32) {
    %c0_i32 = arith.constant 0 : i32
    %c0_i32_0 = arith.constant 0 : i32
    %c0_i32_1 = arith.constant 0 : i32
    return %arg0, %c0_i32, %c0_i32_0 : i32, i32, i32
  }
  func.func @transform_1(%arg0: i32) -> (i32, i32, i32) {
    %c0_i32 = arith.constant 0 : i32
    %c0_i32_0 = arith.constant 0 : i32
    %c0_i32_1 = arith.constant 0 : i32
    return %arg0, %c0_i32, %c0_i32_0 : i32, i32, i32
  }
  func.func @transform_2(%arg0: i32) -> (i32, i32, i32) {
    %c0_i32 = arith.constant 0 : i32
    %c0_i32_0 = arith.constant 0 : i32
    %c0_i32_1 = arith.constant 0 : i32
    return %arg0, %c0_i32, %c0_i32_0 : i32, i32, i32
  }
  func.func @transform_3(%arg0: i32) -> (i32, i32) {
    %c0_i32 = arith.constant 0 : i32
    %c0_i32_0 = arith.constant 0 : i32
    %c0_i32_1 = arith.constant 0 : i32
    return %c0_i32, %c0_i32_0 : i32, i32
  }
  func.func @transform_4(%arg0: i32) -> (i32, i32) {
    %c0_i32 = arith.constant 0 : i32
    %c0_i32_0 = arith.constant 0 : i32
    %c0_i32_1 = arith.constant 0 : i32
    return %c0_i32, %c0_i32_0 : i32, i32
  }
  func.func @transform_5(%arg0: i32) -> (i32, i32) {
    %c0_i32 = arith.constant 0 : i32
    %c0_i32_0 = arith.constant 0 : i32
    %c0_i32_1 = arith.constant 0 : i32
    return %c0_i32, %c0_i32_0 : i32, i32
  }
  func.func @transform_6(%arg0: i32) -> (i32, i32) {
    %c0_i32 = arith.constant 0 : i32
    %c0_i32_0 = arith.constant 0 : i32
    %c0_i32_1 = arith.constant 0 : i32
    return %c0_i32, %c0_i32_0 : i32, i32
  }
  func.func @transform_7(%arg0: i32) -> (i32, i32, i32) {
    %c0_i32 = arith.constant 0 : i32
    %c0_i32_0 = arith.constant 0 : i32
    %c0_i32_1 = arith.constant 0 : i32
    return %arg0, %c0_i32, %c0_i32_0 : i32, i32, i32
  }
}

</mosaic_0001>

<llo_original>
// kernel: transformer_forward.19
$region0: #{transformer_forward.19}
  #allocation0 [shape = 'u32[]', space=smem, size = 0x4, offset = 0x4, fixed_abs, tag = 'smem constant byte address 0x4 - core index']
  #allocation1 [shape = 'u32[144,128]{1,0:T(1,128)}', space=vmem, size = 0x12000, scoped, tag = 'internal scratch']
  %s0 = inlined_call_operand.vmem [shape: bf16[16,128], index: 0, kind: input, shape index: {}]
  %s1 = inlined_call_operand.vmem [shape: bf16[128,128], index: 1, kind: input, shape index: {}]
  %s2 = inlined_call_operand.vmem [shape: f32[1,128], index: 2, kind: input, shape index: {}]
  %s3 = inlined_call_operand.vmem [shape: bf16[128,128], index: 3, kind: input, shape index: {}]
  %s4 = inlined_call_operand.vmem [shape: f32[1,128], index: 4, kind: input, shape index: {}]
  %s5 = inlined_call_operand.vmem [shape: f32[1,128], index: 5, kind: input, shape index: {}]
  %s6 = inlined_call_operand.vmem [shape: f32[1,128], index: 6, kind: input, shape index: {}]
  %s7 = inlined_call_operand.vmem [shape: bf16[16,128], index: 7, kind: output, shape index: {}]
  %s8 = sld [smem:[#allocation0]]
  $region38: #{transformer_forward.19} parent=0
    _
  %s10 = ssub.s32 1, %s8
  %s11 = scalar_select 0, %s10, %s8
  // Predicated region
  $region2: #{transformer_forward.19} parent=0 // pred_check
    _
  $region3: #{transformer_forward.19} parent=0 // pred_check_branch
    %13 = sbr.rel (0) target = $region5
  $region4: #{transformer_forward.19} parent=0 // pred_region
    _
  $region5: #{transformer_forward.19} parent=0 // pred_fallthru
    _
  // Predicated region
  $region6: #{transformer_forward.19} parent=0 // pred_check
    _
  $region7: #{transformer_forward.19} parent=0 // pred_check_branch
    %15 = sbr.rel (0) target = $region9
  $region8: #{transformer_forward.19} parent=0 // pred_region
    _
  $region9: #{transformer_forward.19} parent=0 // pred_fallthru
    _
  // Predicated region
  $region10: #{transformer_forward.19} parent=0 // pred_check
    _
  $region11: #{transformer_forward.19} parent=0 // pred_check_branch
    %17 = sbr.rel (0) target = $region13
  $region12: #{transformer_forward.19} parent=0 // pred_region
    _
  $region13: #{transformer_forward.19} parent=0 // pred_fallthru
    _
  // Predicated region
  $region14: #{transformer_forward.19} parent=0 // pred_check
    _
  $region15: #{transformer_forward.19} parent=0 // pred_check_branch
    %19 = sbr.rel (0) target = $region17
  $region16: #{transformer_forward.19} parent=0 // pred_region
    _
  $region17: #{transformer_forward.19} parent=0 // pred_fallthru
    _
  // Predicated region
  $region18: #{transformer_forward.19} parent=0 // pred_check
    _
  $region19: #{transformer_forward.19} parent=0 // pred_check_branch
    %21 = sbr.rel (0) target = $region21
  $region20: #{transformer_forward.19} parent=0 // pred_region
    _
  $region21: #{transformer_forward.19} parent=0 // pred_fallthru
    _
  // Predicated region
  $region22: #{transformer_forward.19} parent=0 // pred_check
    _
  $region23: #{transformer_forward.19} parent=0 // pred_check_branch
    %23 = sbr.rel (0) target = $region25
  $region24: #{transformer_forward.19} parent=0 // pred_region
    _
  $region25: #{transformer_forward.19} parent=0 // pred_fallthru
    _
  // Predicated region
  $region26: #{transformer_forward.19} parent=0 // pred_check
    _
  $region27: #{transformer_forward.19} parent=0 // pred_check_branch
    %25 = sbr.rel (0) target = $region29
  $region28: #{transformer_forward.19} parent=0 // pred_region
    _
  $region29: #{transformer_forward.19} parent=0 // pred_fallthru
    _
  %v27 = vld [vmem:[%s0] sm:$0xf]
  %v28 = vld [vmem:[%s0 + $0x4] sm:$0xf]
  %v29 = vld [vmem:[%s1] sm:$0xf]
  %v30 = vld [vmem:[%s1 + $0x4] sm:$0xf]
  %v31 = vld [vmem:[%s1 + $0x8] sm:$0xf]
  %v32 = vld [vmem:[%s1 + $0xc] sm:$0xf]
  %v33 = vld [vmem:[%s1 + $0x10] sm:$0xf]
  %v34 = vld [vmem:[%s1 + $0x14] sm:$0xf]
  %v35 = vld [vmem:[%s1 + $0x18] sm:$0xf]
  %v36 = vld [vmem:[%s1 + $0x1c] sm:$0xf]
  %v37 = vld [vmem:[%s1 + $0x20] sm:$0xf]
  %v38 = vld [vmem:[%s1 + $0x24] sm:$0xf]
  %v39 = vld [vmem:[%s1 + $0x28] sm:$0xf]
  %v40 = vld [vmem:[%s1 + $0x2c] sm:$0xf]
  %v41 = vld [vmem:[%s1 + $0x30] sm:$0xf]
  %v42 = vld [vmem:[%s1 + $0x34] sm:$0xf]
  %v43 = vld [vmem:[%s1 + $0x38] sm:$0xf]
  %v44 = vld [vmem:[%s1 + $0x3c] sm:$0xf]
  %v45 = vld [vmem:[%s2] sm:$0x1]
  %v47 = vlaneseq
  %v48 = vshrl.u32 %v47, 7
  %v49 = vsub.s32 0, %v48
  %v50 = vrot.slane %v45, %v49
  %v54 = vunpack.c.l.b16 %v27
  %v55 = vunpack.c.l.b16 %v28
  %v56 = vpack.c.b16 %v55, %v54
  %v74 = vunpack.c.l.b16 %v29
  %v75 = vunpack.c.l.b16 %v30
  %v76 = vunpack.c.l.b16 %v31
  %v77 = vunpack.c.l.b16 %v32
  %v78 = vunpack.c.l.b16 %v33
  %v79 = vunpack.c.l.b16 %v34
  %v80 = vunpack.c.l.b16 %v35
  %v81 = vunpack.c.l.b16 %v36
  %v82 = vunpack.c.l.b16 %v37
  %v83 = vunpack.c.l.b16 %v38
  %v84 = vunpack.c.l.b16 %v39
  %v85 = vunpack.c.l.b16 %v40
  %v86 = vunpack.c.l.b16 %v41
  %v87 = vunpack.c.l.b16 %v42
  %v88 = vunpack.c.l.b16 %v43
  %v89 = vunpack.c.l.b16 %v44
  %v90 = vpack.c.b16 %v75, %v74
  %v91 = vpack.c.b16 %v77, %v76
  %v92 = vpack.c.b16 %v79, %v78
  %v93 = vpack.c.b16 %v81, %v80
  %v94 = vpack.c.b16 %v83, %v82
  %v95 = vpack.c.b16 %v85, %v84
  %v96 = vpack.c.b16 %v87, %v86
  %v97 = vpack.c.b16 %v89, %v88
  %106 = vmatprep.subr.bf16.mxu0 0
  %107 = vmatpush1.bf16.msra.mxu0 %v90
  %108 = vmatprep.subr.bf16.mxu0 0
  %109 = vmatpush1.bf16.msra.mxu0 %v91
  %110 = vmatprep.subr.bf16.mxu0 0
  %111 = vmatpush1.bf16.msra.mxu0 %v92
  %112 = vmatprep.subr.bf16.mxu0 0
  %113 = vmatpush1.bf16.msra.mxu0 %v93
  %114 = vmatprep.subr.bf16.mxu0 0
  %115 = vmatpush1.bf16.msra.mxu0 %v94
  %116 = vmatprep.subr.bf16.mxu0 0
  %117 = vmatpush1.bf16.msra.mxu0 %v95
  %118 = vmatprep.subr.bf16.mxu0 0
  %119 = vmatpush1.bf16.msra.mxu0 %v96
  %120 = vmatprep.subr.bf16.mxu0 0
  %121 = vmatpush1.bf16.msra.mxu0 %v97
  %122 = vmatprep.subr.bf16.mxu0 0
  %123 = vmatpush1.bf16.msra.mxu0 0
  %124 = vmatprep.subr.bf16.mxu0 0
  %125 = vmatpush1.bf16.msra.mxu0 0
  %126 = vmatprep.subr.bf16.mxu0 0
  %127 = vmatpush1.bf16.msra.mxu0 0
  %128 = vmatprep.subr.bf16.mxu0 0
  %129 = vmatpush1.bf16.msra.mxu0 0
  %130 = vmatprep.subr.bf16.mxu0 0
  %131 = vmatpush1.bf16.msra.mxu0 0
  %132 = vmatprep.subr.bf16.mxu0 0
  %133 = vmatpush1.bf16.msra.mxu0 0
  %134 = vmatprep.subr.bf16.mxu0 0
  %135 = vmatpush1.bf16.msra.mxu0 0
  %136 = vmatprep.subr.bf16.mxu0 0
  %137 = vmatpush1.bf16.msra.mxu0 0
  %138 = vmatprep.mubr.bf16.mxu0 0
  %139 = vmatmul.mubr.bf16.gmra.mrb[0].mxu0 %v56
  %v140 = vpop.f32.mrb[0].mxu0
  %v141 = vadd.f32 %v50, %v140
  %v142 = vpop.f32.mrb[0].mxu0
  %v143 = vpop.f32.mrb[0].mxu0
  %v144 = vadd.f32 %v50, %v143
  %v145 = vpop.f32.mrb[0].mxu0
  %146 = vdwg.mxu0
  %v147 = vmax.f32 %v141, 0.0
  %v148 = vmax.f32 %v144, 0.0
  %v149 = vpack.c.bf16 %v148, %v147
  %v150 = vld [vmem:[%s3] sm:$0xf]
  %v151 = vld [vmem:[%s3 + $0x4] sm:$0xf]
  %v152 = vld [vmem:[%s3 + $0x8] sm:$0xf]
  %v153 = vld [vmem:[%s3 + $0xc] sm:$0xf]
  %v154 = vld [vmem:[%s3 + $0x10] sm:$0xf]
  %v155 = vld [vmem:[%s3 + $0x14] sm:$0xf]
  %v156 = vld [vmem:[%s3 + $0x18] sm:$0xf]
  %v157 = vld [vmem:[%s3 + $0x1c] sm:$0xf]
  %v158 = vld [vmem:[%s3 + $0x20] sm:$0xf]
  %v159 = vld [vmem:[%s3 + $0x24] sm:$0xf]
  %v160 = vld [vmem:[%s3 + $0x28] sm:$0xf]
  %v161 = vld [vmem:[%s3 + $0x2c] sm:$0xf]
  %v162 = vld [vmem:[%s3 + $0x30] sm:$0xf]
  %v163 = vld [vmem:[%s3 + $0x34] sm:$0xf]
  %v164 = vld [vmem:[%s3 + $0x38] sm:$0xf]
  %v165 = vld [vmem:[%s3 + $0x3c] sm:$0xf]
  %v166 = vld [vmem:[%s4] sm:$0x1]
  %v168 = vlaneseq
  %v169 = vshrl.u32 %v168, 7
  %v170 = vsub.s32 0, %v169
  %v171 = vrot.slane %v166, %v170
  %v189 = vunpack.c.l.b16 %v150
  %v190 = vunpack.c.l.b16 %v151
  %v191 = vunpack.c.l.b16 %v152
  %v192 = vunpack.c.l.b16 %v153
  %v193 = vunpack.c.l.b16 %v154
  %v194 = vunpack.c.l.b16 %v155
  %v195 = vunpack.c.l.b16 %v156
  %v196 = vunpack.c.l.b16 %v157
  %v197 = vunpack.c.l.b16 %v158
  %v198 = vunpack.c.l.b16 %v159
  %v199 = vunpack.c.l.b16 %v160
  %v200 = vunpack.c.l.b16 %v161
  %v201 = vunpack.c.l.b16 %v162
  %v202 = vunpack.c.l.b16 %v163
  %v203 = vunpack.c.l.b16 %v164
  %v204 = vunpack.c.l.b16 %v165
  %v205 = vpack.c.b16 %v190, %v189
  %v206 = vpack.c.b16 %v192, %v191
  %v207 = vpack.c.b16 %v194, %v193
  %v208 = vpack.c.b16 %v196, %v195
  %v209 = vpack.c.b16 %v198, %v197
  %v210 = vpack.c.b16 %v200, %v199
  %v211 = vpack.c.b16 %v202, %v201
  %v212 = vpack.c.b16 %v204, %v203
  %221 = vmatprep.subr.bf16.mxu0 0
  %222 = vmatpush1.bf16.msra.mxu0 %v205
  %223 = vmatprep.subr.bf16.mxu0 0
  %224 = vmatpush1.bf16.msra.mxu0 %v206
  %225 = vmatprep.subr.bf16.mxu0 0
  %226 = vmatpush1.bf16.msra.mxu0 %v207
  %227 = vmatprep.subr.bf16.mxu0 0
  %228 = vmatpush1.bf16.msra.mxu0 %v208
  %229 = vmatprep.subr.bf16.mxu0 0
  %230 = vmatpush1.bf16.msra.mxu0 %v209
  %231 = vmatprep.subr.bf16.mxu0 0
  %232 = vmatpush1.bf16.msra.mxu0 %v210
  %233 = vmatprep.subr.bf16.mxu0 0
  %234 = vmatpush1.bf16.msra.mxu0 %v211
  %235 = vmatprep.subr.bf16.mxu0 0
  %236 = vmatpush1.bf16.msra.mxu0 %v212
  %237 = vmatprep.subr.bf16.mxu0 0
  %238 = vmatpush1.bf16.msra.mxu0 0
  %239 = vmatprep.subr.bf16.mxu0 0
  %240 = vmatpush1.bf16.msra.mxu0 0
  %241 = vmatprep.subr.bf16.mxu0 0
  %242 = vmatpush1.bf16.msra.mxu0 0
  %243 = vmatprep.subr.bf16.mxu0 0
  %244 = vmatpush1.bf16.msra.mxu0 0
  %245 = vmatprep.subr.bf16.mxu0 0
  %246 = vmatpush1.bf16.msra.mxu0 0
  %247 = vmatprep.subr.bf16.mxu0 0
  %248 = vmatpush1.bf16.msra.mxu0 0
  %249 = vmatprep.subr.bf16.mxu0 0
  %250 = vmatpush1.bf16.msra.mxu0 0
  %251 = vmatprep.subr.bf16.mxu0 0
  %252 = vmatpush1.bf16.msra.mxu0 0
  %253 = vmatprep.mubr.bf16.mxu0 0
  %254 = vmatmul.mubr.bf16.gmra.mrb[0].mxu0 %v149
  %v255 = vpop.f32.mrb[0].mxu0
  %v256 = vadd.f32 %v171, %v255
  %v257 = vpop.f32.mrb[0].mxu0
  %v258 = vpop.f32.mrb[0].mxu0
  %v259 = vadd.f32 %v171, %v258
  %v260 = vpop.f32.mrb[0].mxu0
  %261 = vdwg.mxu0
  %v262 = vunpack.c.l.bf16 %v27
  %v263 = vunpack.c.l.bf16 %v28
  %v264 = vadd.f32 %v262, %v256
  %v265 = vadd.f32 %v263, %v259
  %v266 = vld [vmem:[%s5] sm:$0x1]
  %v267 = vld [vmem:[%s6] sm:$0x1]
  %268 = vadd.xlane.f32.xlu0 %v264
  %v269 = vpop.xlane.xlu0 %268
  %270 = vadd.xlane.f32.xlu0 %v265
  %v271 = vpop.xlane.xlu0 %270
  %v272 = vmul.f32 %v269, 0.03125
  %v273 = vmul.f32 %v271, 0.03125
  %v274 = vlaneseq
  %v275 = vand.u32 %v274, 127
  %vm276 = vcmp.lt.s32.totalorder %v275, 32
  %v277 = vsub.f32 %v264, %v272
  %v278 = vsub.f32 %v265, %v273
  %v279 = vsel %vm276, %v277, 0.0
  %v280 = vsel %vm276, %v278, 0.0
  %v281 = vmul.f32 %v279, %v279
  %v282 = vmul.f32 %v280, %v280
  %283 = vadd.xlane.f32.xlu0 %v281
  %v284 = vpop.xlane.xlu0 %283
  %285 = vadd.xlane.f32.xlu0 %v282
  %v286 = vpop.xlane.xlu0 %285
  %v287 = vmul.f32 %v284, 0.03125
  %v288 = vmul.f32 %v286, 0.03125
  %v289 = vadd.f32 %v287, 1e-05
  %v290 = vadd.f32 %v288, 1e-05
  %v291 = vrsqrt.pop %v289
  %v292 = vrsqrt.pop %v290
  %v293 = vmul.f32 %v279, %v291
  %v294 = vmul.f32 %v280, %v292
  %v296 = vlaneseq
  %v297 = vshrl.u32 %v296, 7
  %v298 = vsub.s32 0, %v297
  %v299 = vrot.slane %v266, %v298
  %v301 = vmul.f32 %v293, %v299
  %v302 = vmul.f32 %v294, %v299
  %v304 = vlaneseq
  %v305 = vshrl.u32 %v304, 7
  %v306 = vsub.s32 0, %v305
  %v307 = vrot.slane %v267, %v306
  %v309 = vadd.f32 %v301, %v307
  %v310 = vadd.f32 %v302, %v307
  %v311 = vpack.c.bf16 %v310, %v309
  %v313 = vunpack.c.l.b16 %v311
  %v314 = vunpack.c.h.b16 %v311
  %v315 = vpack.c.b16 %v313, %v313
  %v316 = vpack.c.b16 %v314, %v314
  %319 = vst [vmem:[%s7] sm:$0xf] %v315
  %320 = vst [vmem:[%s7 + $0x4] sm:$0xf] %v316
  // Predicated region
  $region30: #{transformer_forward.19} parent=0 // pred_check
    _
  $region31: #{transformer_forward.19} parent=0 // pred_check_branch
    %322 = sbr.rel (0) target = $region33
  $region32: #{transformer_forward.19} parent=0 // pred_region
    _
  $region33: #{transformer_forward.19} parent=0 // pred_fallthru
    _
  // Predicated region
  $region34: #{transformer_forward.19} parent=0 // pred_check
    _
  $region35: #{transformer_forward.19} parent=0 // pred_check_branch
    %324 = sbr.rel (0) target = $region37
  $region36: #{transformer_forward.19} parent=0 // pred_region
    _
  $region37: #{transformer_forward.19} parent=0 // pred_fallthru
    _

// kernel: transformer_forward.18
$region0: #{transformer_forward.18}
  #allocation0 [shape = 'u32[]', space=smem, size = 0x4, offset = 0x4, fixed_abs, tag = 'smem constant byte address 0x4 - core index']
  #allocation1 [shape = 'u32[144,128]{1,0:T(1,128)}', space=vmem, size = 0x12000, scoped, tag = 'internal scratch']
  %s0 = inlined_call_operand.vmem [shape: bf16[16,128], index: 0, kind: input, shape index: {}]
  %s1 = inlined_call_operand.vmem [shape: bf16[128,128], index: 1, kind: input, shape index: {}]
  %s2 = inlined_call_operand.vmem [shape: f32[1,128], index: 2, kind: input, shape index: {}]
  %s3 = inlined_call_operand.vmem [shape: bf16[16,128], index: 3, kind: input, shape index: {}]
  %s4 = inlined_call_operand.vmem [shape: f32[1,128], index: 4, kind: input, shape index: {}]
  %s5 = inlined_call_operand.vmem [shape: f32[1,128], index: 5, kind: input, shape index: {}]
  %s6 = inlined_call_operand.vmem [shape: bf16[16,128], index: 6, kind: output, shape index: {}]
  %s7 = sld [smem:[#allocation0]]
  $region34: #{transformer_forward.18} parent=0
    _
  %s9 = ssub.s32 1, %s7
  %s10 = scalar_select 0, %s9, %s7
  // Predicated region
  $region2: #{transformer_forward.18} parent=0 // pred_check
    _
  $region3: #{transformer_forward.18} parent=0 // pred_check_branch
    %12 = sbr.rel (0) target = $region5
  $region4: #{transformer_forward.18} parent=0 // pred_region
    _
  $region5: #{transformer_forward.18} parent=0 // pred_fallthru
    _
  // Predicated region
  $region6: #{transformer_forward.18} parent=0 // pred_check
    _
  $region7: #{transformer_forward.18} parent=0 // pred_check_branch
    %14 = sbr.rel (0) target = $region9
  $region8: #{transformer_forward.18} parent=0 // pred_region
    _
  $region9: #{transformer_forward.18} parent=0 // pred_fallthru
    _
  // Predicated region
  $region10: #{transformer_forward.18} parent=0 // pred_check
    _
  $region11: #{transformer_forward.18} parent=0 // pred_check_branch
    %16 = sbr.rel (0) target = $region13
  $region12: #{transformer_forward.18} parent=0 // pred_region
    _
  $region13: #{transformer_forward.18} parent=0 // pred_fallthru
    _
  // Predicated region
  $region14: #{transformer_forward.18} parent=0 // pred_check
    _
  $region15: #{transformer_forward.18} parent=0 // pred_check_branch
    %18 = sbr.rel (0) target = $region17
  $region16: #{transformer_forward.18} parent=0 // pred_region
    _
  $region17: #{transformer_forward.18} parent=0 // pred_fallthru
    _
  // Predicated region
  $region18: #{transformer_forward.18} parent=0 // pred_check
    _
  $region19: #{transformer_forward.18} parent=0 // pred_check_branch
    %20 = sbr.rel (0) target = $region21
  $region20: #{transformer_forward.18} parent=0 // pred_region
    _
  $region21: #{transformer_forward.18} parent=0 // pred_fallthru
    _
  // Predicated region
  $region22: #{transformer_forward.18} parent=0 // pred_check
    _
  $region23: #{transformer_forward.18} parent=0 // pred_check_branch
    %22 = sbr.rel (0) target = $region25
  $region24: #{transformer_forward.18} parent=0 // pred_region
    _
  $region25: #{transformer_forward.18} parent=0 // pred_fallthru
    _
  %v24 = vld [vmem:[%s0] sm:$0xf]
  %v25 = vld [vmem:[%s0 + $0x4] sm:$0xf]
  %v26 = vld [vmem:[%s1] sm:$0xf]
  %v27 = vld [vmem:[%s1 + $0x4] sm:$0xf]
  %v28 = vld [vmem:[%s1 + $0x8] sm:$0xf]
  %v29 = vld [vmem:[%s1 + $0xc] sm:$0xf]
  %v30 = vld [vmem:[%s1 + $0x10] sm:$0xf]
  %v31 = vld [vmem:[%s1 + $0x14] sm:$0xf]
  %v32 = vld [vmem:[%s1 + $0x18] sm:$0xf]
  %v33 = vld [vmem:[%s1 + $0x1c] sm:$0xf]
  %v34 = vld [vmem:[%s1 + $0x20] sm:$0xf]
  %v35 = vld [vmem:[%s1 + $0x24] sm:$0xf]
  %v36 = vld [vmem:[%s1 + $0x28] sm:$0xf]
  %v37 = vld [vmem:[%s1 + $0x2c] sm:$0xf]
  %v38 = vld [vmem:[%s1 + $0x30] sm:$0xf]
  %v39 = vld [vmem:[%s1 + $0x34] sm:$0xf]
  %v40 = vld [vmem:[%s1 + $0x38] sm:$0xf]
  %v41 = vld [vmem:[%s1 + $0x3c] sm:$0xf]
  %v42 = vld [vmem:[%s2] sm:$0x1]
  %v44 = vlaneseq
  %v45 = vshrl.u32 %v44, 7
  %v46 = vsub.s32 0, %v45
  %v47 = vrot.slane %v42, %v46
  %v51 = vunpack.c.l.b16 %v24
  %v52 = vunpack.c.l.b16 %v25
  %v53 = vpack.c.b16 %v52, %v51
  %v71 = vunpack.c.l.b16 %v26
  %v72 = vunpack.c.l.b16 %v27
  %v73 = vunpack.c.l.b16 %v28
  %v74 = vunpack.c.l.b16 %v29
  %v75 = vunpack.c.l.b16 %v30
  %v76 = vunpack.c.l.b16 %v31
  %v77 = vunpack.c.l.b16 %v32
  %v78 = vunpack.c.l.b16 %v33
  %v79 = vunpack.c.l.b16 %v34
  %v80 = vunpack.c.l.b16 %v35
  %v81 = vunpack.c.l.b16 %v36
  %v82 = vunpack.c.l.b16 %v37
  %v83 = vunpack.c.l.b16 %v38
  %v84 = vunpack.c.l.b16 %v39
  %v85 = vunpack.c.l.b16 %v40
  %v86 = vunpack.c.l.b16 %v41
  %v87 = vpack.c.b16 %v72, %v71
  %v88 = vpack.c.b16 %v74, %v73
  %v89 = vpack.c.b16 %v76, %v75
  %v90 = vpack.c.b16 %v78, %v77
  %v91 = vpack.c.b16 %v80, %v79
  %v92 = vpack.c.b16 %v82, %v81
  %v93 = vpack.c.b16 %v84, %v83
  %v94 = vpack.c.b16 %v86, %v85
  %103 = vmatprep.subr.bf16.mxu0 0
  %104 = vmatpush1.bf16.msra.mxu0 %v87
  %105 = vmatprep.subr.bf16.mxu0 0
  %106 = vmatpush1.bf16.msra.mxu0 %v88
  %107 = vmatprep.subr.bf16.mxu0 0
  %108 = vmatpush1.bf16.msra.mxu0 %v89
  %109 = vmatprep.subr.bf16.mxu0 0
  %110 = vmatpush1.bf16.msra.mxu0 %v90
  %111 = vmatprep.subr.bf16.mxu0 0
  %112 = vmatpush1.bf16.msra.mxu0 %v91
  %113 = vmatprep.subr.bf16.mxu0 0
  %114 = vmatpush1.bf16.msra.mxu0 %v92
  %115 = vmatprep.subr.bf16.mxu0 0
  %116 = vmatpush1.bf16.msra.mxu0 %v93
  %117 = vmatprep.subr.bf16.mxu0 0
  %118 = vmatpush1.bf16.msra.mxu0 %v94
  %119 = vmatprep.subr.bf16.mxu0 0
  %120 = vmatpush1.bf16.msra.mxu0 0
  %121 = vmatprep.subr.bf16.mxu0 0
  %122 = vmatpush1.bf16.msra.mxu0 0
  %123 = vmatprep.subr.bf16.mxu0 0
  %124 = vmatpush1.bf16.msra.mxu0 0
  %125 = vmatprep.subr.bf16.mxu0 0
  %126 = vmatpush1.bf16.msra.mxu0 0
  %127 = vmatprep.subr.bf16.mxu0 0
  %128 = vmatpush1.bf16.msra.mxu0 0
  %129 = vmatprep.subr.bf16.mxu0 0
  %130 = vmatpush1.bf16.msra.mxu0 0
  %131 = vmatprep.subr.bf16.mxu0 0
  %132 = vmatpush1.bf16.msra.mxu0 0
  %133 = vmatprep.subr.bf16.mxu0 0
  %134 = vmatpush1.bf16.msra.mxu0 0
  %135 = vmatprep.mubr.bf16.mxu0 0
  %136 = vmatmul.mubr.bf16.gmra.mrb[0].mxu0 %v53
  %v137 = vpop.f32.mrb[0].mxu0
  %v138 = vadd.f32 %v47, %v137
  %v139 = vpop.f32.mrb[0].mxu0
  %v140 = vpop.f32.mrb[0].mxu0
  %v141 = vadd.f32 %v47, %v140
  %v142 = vpop.f32.mrb[0].mxu0
  %143 = vdwg.mxu0
  %v144 = vld [vmem:[%s3] sm:$0xf]
  %v145 = vld [vmem:[%s3 + $0x4] sm:$0xf]
  %v146 = vunpack.c.l.bf16 %v144
  %v147 = vunpack.c.l.bf16 %v145
  %v148 = vadd.f32 %v146, %v138
  %v149 = vadd.f32 %v147, %v141
  %v150 = vld [vmem:[%s4] sm:$0x1]
  %v151 = vld [vmem:[%s5] sm:$0x1]
  %152 = vadd.xlane.f32.xlu0 %v148
  %v153 = vpop.xlane.xlu0 %152
  %154 = vadd.xlane.f32.xlu0 %v149
  %v155 = vpop.xlane.xlu0 %154
  %v156 = vmul.f32 %v153, 0.03125
  %v157 = vmul.f32 %v155, 0.03125
  %v158 = vlaneseq
  %v159 = vand.u32 %v158, 127
  %vm160 = vcmp.lt.s32.totalorder %v159, 32
  %v161 = vsub.f32 %v148, %v156
  %v162 = vsub.f32 %v149, %v157
  %v163 = vsel %vm160, %v161, 0.0
  %v164 = vsel %vm160, %v162, 0.0
  %v165 = vmul.f32 %v163, %v163
  %v166 = vmul.f32 %v164, %v164
  %167 = vadd.xlane.f32.xlu0 %v165
  %v168 = vpop.xlane.xlu0 %167
  %169 = vadd.xlane.f32.xlu0 %v166
  %v170 = vpop.xlane.xlu0 %169
  %v171 = vmul.f32 %v168, 0.03125
  %v172 = vmul.f32 %v170, 0.03125
  %v173 = vadd.f32 %v171, 1e-05
  %v174 = vadd.f32 %v172, 1e-05
  %v175 = vrsqrt.pop %v173
  %v176 = vrsqrt.pop %v174
  %v177 = vmul.f32 %v163, %v175
  %v178 = vmul.f32 %v164, %v176
  %v180 = vlaneseq
  %v181 = vshrl.u32 %v180, 7
  %v182 = vsub.s32 0, %v181
  %v183 = vrot.slane %v150, %v182
  %v185 = vmul.f32 %v177, %v183
  %v186 = vmul.f32 %v178, %v183
  %v188 = vlaneseq
  %v189 = vshrl.u32 %v188, 7
  %v190 = vsub.s32 0, %v189
  %v191 = vrot.slane %v151, %v190
  %v193 = vadd.f32 %v185, %v191
  %v194 = vadd.f32 %v186, %v191
  %v195 = vpack.c.bf16 %v194, %v193
  %v197 = vunpack.c.l.b16 %v195
  %v198 = vunpack.c.h.b16 %v195
  %v199 = vpack.c.b16 %v197, %v197
  %v200 = vpack.c.b16 %v198, %v198
  %203 = vst [vmem:[%s6] sm:$0xf] %v199
  %204 = vst [vmem:[%s6 + $0x4] sm:$0xf] %v200
  // Predicated region
  $region26: #{transformer_forward.18} parent=0 // pred_check
    _
  $region27: #{transformer_forward.18} parent=0 // pred_check_branch
    %206 = sbr.rel (0) target = $region29
  $region28: #{transformer_forward.18} parent=0 // pred_region
    _
  $region29: #{transformer_forward.18} parent=0 // pred_fallthru
    _
  // Predicated region
  $region30: #{transformer_forward.18} parent=0 // pred_check
    _
  $region31: #{transformer_forward.18} parent=0 // pred_check_branch
    %208 = sbr.rel (0) target = $region33
  $region32: #{transformer_forward.18} parent=0 // pred_region
    _
  $region33: #{transformer_forward.18} parent=0 // pred_fallthru
    _

// kernel: transformer_forward.17
$region0: #{transformer_forward.17}
  #allocation0 [shape = 'u32[]', space=smem, size = 0x4, offset = 0x4, fixed_abs, tag = 'smem constant byte address 0x4 - core index']
  #allocation1 [shape = 'u32[144,128]{1,0:T(1,128)}', space=vmem, size = 0x12000, scoped, tag = 'internal scratch']
  %s0 = inlined_call_operand.vmem [shape: s32[2,1,8], index: 0, kind: input, shape index: {}]
  %s1 = inlined_call_operand.vmem [shape: bf16[2,8,128], index: 1, kind: input, shape index: {}]
  %s2 = inlined_call_operand.vmem [shape: bf16[128,384], index: 2, kind: input, shape index: {}]
  %s3 = inlined_call_operand.vmem [shape: f32[1,384], index: 3, kind: input, shape index: {}]
  %s4 = inlined_call_operand.vmem [shape: bf16[2,8,128], index: 4, kind: output, shape index: {}]
  %s5 = sld [smem:[#allocation0]]
  $region49: #{transformer_forward.17} parent=0
    _
  %s7 = ssub.s32 1, %s5
  %s8 = scalar_select 0, %s7, %s5
  loop: start=0, step=1, limit=4
  $region2: #{transformer_forward.17} parent=0 // loop_pre_header
    _
  $region3: #{transformer_forward.17} parent=0 // loop_header
    %s10 = sphi 0, %s14
    %p11 = scmp.ge.s32.totalorder %s10, 4
    %s20 = sphi 0, %s22
    %s23 = sphi 0, %s20
    %s24 = sphi 0, %s23
    %s40 = sphi 0, %s24
    %s46 = sphi 0, %s48
    %s49 = sphi 0, %s46
    %s50 = sphi 0, %s49
    %s66 = sphi 0, %s50
    %s70 = sphi 0, %s70
    %s72 = sphi 0, %s70
    %s73 = sphi 0, %s72
    %s87 = sphi 0, %s73
    %s91 = sphi 0, %s91
    %s93 = sphi 0, %s91
    %s94 = sphi 0, %s93
    %s108 = sphi 0, %s94
    %s114 = sphi 0, %s116
    %s117 = sphi 0, %s114
    %s118 = sphi 0, %s117
    %s134 = sphi 0, %s118
  $region4: #{transformer_forward.17} parent=0 // loop_header_branch
    %13 = sbr.rel (%p11) target = $region8
  $region5: #{transformer_forward.17} parent=0 // loop_body
    %s15 = ssub.s32 %s10, 1
    %s16 = ssub.s32 %s10, 2
    %s17 = sadd.s32 %s10, 1
    %s18 = ssub.s32 %s10, %s17
    %p19 = scmp.eq.s32.totalorder %s18, 0
    %s21 = sadd.s32 %s20, 1
    %s22 = scalar_select %p19, %s20, %s21
    %p25 = pneg %p19
    %p26 = scmp.eq.s32.totalorder %s10, 1
    %p27 = por %p25, %p26
    %p28 = scmp.ne.s32.totalorder %s20, %s23
    %p29 = scmp.eq.s32.totalorder %s10, 0
    %p30 = por %p28, %p29
    %p31 = scmp.ne.s32.totalorder %s20, %s23
    %p32 = scmp.eq.s32.totalorder %s15, 1
    %p33 = por %p31, %p32
    %p34 = scmp.ne.s32.totalorder %s23, %s24
    %p35 = scmp.eq.s32.totalorder %s15, 0
    %p36 = por %p34, %p35
    %p37 = scmp.ne.s32.totalorder %s23, %s24
    %p38 = scmp.eq.s32.totalorder %s16, 1
    %p39 = por %p37, %p38
    %p41 = scmp.ne.s32.totalorder %s24, %s40
    %p42 = scmp.eq.s32.totalorder %s16, 0
    %p43 = por %p41, %p42
    %s44 = ssub.s32 %s10, %s17
    %p45 = scmp.eq.s32.totalorder %s44, 0
    %s47 = sadd.s32 %s46, 1
    %s48 = scalar_select %p45, %s46, %s47
    %p51 = pneg %p45
    %p52 = scmp.eq.s32.totalorder %s10, 1
    %p53 = por %p51, %p52
    %p54 = scmp.ne.s32.totalorder %s46, %s49
    %p55 = scmp.eq.s32.totalorder %s10, 0
    %p56 = por %p54, %p55
    %p57 = scmp.ne.s32.totalorder %s46, %s49
    %p58 = scmp.eq.s32.totalorder %s15, 1
    %p59 = por %p57, %p58
    %p60 = scmp.ne.s32.totalorder %s49, %s50
    %p61 = scmp.eq.s32.totalorder %s15, 0
    %p62 = por %p60, %p61
    %p63 = scmp.ne.s32.totalorder %s49, %s50
    %p64 = scmp.eq.s32.totalorder %s16, 1
    %p65 = por %p63, %p64
    %p67 = scmp.ne.s32.totalorder %s50, %s66
    %p68 = scmp.eq.s32.totalorder %s16, 0
    %p69 = por %p67, %p68
    %s71 = sadd.s32 %s70, 1
    %p74 = scmp.eq.s32.totalorder %s10, 1
    %p75 = scmp.ne.s32.totalorder %s70, %s72
    %p76 = scmp.eq.s32.totalorder %s10, 0
    %p77 = por %p75, %p76
    %p78 = scmp.ne.s32.totalorder %s70, %s72
    %p79 = scmp.eq.s32.totalorder %s15, 1
    %p80 = por %p78, %p79
    %p81 = scmp.ne.s32.totalorder %s72, %s73
    %p82 = scmp.eq.s32.totalorder %s15, 0
    %p83 = por %p81, %p82
    %p84 = scmp.ne.s32.totalorder %s72, %s73
    %p85 = scmp.eq.s32.totalorder %s16, 1
    %p86 = por %p84, %p85
    %p88 = scmp.ne.s32.totalorder %s73, %s87
    %p89 = scmp.eq.s32.totalorder %s16, 0
    %p90 = por %p88, %p89
    %s92 = sadd.s32 %s91, 1
    %p95 = scmp.eq.s32.totalorder %s10, 1
    %p96 = scmp.ne.s32.totalorder %s91, %s93
    %p97 = scmp.eq.s32.totalorder %s10, 0
    %p98 = por %p96, %p97
    %p99 = scmp.ne.s32.totalorder %s91, %s93
    %p100 = scmp.eq.s32.totalorder %s15, 1
    %p101 = por %p99, %p100
    %p102 = scmp.ne.s32.totalorder %s93, %s94
    %p103 = scmp.eq.s32.totalorder %s15, 0
    %p104 = por %p102, %p103
    %p105 = scmp.ne.s32.totalorder %s93, %s94
    %p106 = scmp.eq.s32.totalorder %s16, 1
    %p107 = por %p105, %p106
    %p109 = scmp.ne.s32.totalorder %s94, %s108
    %p110 = scmp.eq.s32.totalorder %s16, 0
    %p111 = por %p109, %p110
    %s112 = ssub.s32 %s10, %s17
    %p113 = scmp.eq.s32.totalorder %s112, 0
    %s115 = sadd.s32 %s114, 1
    %s116 = scalar_select %p113, %s114, %s115
    %p119 = pneg %p113
    %p120 = scmp.eq.s32.totalorder %s10, 1
    %p121 = por %p119, %p120
    %p122 = scmp.ne.s32.totalorder %s114, %s117
    %p123 = scmp.eq.s32.totalorder %s10, 0
    %p124 = por %p122, %p123
    %p125 = scmp.ne.s32.totalorder %s114, %s117
    %p126 = scmp.eq.s32.totalorder %s15, 1
    %p127 = por %p125, %p126
    %p128 = scmp.ne.s32.totalorder %s117, %s118
    %p129 = scmp.eq.s32.totalorder %s15, 0
    %p130 = por %p128, %p129
    %p131 = scmp.ne.s32.totalorder %s117, %s118
    %p132 = scmp.eq.s32.totalorder %s16, 1
    %p133 = por %p131, %p132
    %p135 = scmp.ne.s32.totalorder %s118, %s134
    %p136 = scmp.eq.s32.totalorder %s16, 0
    %p137 = por %p135, %p136
    %p138 = scmp.le.s32.totalorder 1, %s10
    %p139 = scmp.lt.s32.totalorder %s10, 3
    %p140 = pnand %p138, %p139
    %p141 = pneg %p140
    // Predicated region
    $region9: #{transformer_forward.17} parent=5 // pred_check
      _
    $region10: #{transformer_forward.17} parent=5 // pred_check_branch
      %143 = sbr.rel (%p140) target = $region12
    $region11: #{transformer_forward.17} parent=5 // pred_region
      %s144 = ssub.s32 %s10, 1
      // Predicated region
      $region13: #{transformer_forward.17} parent=11 // pred_check
        %p145 = pneg %p83
      $region14: #{transformer_forward.17} parent=11 // pred_check_branch
        %147 = sbr.rel (%p145) target = $region16
      $region15: #{transformer_forward.17} parent=11 // pred_region
        _
      $region16: #{transformer_forward.17} parent=11 // pred_fallthru
        _
      // Predicated region
      $region17: #{transformer_forward.17} parent=11 // pred_check
        %p148 = pneg %p104
      $region18: #{transformer_forward.17} parent=11 // pred_check_branch
        %150 = sbr.rel (%p148) target = $region20
      $region19: #{transformer_forward.17} parent=11 // pred_region
        _
      $region20: #{transformer_forward.17} parent=11 // pred_fallthru
        _
    $region12: #{transformer_forward.17} parent=5 // pred_fallthru
      _
    %p151 = scmp.lt.s32.totalorder %s10, 2
    // Predicated region
    $region21: #{transformer_forward.17} parent=5 // pred_check
      %p152 = pneg %p151
    $region22: #{transformer_forward.17} parent=5 // pred_check_branch
      %154 = sbr.rel (%p152) target = $region24
    $region23: #{transformer_forward.17} parent=5 // pred_region
      // Predicated region
      $region25: #{transformer_forward.17} parent=23 // pred_check
        %p155 = pneg %p30
      $region26: #{transformer_forward.17} parent=23 // pred_check_branch
        %157 = sbr.rel (%p155) target = $region28
      $region27: #{transformer_forward.17} parent=23 // pred_region
        %p158 = scmp.lt.s32.totalorder %s10, 1
        %s159 = scalar_select %p158, %s10, 1
        %s160 = scalar_lea.vmem %s0, %s159
      $region28: #{transformer_forward.17} parent=23 // pred_fallthru
        _
      // Predicated region
      $region29: #{transformer_forward.17} parent=23 // pred_check
        %p161 = pneg %p56
      $region30: #{transformer_forward.17} parent=23 // pred_check_branch
        %163 = sbr.rel (%p161) target = $region32
      $region31: #{transformer_forward.17} parent=23 // pred_region
        %p164 = scmp.lt.s32.totalorder %s10, 1
        %s165 = scalar_select %p164, %s10, 1
        %s166 = smul.addr %s165, 4
        %s167 = scalar_lea.vmem %s1, %s166
      $region32: #{transformer_forward.17} parent=23 // pred_fallthru
        _
    $region24: #{transformer_forward.17} parent=5 // pred_fallthru
      _
    %p168 = scmp.le.s32.totalorder 1, %s10
    %p169 = scmp.lt.s32.totalorder %s10, 3
    %p170 = pnand %p168, %p169
    %p171 = pneg %p170
    // Predicated region
    $region33: #{transformer_forward.17} parent=5 // pred_check
      _
    $region34: #{transformer_forward.17} parent=5 // pred_check_branch
      %173 = sbr.rel (%p170) target = $region36
    $region35: #{transformer_forward.17} parent=5 // pred_region
      %s174 = ssub.s32 %s10, 1
      %p175 = scmp.lt.s32.totalorder %s15, 1
      %s176 = scalar_select %p175, %s15, 1
      %s177 = scalar_lea.vmem %s0, %s176
      %p178 = pneg %p36
      %p179 = pneg %p33
      %p180 = scmp.lt.s32.totalorder %s15, 1
      %s181 = scalar_select %p180, %s15, 1
      %s182 = smul.addr %s181, 4
      %s183 = scalar_lea.vmem %s1, %s182
      %p184 = pneg %p62
      %p185 = pneg %p59
      %p186 = pneg %p83
      %p187 = pneg %p80
      %p188 = pneg %p104
      %p189 = pneg %p101
      %p190 = pneg %p130
      %p191 = pneg %p127
      %p192 = scmp.lt.s32.totalorder %s15, 1
      %s193 = scalar_select %p192, %s15, 1
      %s194 = smul.addr %s193, 4
      %s195 = scalar_lea.vmem %s4, %s194
      %p196 = scmp.lt.s32.totalorder %s15, 1
      %s197 = scalar_select %p196, %s15, 1
      %s198 = scalar_lea.vmem %s0, %s197
      %p199 = scmp.lt.s32.totalorder %s15, 1
      %s200 = scalar_select %p199, %s15, 1
      %s201 = smul.addr %s200, 4
      %s202 = scalar_lea.vmem %s1, %s201
      %p203 = scmp.lt.s32.totalorder %s15, 1
      %s204 = scalar_select %p203, %s15, 1
      %s205 = smul.addr %s204, 4
      %s206 = scalar_lea.vmem %s4, %s205
      %v208 = vld [vmem:[%s202] sm:$0xf]
      %v209 = vld [vmem:[%s2] sm:$0xff]
      %v210 = vld [vmem:[%s2 + $0x8] sm:$0xf]
      %v211 = vld [vmem:[%s2 + $0xc] sm:$0xff]
      %v212 = vld [vmem:[%s2 + $0x14] sm:$0xf]
      %v213 = vld [vmem:[%s2 + $0x18] sm:$0xff]
      %v214 = vld [vmem:[%s2 + $0x20] sm:$0xf]
      %v215 = vld [vmem:[%s2 + $0x24] sm:$0xff]
      %v216 = vld [vmem:[%s2 + $0x2c] sm:$0xf]
      %v217 = vld [vmem:[%s2 + $0x30] sm:$0xff]
      %v218 = vld [vmem:[%s2 + $0x38] sm:$0xf]
      %v219 = vld [vmem:[%s2 + $0x3c] sm:$0xff]
      %v220 = vld [vmem:[%s2 + $0x44] sm:$0xf]
      %v221 = vld [vmem:[%s2 + $0x48] sm:$0xff]
      %v222 = vld [vmem:[%s2 + $0x50] sm:$0xf]
      %v223 = vld [vmem:[%s2 + $0x54] sm:$0xff]
      %v224 = vld [vmem:[%s2 + $0x5c] sm:$0xf]
      %v225 = vld [vmem:[%s2 + $0x60] sm:$0xff]
      %v226 = vld [vmem:[%s2 + $0x68] sm:$0xf]
      %v227 = vld [vmem:[%s2 + $0x6c] sm:$0xff]
      %v228 = vld [vmem:[%s2 + $0x74] sm:$0xf]
      %v229 = vld [vmem:[%s2 + $0x78] sm:$0xff]
      %v230 = vld [vmem:[%s2 + $0x80] sm:$0xf]
      %v231 = vld [vmem:[%s2 + $0x84] sm:$0xff]
      %v232 = vld [vmem:[%s2 + $0x8c] sm:$0xf]
      %v233 = vld [vmem:[%s2 + $0x90] sm:$0xff]
      %v234 = vld [vmem:[%s2 + $0x98] sm:$0xf]
      %v235 = vld [vmem:[%s2 + $0x9c] sm:$0xff]
      %v236 = vld [vmem:[%s2 + $0xa4] sm:$0xf]
      %v237 = vld [vmem:[%s2 + $0xa8] sm:$0xff]
      %v238 = vld [vmem:[%s2 + $0xb0] sm:$0xf]
      %v239 = vld [vmem:[%s2 + $0xb4] sm:$0xff]
      %v240 = vld [vmem:[%s2 + $0xbc] sm:$0xf]
      %v241 = vld [vmem:[%s3] sm:$0x7]
      %v243 = vlaneseq
      %v244 = vshrl.u32 %v243, 7
      %v245 = vsub.s32 0, %v244
      %v246 = vrot.slane %v241, %v245
      %v247 = vlaneseq
      %v248 = vshrl.u32 %v247, 7
      %v249 = vsub.s32 1, %v248
      %v250 = vrot.slane %v241, %v249
      %v251 = vlaneseq
      %v252 = vshrl.u32 %v251, 7
      %v253 = vsub.s32 2, %v252
      %v254 = vrot.slane %v241, %v253
      %v290 = vunpack.c.l.b16 %v209
      %v291 = vunpack.c.h.b16 %v209
      %v292 = vunpack.c.l.b16 %v210
      %v293 = vunpack.c.l.b16 %v211
      %v294 = vunpack.c.h.b16 %v211
      %v295 = vunpack.c.l.b16 %v212
      %v296 = vunpack.c.l.b16 %v213
      %v297 = vunpack.c.h.b16 %v213
      %v298 = vunpack.c.l.b16 %v214
      %v299 = vunpack.c.l.b16 %v215
      %v300 = vunpack.c.h.b16 %v215
      %v301 = vunpack.c.l.b16 %v216
      %v302 = vunpack.c.l.b16 %v217
      %v303 = vunpack.c.h.b16 %v217
      %v304 = vunpack.c.l.b16 %v218
      %v305 = vunpack.c.l.b16 %v219
      %v306 = vunpack.c.h.b16 %v219
      %v307 = vunpack.c.l.b16 %v220
      %v308 = vunpack.c.l.b16 %v221
      %v309 = vunpack.c.h.b16 %v221
      %v310 = vunpack.c.l.b16 %v222
      %v311 = vunpack.c.l.b16 %v223
      %v312 = vunpack.c.h.b16 %v223
      %v313 = vunpack.c.l.b16 %v224
      %v314 = vunpack.c.l.b16 %v225
      %v315 = vunpack.c.h.b16 %v225
      %v316 = vunpack.c.l.b16 %v226
      %v317 = vunpack.c.l.b16 %v227
      %v318 = vunpack.c.h.b16 %v227
      %v319 = vunpack.c.l.b16 %v228
      %v320 = vunpack.c.l.b16 %v229
      %v321 = vunpack.c.h.b16 %v229
      %v322 = vunpack.c.l.b16 %v230
      %v323 = vunpack.c.l.b16 %v231
      %v324 = vunpack.c.h.b16 %v231
      %v325 = vunpack.c.l.b16 %v232
      %v326 = vunpack.c.l.b16 %v233
      %v327 = vunpack.c.h.b16 %v233
      %v328 = vunpack.c.l.b16 %v234
      %v329 = vunpack.c.l.b16 %v235
      %v330 = vunpack.c.h.b16 %v235
      %v331 = vunpack.c.l.b16 %v236
      %v332 = vunpack.c.l.b16 %v237
      %v333 = vunpack.c.h.b16 %v237
      %v334 = vunpack.c.l.b16 %v238
      %v335 = vunpack.c.l.b16 %v239
      %v336 = vunpack.c.h.b16 %v239
      %v337 = vunpack.c.l.b16 %v240
      %v338 = vpack.c.b16 %v293, %v290
      %v339 = vpack.c.b16 %v294, %v291
      %v340 = vpack.c.b16 %v295, %v292
      %v341 = vpack.c.b16 %v299, %v296
      %v342 = vpack.c.b16 %v300, %v297
      %v343 = vpack.c.b16 %v301, %v298
      %v344 = vpack.c.b16 %v305, %v302
      %v345 = vpack.c.b16 %v306, %v303
      %v346 = vpack.c.b16 %v307, %v304
      %v347 = vpack.c.b16 %v311, %v308
      %v348 = vpack.c.b16 %v312, %v309
      %v349 = vpack.c.b16 %v313, %v310
      %v350 = vpack.c.b16 %v317, %v314
      %v351 = vpack.c.b16 %v318, %v315
      %v352 = vpack.c.b16 %v319, %v316
      %v353 = vpack.c.b16 %v323, %v320
      %v354 = vpack.c.b16 %v324, %v321
      %v355 = vpack.c.b16 %v325, %v322
      %v356 = vpack.c.b16 %v329, %v326
      %v357 = vpack.c.b16 %v330, %v327
      %v358 = vpack.c.b16 %v331, %v328
      %v359 = vpack.c.b16 %v335, %v332
      %v360 = vpack.c.b16 %v336, %v333
      %v361 = vpack.c.b16 %v337, %v334
      %386 = vmatprep.subr.bf16.mxu0 %v339
      %387 = vmatpush1.bf16.msra.mxu0 %v338
      %388 = vmatprep.subr.bf16.mxu0 %v342
      %389 = vmatpush1.bf16.msra.mxu0 %v341
      %390 = vmatprep.subr.bf16.mxu0 %v345
      %391 = vmatpush1.bf16.msra.mxu0 %v344
      %392 = vmatprep.subr.bf16.mxu0 %v348
      %393 = vmatpush1.bf16.msra.mxu0 %v347
      %394 = vmatprep.subr.bf16.mxu0 %v351
      %395 = vmatpush1.bf16.msra.mxu0 %v350
      %396 = vmatprep.subr.bf16.mxu0 %v354
      %397 = vmatpush1.bf16.msra.mxu0 %v353
      %398 = vmatprep.subr.bf16.mxu0 %v357
      %399 = vmatpush1.bf16.msra.mxu0 %v356
      %400 = vmatprep.subr.bf16.mxu0 %v360
      %401 = vmatpush1.bf16.msra.mxu0 %v359
      %402 = vmatprep.subr.bf16.mxu0 0
      %403 = vmatpush1.bf16.msra.mxu0 0
      %404 = vmatprep.subr.bf16.mxu0 0
      %405 = vmatpush1.bf16.msra.mxu0 0
      %406 = vmatprep.subr.bf16.mxu0 0
      %407 = vmatpush1.bf16.msra.mxu0 0
      %408 = vmatprep.subr.bf16.mxu0 0
      %409 = vmatpush1.bf16.msra.mxu0 0
      %410 = vmatprep.subr.bf16.mxu0 0
      %411 = vmatpush1.bf16.msra.mxu0 0
      %412 = vmatprep.subr.bf16.mxu0 0
      %413 = vmatpush1.bf16.msra.mxu0 0
      %414 = vmatprep.subr.bf16.mxu0 0
      %415 = vmatpush1.bf16.msra.mxu0 0
      %416 = vmatprep.subr.bf16.mxu0 0
      %417 = vmatpush1.bf16.msra.mxu0 0
      %418 = vmatprep.mubr.bf16.mxu0 0
      %419 = vmatmul.mubr.bf16.gmra.mrb[0].mxu0 %v208
      %v420 = vpop.f32.mrb[0].mxu0
      %v421 = vadd.f32 %v246, %v420
      %v422 = vpop.f32.mrb[0].mxu0
      %v423 = vadd.f32 %v250, %v422
      %v424 = vpop.f32.mrb[0].mxu0
      %v425 = vpop.f32.mrb[0].mxu0
      %426 = vdwg.mxu0
      %427 = vmatprep.subr.bf16.mxu0 0
      %428 = vmatpush1.bf16.msra.mxu0 %v340
      %429 = vmatprep.subr.bf16.mxu0 0
      %430 = vmatpush1.bf16.msra.mxu0 %v343
      %431 = vmatprep.subr.bf16.mxu0 0
      %432 = vmatpush1.bf16.msra.mxu0 %v346
      %433 = vmatprep.subr.bf16.mxu0 0
      %434 = vmatpush1.bf16.msra.mxu0 %v349
      %435 = vmatprep.subr.bf16.mxu0 0
      %436 = vmatpush1.bf16.msra.mxu0 %v352
      %437 = vmatprep.subr.bf16.mxu0 0
      %438 = vmatpush1.bf16.msra.mxu0 %v355
      %439 = vmatprep.subr.bf16.mxu0 0
      %440 = vmatpush1.bf16.msra.mxu0 %v358
      %441 = vmatprep.subr.bf16.mxu0 0
      %442 = vmatpush1.bf16.msra.mxu0 %v361
      %443 = vmatprep.subr.bf16.mxu0 0
      %444 = vmatpush1.bf16.msra.mxu0 0
      %445 = vmatprep.subr.bf16.mxu0 0
      %446 = vmatpush1.bf16.msra.mxu0 0
      %447 = vmatprep.subr.bf16.mxu0 0
      %448 = vmatpush1.bf16.msra.mxu0 0
      %449 = vmatprep.subr.bf16.mxu0 0
      %450 = vmatpush1.bf16.msra.mxu0 0
      %451 = vmatprep.subr.bf16.mxu0 0
      %452 = vmatpush1.bf16.msra.mxu0 0
      %453 = vmatprep.subr.bf16.mxu0 0
      %454 = vmatpush1.bf16.msra.mxu0 0
      %455 = vmatprep.subr.bf16.mxu0 0
      %456 = vmatpush1.bf16.msra.mxu0 0
      %457 = vmatprep.subr.bf16.mxu0 0
      %458 = vmatpush1.bf16.msra.mxu0 0
      %459 = vmatprep.mubr.bf16.mxu0 0
      %460 = vmatmul.mubr.bf16.gmra.mrb[0].mxu0 %v208
      %v461 = vpop.f32.mrb[0].mxu0
      %v462 = vadd.f32 %v254, %v461
      %v463 = vpop.f32.mrb[0].mxu0
      %v464 = vpop.f32.mrb[0].mxu0
      %v465 = vpop.f32.mrb[0].mxu0
      %466 = vdwg.mxu0
      %v467 = vpack.c.bf16 %v421, %v421
      %v468 = vpack.c.bf16 %v423, %v423
      %v469 = vpack.c.bf16 %v462, %v462
      %v470 = vld [vmem:[%s198] sm:$0x1]
      %vm471 = vcmp.ne.s32.totalorder %v470, 4294967295
      %472 = vst [vmem:[%s206] sm:$0xf] 0
      %vm473 = vcmask 64512
      %v475 = vsel %vm473, %v467, 0
      %v478 = vsel %vm473, %v468, 0
      %480 = vmatprep.subr.bf16.mxu0 0
      %481 = vmatpush1.bf16.xpose.msra.mxu0 %v478
      %482 = vmatprep.subr.bf16.mxu0 0
      %483 = vmatpush1.bf16.xpose.msra.mxu0 0
      %484 = vmatprep.subr.bf16.mxu0 0
      %485 = vmatpush1.bf16.xpose.msra.mxu0 0
      %486 = vmatprep.subr.bf16.mxu0 0
      %487 = vmatpush1.bf16.xpose.msra.mxu0 0
      %488 = vmatprep.subr.bf16.mxu0 0
      %489 = vmatpush1.bf16.xpose.msra.mxu0 0
      %490 = vmatprep.subr.bf16.mxu0 0
      %491 = vmatpush1.bf16.xpose.msra.mxu0 0
      %492 = vmatprep.subr.bf16.mxu0 0
      %493 = vmatpush1.bf16.xpose.msra.mxu0 0
      %494 = vmatprep.subr.bf16.mxu0 0
      %495 = vmatpush1.bf16.xpose.msra.mxu0 0
      %496 = vmatprep.subr.bf16.mxu0 0
      %497 = vmatpush1.bf16.xpose.msra.mxu0 0
      %498 = vmatprep.subr.bf16.mxu0 0
      %499 = vmatpush1.bf16.xpose.msra.mxu0 0
      %500 = vmatprep.subr.bf16.mxu0 0
      %501 = vmatpush1.bf16.xpose.msra.mxu0 0
      %502 = vmatprep.subr.bf16.mxu0 0
      %503 = vmatpush1.bf16.xpose.msra.mxu0 0
      %504 = vmatprep.subr.bf16.mxu0 0
      %505 = vmatpush1.bf16.xpose.msra.mxu0 0
      %506 = vmatprep.subr.bf16.mxu0 0
      %507 = vmatpush1.bf16.xpose.msra.mxu0 0
      %508 = vmatprep.subr.bf16.mxu0 0
      %509 = vmatpush1.bf16.xpose.msra.mxu0 0
      %510 = vmatprep.subr.bf16.mxu0 0
      %511 = vmatpush1.bf16.xpose.msra.mxu0 0
      %512 = vmatprep.mubr.bf16.mxu0 0
      %513 = vmatmul.mubr.bf16.gmra.mrb[0].mxu0 %v475
      %v514 = vpop.f32.mrb[0].mxu0
      %v515 = vadd.f32 0.0, %v514
      %v516 = vpop.f32.mrb[0].mxu0
      %v517 = vpop.f32.mrb[0].mxu0
      %v518 = vpop.f32.mrb[0].mxu0
      %519 = vdwg.mxu0
      %v520 = vmul.f32 %v515, 0.35355338
      %v521 = vsel %vm471, 1, 0
      %v522 = vlaneseq
      %v523 = vshrl.u32 %v522, 7
      %v524 = vsub.s32 0, %v523
      %v525 = vrot.slane %v521, %v524
      %vm526 = vcmp.eq.s32.totalorder %v525, 1
      %v527 = vsel %vm526, %v520, -1e+09
      %v528 = vsel %vm473, %v527, -inf
      %529 = vmax.xlane.f32.xlu0 %v528
      %v530 = vpop.xlane.xlu0 %529
      %v531 = vsub.f32 %v527, %v530
      %v532 = vmul.f32 %v531, 1.442695
      %v533 = vpow.pop %v532
      %v534 = vsel %vm473, %v533, 0.0
      %535 = vadd.xlane.f32.xlu0 %v534
      %v536 = vpop.xlane.xlu0 %535
      %v537 = vrcp.pop %v536
      %v538 = vmul.f32 %v533, %v537
      %v539 = vpack.c.bf16 %v538, %v538
      %v541 = vsel %vm473, %v539, 0
      %vm543 = vcmask 1043456
      %v545 = vsel %vm543, %v469, 0
      %547 = vmatprep.subr.bf16.mxu0 0
      %548 = vmatpush1.bf16.msra.mxu0 %v545
      %549 = vmatprep.subr.bf16.mxu0 0
      %550 = vmatpush1.bf16.msra.mxu0 0
      %551 = vmatprep.subr.bf16.mxu0 0
      %552 = vmatpush1.bf16.msra.mxu0 0
      %553 = vmatprep.subr.bf16.mxu0 0
      %554 = vmatpush1.bf16.msra.mxu0 0
      %555 = vmatprep.subr.bf16.mxu0 0
      %556 = vmatpush1.bf16.msra.mxu0 0
      %557 = vmatprep.subr.bf16.mxu0 0
      %558 = vmatpush1.bf16.msra.mxu0 0
      %559 = vmatprep.subr.bf16.mxu0 0
      %560 = vmatpush1.bf16.msra.mxu0 0
      %561 = vmatprep.subr.bf16.mxu0 0
      %562 = vmatpush1.bf16.msra.mxu0 0
      %563 = vmatprep.subr.bf16.mxu0 0
      %564 = vmatpush1.bf16.msra.mxu0 0
      %565 = vmatprep.subr.bf16.mxu0 0
      %566 = vmatpush1.bf16.msra.mxu0 0
      %567 = vmatprep.subr.bf16.mxu0 0
      %568 = vmatpush1.bf16.msra.mxu0 0
      %569 = vmatprep.subr.bf16.mxu0 0
      %570 = vmatpush1.bf16.msra.mxu0 0
      %571 = vmatprep.subr.bf16.mxu0 0
      %572 = vmatpush1.bf16.msra.mxu0 0
      %573 = vmatprep.subr.bf16.mxu0 0
      %574 = vmatpush1.bf16.msra.mxu0 0
      %575 = vmatprep.subr.bf16.mxu0 0
      %576 = vmatpush1.bf16.msra.mxu0 0
      %577 = vmatprep.subr.bf16.mxu0 0
      %578 = vmatpush1.bf16.msra.mxu0 0
      %579 = vmatprep.mubr.bf16.mxu0 0
      %580 = vmatmul.mubr.bf16.gmra.mrb[0].mxu0 %v541
      %v581 = vpop.f32.mrb[0].mxu0
      %v582 = vadd.f32 0.0, %v581
      %v583 = vpop.f32.mrb[0].mxu0
      %v584 = vpop.f32.mrb[0].mxu0
      %v585 = vpop.f32.mrb[0].mxu0
      %586 = vdwg.mxu0
      %v587 = vpack.c.bf16 %v582, %v582
      %vm588 = vcmask 60416
      %589 = vst.msk [vmem:[%s206] sm:$0xf] %vm588, %v587
      %591 = vrot.lane.b32.xlu0 %v467, 120
      %v592 = vpop.permute.xlu0 %591
      %594 = vrot.lane.b32.xlu0 %v468, 120
      %v595 = vpop.permute.xlu0 %594
      %v597 = vsel %vm473, %v592, 0
      %v600 = vsel %vm473, %v595, 0
      %602 = vmatprep.subr.bf16.mxu0 0
      %603 = vmatpush1.bf16.xpose.msra.mxu0 %v600
      %604 = vmatprep.subr.bf16.mxu0 0
      %605 = vmatpush1.bf16.xpose.msra.mxu0 0
      %606 = vmatprep.subr.bf16.mxu0 0
      %607 = vmatpush1.bf16.xpose.msra.mxu0 0
      %608 = vmatprep.subr.bf16.mxu0 0
      %609 = vmatpush1.bf16.xpose.msra.mxu0 0
      %610 = vmatprep.subr.bf16.mxu0 0
      %611 = vmatpush1.bf16.xpose.msra.mxu0 0
      %612 = vmatprep.subr.bf16.mxu0 0
      %613 = vmatpush1.bf16.xpose.msra.mxu0 0
      %614 = vmatprep.subr.bf16.mxu0 0
      %615 = vmatpush1.bf16.xpose.msra.mxu0 0
      %616 = vmatprep.subr.bf16.mxu0 0
      %617 = vmatpush1.bf16.xpose.msra.mxu0 0
      %618 = vmatprep.subr.bf16.mxu0 0
      %619 = vmatpush1.bf16.xpose.msra.mxu0 0
      %620 = vmatprep.subr.bf16.mxu0 0
      %621 = vmatpush1.bf16.xpose.msra.mxu0 0
      %622 = vmatprep.subr.bf16.mxu0 0
      %623 = vmatpush1.bf16.xpose.msra.mxu0 0
      %624 = vmatprep.subr.bf16.mxu0 0
      %625 = vmatpush1.bf16.xpose.msra.mxu0 0
      %626 = vmatprep.subr.bf16.mxu0 0
      %627 = vmatpush1.bf16.xpose.msra.mxu0 0
      %628 = vmatprep.subr.bf16.mxu0 0
      %629 = vmatpush1.bf16.xpose.msra.mxu0 0
      %630 = vmatprep.subr.bf16.mxu0 0
      %631 = vmatpush1.bf16.xpose.msra.mxu0 0
      %632 = vmatprep.subr.bf16.mxu0 0
      %633 = vmatpush1.bf16.xpose.msra.mxu0 0
      %634 = vmatprep.mubr.bf16.mxu0 0
      %635 = vmatmul.mubr.bf16.gmra.mrb[0].mxu0 %v597
      %v636 = vpop.f32.mrb[0].mxu0
      %v637 = vadd.f32 0.0, %v636
      %v638 = vpop.f32.mrb[0].mxu0
      %v639 = vpop.f32.mrb[0].mxu0
      %v640 = vpop.f32.mrb[0].mxu0
      %641 = vdwg.mxu0
      %v642 = vmul.f32 %v637, 0.35355338
      %v643 = vsel %vm526, %v642, -1e+09
      %v644 = vsel %vm473, %v643, -inf
      %645 = vmax.xlane.f32.xlu0 %v644
      %v646 = vpop.xlane.xlu0 %645
      %v647 = vsub.f32 %v643, %v646
      %v648 = vmul.f32 %v647, 1.442695
      %v649 = vpow.pop %v648
      %v650 = vsel %vm473, %v649, 0.0
      %651 = vadd.xlane.f32.xlu0 %v650
      %v652 = vpop.xlane.xlu0 %651
      %v653 = vrcp.pop %v652
      %v654 = vmul.f32 %v649, %v653
      %v655 = vpack.c.bf16 %v654, %v654
      %657 = vrot.lane.b32.xlu0 %v469, 120
      %v658 = vpop.permute.xlu0 %657
      %v660 = vsel %vm473, %v655, 0
      %v663 = vsel %vm543, %v658, 0
      %665 = vmatprep.subr.bf16.mxu0 0
      %666 = vmatpush1.bf16.msra.mxu0 %v663
      %667 = vmatprep.subr.bf16.mxu0 0
      %668 = vmatpush1.bf16.msra.mxu0 0
      %669 = vmatprep.subr.bf16.mxu0 0
      %670 = vmatpush1.bf16.msra.mxu0 0
      %671 = vmatprep.subr.bf16.mxu0 0
      %672 = vmatpush1.bf16.msra.mxu0 0
      %673 = vmatprep.subr.bf16.mxu0 0
      %674 = vmatpush1.bf16.msra.mxu0 0
      %675 = vmatprep.subr.bf16.mxu0 0
      %676 = vmatpush1.bf16.msra.mxu0 0
      %677 = vmatprep.subr.bf16.mxu0 0
      %678 = vmatpush1.bf16.msra.mxu0 0
      %679 = vmatprep.subr.bf16.mxu0 0
      %680 = vmatpush1.bf16.msra.mxu0 0
      %681 = vmatprep.subr.bf16.mxu0 0
      %682 = vmatpush1.bf16.msra.mxu0 0
      %683 = vmatprep.subr.bf16.mxu0 0
      %684 = vmatpush1.bf16.msra.mxu0 0
      %685 = vmatprep.subr.bf16.mxu0 0
      %686 = vmatpush1.bf16.msra.mxu0 0
      %687 = vmatprep.subr.bf16.mxu0 0
      %688 = vmatpush1.bf16.msra.mxu0 0
      %689 = vmatprep.subr.bf16.mxu0 0
      %690 = vmatpush1.bf16.msra.mxu0 0
      %691 = vmatprep.subr.bf16.mxu0 0
      %692 = vmatpush1.bf16.msra.mxu0 0
      %693 = vmatprep.subr.bf16.mxu0 0
      %694 = vmatpush1.bf16.msra.mxu0 0
      %695 = vmatprep.subr.bf16.mxu0 0
      %696 = vmatpush1.bf16.msra.mxu0 0
      %697 = vmatprep.mubr.bf16.mxu0 0
      %698 = vmatmul.mubr.bf16.gmra.mrb[0].mxu0 %v660
      %v699 = vpop.f32.mrb[0].mxu0
      %v700 = vadd.f32 0.0, %v699
      %v701 = vpop.f32.mrb[0].mxu0
      %v702 = vpop.f32.mrb[0].mxu0
      %v703 = vpop.f32.mrb[0].mxu0
      %704 = vdwg.mxu0
      %v705 = vpack.c.bf16 %v700, %v700
      %v707 = vunpack.c.l.b16 %v705
      %v708 = vpack.c.b16 %v707, %v707
      %709 = vrot.lane.b32.xlu0 %v708, 8
      %v710 = vpop.permute.xlu0 %709
      %vm712 = vcmask 126016
      %713 = vst.msk [vmem:[%s206] sm:$0xf] %vm712, %v710
      %714 = vrot.lane.b32.xlu0 %v467, 112
      %v715 = vpop.permute.xlu0 %714
      %716 = vrot.lane.b32.xlu0 %v468, 112
      %v717 = vpop.permute.xlu0 %716
      %v719 = vsel %vm473, %v715, 0
      %v722 = vsel %vm473, %v717, 0
      %724 = vmatprep.subr.bf16.mxu0 0
      %725 = vmatpush1.bf16.xpose.msra.mxu0 %v722
      %726 = vmatprep.subr.bf16.mxu0 0
      %727 = vmatpush1.bf16.xpose.msra.mxu0 0
      %728 = vmatprep.subr.bf16.mxu0 0
      %729 = vmatpush1.bf16.xpose.msra.mxu0 0
      %730 = vmatprep.subr.bf16.mxu0 0
      %731 = vmatpush1.bf16.xpose.msra.mxu0 0
      %732 = vmatprep.subr.bf16.mxu0 0
      %733 = vmatpush1.bf16.xpose.msra.mxu0 0
      %734 = vmatprep.subr.bf16.mxu0 0
      %735 = vmatpush1.bf16.xpose.msra.mxu0 0
      %736 = vmatprep.subr.bf16.mxu0 0
      %737 = vmatpush1.bf16.xpose.msra.mxu0 0
      %738 = vmatprep.subr.bf16.mxu0 0
      %739 = vmatpush1.bf16.xpose.msra.mxu0 0
      %740 = vmatprep.subr.bf16.mxu0 0
      %741 = vmatpush1.bf16.xpose.msra.mxu0 0
      %742 = vmatprep.subr.bf16.mxu0 0
      %743 = vmatpush1.bf16.xpose.msra.mxu0 0
      %744 = vmatprep.subr.bf16.mxu0 0
      %745 = vmatpush1.bf16.xpose.msra.mxu0 0
      %746 = vmatprep.subr.bf16.mxu0 0
      %747 = vmatpush1.bf16.xpose.msra.mxu0 0
      %748 = vmatprep.subr.bf16.mxu0 0
      %749 = vmatpush1.bf16.xpose.msra.mxu0 0
      %750 = vmatprep.subr.bf16.mxu0 0
      %751 = vmatpush1.bf16.xpose.msra.mxu0 0
      %752 = vmatprep.subr.bf16.mxu0 0
      %753 = vmatpush1.bf16.xpose.msra.mxu0 0
      %754 = vmatprep.subr.bf16.mxu0 0
      %755 = vmatpush1.bf16.xpose.msra.mxu0 0
      %756 = vmatprep.mubr.bf16.mxu0 0
      %757 = vmatmul.mubr.bf16.gmra.mrb[0].mxu0 %v719
      %v758 = vpop.f32.mrb[0].mxu0
      %v759 = vadd.f32 0.0, %v758
      %v760 = vpop.f32.mrb[0].mxu0
      %v761 = vpop.f32.mrb[0].mxu0
      %v762 = vpop.f32.mrb[0].mxu0
      %763 = vdwg.mxu0
      %v764 = vmul.f32 %v759, 0.35355338
      %v765 = vsel %vm526, %v764, -1e+09
      %v766 = vsel %vm473, %v765, -inf
      %767 = vmax.xlane.f32.xlu0 %v766
      %v768 = vpop.xlane.xlu0 %767
      %v769 = vsub.f32 %v765, %v768
      %v770 = vmul.f32 %v769, 1.442695
      %v771 = vpow.pop %v770
      %v772 = vsel %vm473, %v771, 0.0
      %773 = vadd.xlane.f32.xlu0 %v772
      %v774 = vpop.xlane.xlu0 %773
      %v775 = vrcp.pop %v774
      %v776 = vmul.f32 %v771, %v775
      %v777 = vpack.c.bf16 %v776, %v776
      %778 = vrot.lane.b32.xlu0 %v469, 112
      %v779 = vpop.permute.xlu0 %778
      %v781 = vsel %vm473, %v777, 0
      %v784 = vsel %vm543, %v779, 0
      %786 = vmatprep.subr.bf16.mxu0 0
      %787 = vmatpush1.bf16.msra.mxu0 %v784
      %788 = vmatprep.subr.bf16.mxu0 0
      %789 = vmatpush1.bf16.msra.mxu0 0
      %790 = vmatprep.subr.bf16.mxu0 0
      %791 = vmatpush1.bf16.msra.mxu0 0
      %792 = vmatprep.subr.bf16.mxu0 0
      %793 = vmatpush1.bf16.msra.mxu0 0
      %794 = vmatprep.subr.bf16.mxu0 0
      %795 = vmatpush1.bf16.msra.mxu0 0
      %796 = vmatprep.subr.bf16.mxu0 0
      %797 = vmatpush1.bf16.msra.mxu0 0
      %798 = vmatprep.subr.bf16.mxu0 0
      %799 = vmatpush1.bf16.msra.mxu0 0
      %800 = vmatprep.subr.bf16.mxu0 0
      %801 = vmatpush1.bf16.msra.mxu0 0
      %802 = vmatprep.subr.bf16.mxu0 0
      %803 = vmatpush1.bf16.msra.mxu0 0
      %804 = vmatprep.subr.bf16.mxu0 0
      %805 = vmatpush1.bf16.msra.mxu0 0
      %806 = vmatprep.subr.bf16.mxu0 0
      %807 = vmatpush1.bf16.msra.mxu0 0
      %808 = vmatprep.subr.bf16.mxu0 0
      %809 = vmatpush1.bf16.msra.mxu0 0
      %810 = vmatprep.subr.bf16.mxu0 0
      %811 = vmatpush1.bf16.msra.mxu0 0
      %812 = vmatprep.subr.bf16.mxu0 0
      %813 = vmatpush1.bf16.msra.mxu0 0
      %814 = vmatprep.subr.bf16.mxu0 0
      %815 = vmatpush1.bf16.msra.mxu0 0
      %816 = vmatprep.subr.bf16.mxu0 0
      %817 = vmatpush1.bf16.msra.mxu0 0
      %818 = vmatprep.mubr.bf16.mxu0 0
      %819 = vmatmul.mubr.bf16.gmra.mrb[0].mxu0 %v781
      %v820 = vpop.f32.mrb[0].mxu0
      %v821 = vadd.f32 0.0, %v820
      %v822 = vpop.f32.mrb[0].mxu0
      %v823 = vpop.f32.mrb[0].mxu0
      %v824 = vpop.f32.mrb[0].mxu0
      %825 = vdwg.mxu0
      %v826 = vpack.c.bf16 %v821, %v821
      %v828 = vunpack.c.l.b16 %v826
      %v829 = vpack.c.b16 %v828, %v828
      %830 = vrot.lane.b32.xlu0 %v829, 16
      %v831 = vpop.permute.xlu0 %830
      %vm833 = vcmask 191616
      %834 = vst.msk [vmem:[%s206] sm:$0xf] %vm833, %v831
      %835 = vrot.lane.b32.xlu0 %v467, 104
      %v836 = vpop.permute.xlu0 %835
      %837 = vrot.lane.b32.xlu0 %v468, 104
      %v838 = vpop.permute.xlu0 %837
      %v840 = vsel %vm473, %v836, 0
      %v843 = vsel %vm473, %v838, 0
      %845 = vmatprep.subr.bf16.mxu0 0
      %846 = vmatpush1.bf16.xpose.msra.mxu0 %v843
      %847 = vmatprep.subr.bf16.mxu0 0
      %848 = vmatpush1.bf16.xpose.msra.mxu0 0
      %849 = vmatprep.subr.bf16.mxu0 0
      %850 = vmatpush1.bf16.xpose.msra.mxu0 0
      %851 = vmatprep.subr.bf16.mxu0 0
      %852 = vmatpush1.bf16.xpose.msra.mxu0 0
      %853 = vmatprep.subr.bf16.mxu0 0
      %854 = vmatpush1.bf16.xpose.msra.mxu0 0
      %855 = vmatprep.subr.bf16.mxu0 0
      %856 = vmatpush1.bf16.xpose.msra.mxu0 0
      %857 = vmatprep.subr.bf16.mxu0 0
      %858 = vmatpush1.bf16.xpose.msra.mxu0 0
      %859 = vmatprep.subr.bf16.mxu0 0
      %860 = vmatpush1.bf16.xpose.msra.mxu0 0
      %861 = vmatprep.subr.bf16.mxu0 0
      %862 = vmatpush1.bf16.xpose.msra.mxu0 0
      %863 = vmatprep.subr.bf16.mxu0 0
      %864 = vmatpush1.bf16.xpose.msra.mxu0 0
      %865 = vmatprep.subr.bf16.mxu0 0
      %866 = vmatpush1.bf16.xpose.msra.mxu0 0
      %867 = vmatprep.subr.bf16.mxu0 0
      %868 = vmatpush1.bf16.xpose.msra.mxu0 0
      %869 = vmatprep.subr.bf16.mxu0 0
      %870 = vmatpush1.bf16.xpose.msra.mxu0 0
      %871 = vmatprep.subr.bf16.mxu0 0
      %872 = vmatpush1.bf16.xpose.msra.mxu0 0
      %873 = vmatprep.subr.bf16.mxu0 0
      %874 = vmatpush1.bf16.xpose.msra.mxu0 0
      %875 = vmatprep.subr.bf16.mxu0 0
      %876 = vmatpush1.bf16.xpose.msra.mxu0 0
      %877 = vmatprep.mubr.bf16.mxu0 0
      %878 = vmatmul.mubr.bf16.gmra.mrb[0].mxu0 %v840
      %v879 = vpop.f32.mrb[0].mxu0
      %v880 = vadd.f32 0.0, %v879
      %v881 = vpop.f32.mrb[0].mxu0
      %v882 = vpop.f32.mrb[0].mxu0
      %v883 = vpop.f32.mrb[0].mxu0
      %884 = vdwg.mxu0
      %v885 = vmul.f32 %v880, 0.35355338
      %v886 = vsel %vm526, %v885, -1e+09
      %v887 = vsel %vm473, %v886, -inf
      %888 = vmax.xlane.f32.xlu0 %v887
      %v889 = vpop.xlane.xlu0 %888
      %v890 = vsub.f32 %v886, %v889
      %v891 = vmul.f32 %v890, 1.442695
      %v892 = vpow.pop %v891
      %v893 = vsel %vm473, %v892, 0.0
      %894 = vadd.xlane.f32.xlu0 %v893
      %v895 = vpop.xlane.xlu0 %894
      %v896 = vrcp.pop %v895
      %v897 = vmul.f32 %v892, %v896
      %v898 = vpack.c.bf16 %v897, %v897
      %899 = vrot.lane.b32.xlu0 %v469, 104
      %v900 = vpop.permute.xlu0 %899
      %v902 = vsel %vm473, %v898, 0
      %v905 = vsel %vm543, %v900, 0
      %907 = vmatprep.subr.bf16.mxu0 0
      %908 = vmatpush1.bf16.msra.mxu0 %v905
      %909 = vmatprep.subr.bf16.mxu0 0
      %910 = vmatpush1.bf16.msra.mxu0 0
      %911 = vmatprep.subr.bf16.mxu0 0
      %912 = vmatpush1.bf16.msra.mxu0 0
      %913 = vmatprep.subr.bf16.mxu0 0
      %914 = vmatpush1.bf16.msra.mxu0 0
      %915 = vmatprep.subr.bf16.mxu0 0
      %916 = vmatpush1.bf16.msra.mxu0 0
      %917 = vmatprep.subr.bf16.mxu0 0
      %918 = vmatpush1.bf16.msra.mxu0 0
      %919 = vmatprep.subr.bf16.mxu0 0
      %920 = vmatpush1.bf16.msra.mxu0 0
      %921 = vmatprep.subr.bf16.mxu0 0
      %922 = vmatpush1.bf16.msra.mxu0 0
      %923 = vmatprep.subr.bf16.mxu0 0
      %924 = vmatpush1.bf16.msra.mxu0 0
      %925 = vmatprep.subr.bf16.mxu0 0
      %926 = vmatpush1.bf16.msra.mxu0 0
      %927 = vmatprep.subr.bf16.mxu0 0
      %928 = vmatpush1.bf16.msra.mxu0 0
      %929 = vmatprep.subr.bf16.mxu0 0
      %930 = vmatpush1.bf16.msra.mxu0 0
      %931 = vmatprep.subr.bf16.mxu0 0
      %932 = vmatpush1.bf16.msra.mxu0 0
      %933 = vmatprep.subr.bf16.mxu0 0
      %934 = vmatpush1.bf16.msra.mxu0 0
      %935 = vmatprep.subr.bf16.mxu0 0
      %936 = vmatpush1.bf16.msra.mxu0 0
      %937 = vmatprep.subr.bf16.mxu0 0
      %938 = vmatpush1.bf16.msra.mxu0 0
      %939 = vmatprep.mubr.bf16.mxu0 0
      %940 = vmatmul.mubr.bf16.gmra.mrb[0].mxu0 %v902
      %v941 = vpop.f32.mrb[0].mxu0
      %v942 = vadd.f32 0.0, %v941
      %v943 = vpop.f32.mrb[0].mxu0
      %v944 = vpop.f32.mrb[0].mxu0
      %v945 = vpop.f32.mrb[0].mxu0
      %946 = vdwg.mxu0
      %v947 = vpack.c.bf16 %v942, %v942
      %v949 = vunpack.c.l.b16 %v947
      %v950 = vpack.c.b16 %v949, %v949
      %951 = vrot.lane.b32.xlu0 %v950, 24
      %v952 = vpop.permute.xlu0 %951
      %vm954 = vcmask 257216
      %955 = vst.msk [vmem:[%s206] sm:$0xf] %vm954, %v952
      %p956 = scmp.lt.s32.totalorder %s15, 1
      %s957 = scalar_select %p956, %s15, 1
      %s958 = smul.addr %s957, 4
      %s959 = scalar_lea.vmem %s4, %s958
      // Predicated region
      $region37: #{transformer_forward.17} parent=35 // pred_check
        %p960 = pneg %p127
      $region38: #{transformer_forward.17} parent=35 // pred_check_branch
        %962 = sbr.rel (%p960) target = $region40
      $region39: #{transformer_forward.17} parent=35 // pred_region
        _
      $region40: #{transformer_forward.17} parent=35 // pred_fallthru
        _
    $region36: #{transformer_forward.17} parent=5 // pred_fallthru
      _
    %p963 = scmp.le.s32.totalorder 2, %s10
    // Predicated region
    $region41: #{transformer_forward.17} parent=5 // pred_check
      %p964 = pneg %p963
    $region42: #{transformer_forward.17} parent=5 // pred_check_branch
      %966 = sbr.rel (%p964) target = $region44
    $region43: #{transformer_forward.17} parent=5 // pred_region
      %s967 = ssub.s32 %s10, 2
      // Predicated region
      $region45: #{transformer_forward.17} parent=43 // pred_check
        %p968 = pneg %p133
      $region46: #{transformer_forward.17} parent=43 // pred_check_branch
        %970 = sbr.rel (%p968) target = $region48
      $region47: #{transformer_forward.17} parent=43 // pred_region
        %p971 = scmp.lt.s32.totalorder %s16, 1
        %s972 = scalar_select %p971, %s16, 1
        %s973 = smul.addr %s972, 4
        %s974 = scalar_lea.vmem %s4, %s973
      $region48: #{transformer_forward.17} parent=43 // pred_fallthru
        _
    $region44: #{transformer_forward.17} parent=5 // pred_fallthru
      _
  $region6: #{transformer_forward.17} parent=0 // loop_footer
    %s14 = sadd.s32 1, %s10
  $region7: #{transformer_forward.17} parent=0 // loop_footer_branch
    %9 = sbr.rel target = $region3
  $region8: #{transformer_forward.17} parent=0 // loop_exit
    _

// kernel: transformer_forward.23
$region0: #{transformer_forward.23}
  #allocation0 [shape = 'u32[]', space=smem, size = 0x4, offset = 0x4, fixed_abs, tag = 'smem constant byte address 0x4 - core index']
  #allocation1 [shape = 'u32[144,128]{1,0:T(1,128)}', space=vmem, size = 0x12000, scoped, tag = 'internal scratch']
  %s0 = inlined_call_operand.vmem [shape: s32[2,8,1], index: 0, kind: input, shape index: {}]
  %s1 = inlined_call_operand.vmem [shape: bf16[2,8,128], index: 1, kind: input, shape index: {}]
  %s2 = inlined_call_operand.vmem [shape: bf16[128,384], index: 2, kind: input, shape index: {}]
  %s3 = inlined_call_operand.vmem [shape: f32[1,384], index: 3, kind: input, shape index: {}]
  %s4 = inlined_call_operand.vmem [shape: bf16[2,8,128], index: 4, kind: output, shape index: {}]
  %s5 = sld [smem:[#allocation0]]
  $region49: #{transformer_forward.23} parent=0
    _
  %s7 = ssub.s32 1, %s5
  %s8 = scalar_select 0, %s7, %s5
  loop: start=0, step=1, limit=4
  $region2: #{transformer_forward.23} parent=0 // loop_pre_header
    _
  $region3: #{transformer_forward.23} parent=0 // loop_header
    %s10 = sphi 0, %s14
    %p11 = scmp.ge.s32.totalorder %s10, 4
    %s20 = sphi 0, %s22
    %s23 = sphi 0, %s20
    %s24 = sphi 0, %s23
    %s40 = sphi 0, %s24
    %s46 = sphi 0, %s48
    %s49 = sphi 0, %s46
    %s50 = sphi 0, %s49
    %s66 = sphi 0, %s50
    %s70 = sphi 0, %s70
    %s72 = sphi 0, %s70
    %s73 = sphi 0, %s72
    %s87 = sphi 0, %s73
    %s91 = sphi 0, %s91
    %s93 = sphi 0, %s91
    %s94 = sphi 0, %s93
    %s108 = sphi 0, %s94
    %s114 = sphi 0, %s116
    %s117 = sphi 0, %s114
    %s118 = sphi 0, %s117
    %s134 = sphi 0, %s118
  $region4: #{transformer_forward.23} parent=0 // loop_header_branch
    %13 = sbr.rel (%p11) target = $region8
  $region5: #{transformer_forward.23} parent=0 // loop_body
    %s15 = ssub.s32 %s10, 1
    %s16 = ssub.s32 %s10, 2
    %s17 = sadd.s32 %s10, 1
    %s18 = ssub.s32 %s10, %s17
    %p19 = scmp.eq.s32.totalorder %s18, 0
    %s21 = sadd.s32 %s20, 1
    %s22 = scalar_select %p19, %s20, %s21
    %p25 = pneg %p19
    %p26 = scmp.eq.s32.totalorder %s10, 1
    %p27 = por %p25, %p26
    %p28 = scmp.ne.s32.totalorder %s20, %s23
    %p29 = scmp.eq.s32.totalorder %s10, 0
    %p30 = por %p28, %p29
    %p31 = scmp.ne.s32.totalorder %s20, %s23
    %p32 = scmp.eq.s32.totalorder %s15, 1
    %p33 = por %p31, %p32
    %p34 = scmp.ne.s32.totalorder %s23, %s24
    %p35 = scmp.eq.s32.totalorder %s15, 0
    %p36 = por %p34, %p35
    %p37 = scmp.ne.s32.totalorder %s23, %s24
    %p38 = scmp.eq.s32.totalorder %s16, 1
    %p39 = por %p37, %p38
    %p41 = scmp.ne.s32.totalorder %s24, %s40
    %p42 = scmp.eq.s32.totalorder %s16, 0
    %p43 = por %p41, %p42
    %s44 = ssub.s32 %s10, %s17
    %p45 = scmp.eq.s32.totalorder %s44, 0
    %s47 = sadd.s32 %s46, 1
    %s48 = scalar_select %p45, %s46, %s47
    %p51 = pneg %p45
    %p52 = scmp.eq.s32.totalorder %s10, 1
    %p53 = por %p51, %p52
    %p54 = scmp.ne.s32.totalorder %s46, %s49
    %p55 = scmp.eq.s32.totalorder %s10, 0
    %p56 = por %p54, %p55
    %p57 = scmp.ne.s32.totalorder %s46, %s49
    %p58 = scmp.eq.s32.totalorder %s15, 1
    %p59 = por %p57, %p58
    %p60 = scmp.ne.s32.totalorder %s49, %s50
    %p61 = scmp.eq.s32.totalorder %s15, 0
    %p62 = por %p60, %p61
    %p63 = scmp.ne.s32.totalorder %s49, %s50
    %p64 = scmp.eq.s32.totalorder %s16, 1
    %p65 = por %p63, %p64
    %p67 = scmp.ne.s32.totalorder %s50, %s66
    %p68 = scmp.eq.s32.totalorder %s16, 0
    %p69 = por %p67, %p68
    %s71 = sadd.s32 %s70, 1
    %p74 = scmp.eq.s32.totalorder %s10, 1
    %p75 = scmp.ne.s32.totalorder %s70, %s72
    %p76 = scmp.eq.s32.totalorder %s10, 0
    %p77 = por %p75, %p76
    %p78 = scmp.ne.s32.totalorder %s70, %s72
    %p79 = scmp.eq.s32.totalorder %s15, 1
    %p80 = por %p78, %p79
    %p81 = scmp.ne.s32.totalorder %s72, %s73
    %p82 = scmp.eq.s32.totalorder %s15, 0
    %p83 = por %p81, %p82
    %p84 = scmp.ne.s32.totalorder %s72, %s73
    %p85 = scmp.eq.s32.totalorder %s16, 1
    %p86 = por %p84, %p85
    %p88 = scmp.ne.s32.totalorder %s73, %s87
    %p89 = scmp.eq.s32.totalorder %s16, 0
    %p90 = por %p88, %p89
    %s92 = sadd.s32 %s91, 1
    %p95 = scmp.eq.s32.totalorder %s10, 1
    %p96 = scmp.ne.s32.totalorder %s91, %s93
    %p97 = scmp.eq.s32.totalorder %s10, 0
    %p98 = por %p96, %p97
    %p99 = scmp.ne.s32.totalorder %s91, %s93
    %p100 = scmp.eq.s32.totalorder %s15, 1
    %p101 = por %p99, %p100
    %p102 = scmp.ne.s32.totalorder %s93, %s94
    %p103 = scmp.eq.s32.totalorder %s15, 0
    %p104 = por %p102, %p103
    %p105 = scmp.ne.s32.totalorder %s93, %s94
    %p106 = scmp.eq.s32.totalorder %s16, 1
    %p107 = por %p105, %p106
    %p109 = scmp.ne.s32.totalorder %s94, %s108
    %p110 = scmp.eq.s32.totalorder %s16, 0
    %p111 = por %p109, %p110
    %s112 = ssub.s32 %s10, %s17
    %p113 = scmp.eq.s32.totalorder %s112, 0
    %s115 = sadd.s32 %s114, 1
    %s116 = scalar_select %p113, %s114, %s115
    %p119 = pneg %p113
    %p120 = scmp.eq.s32.totalorder %s10, 1
    %p121 = por %p119, %p120
    %p122 = scmp.ne.s32.totalorder %s114, %s117
    %p123 = scmp.eq.s32.totalorder %s10, 0
    %p124 = por %p122, %p123
    %p125 = scmp.ne.s32.totalorder %s114, %s117
    %p126 = scmp.eq.s32.totalorder %s15, 1
    %p127 = por %p125, %p126
    %p128 = scmp.ne.s32.totalorder %s117, %s118
    %p129 = scmp.eq.s32.totalorder %s15, 0
    %p130 = por %p128, %p129
    %p131 = scmp.ne.s32.totalorder %s117, %s118
    %p132 = scmp.eq.s32.totalorder %s16, 1
    %p133 = por %p131, %p132
    %p135 = scmp.ne.s32.totalorder %s118, %s134
    %p136 = scmp.eq.s32.totalorder %s16, 0
    %p137 = por %p135, %p136
    %p138 = scmp.le.s32.totalorder 1, %s10
    %p139 = scmp.lt.s32.totalorder %s10, 3
    %p140 = pnand %p138, %p139
    %p141 = pneg %p140
    // Predicated region
    $region9: #{transformer_forward.23} parent=5 // pred_check
      _
    $region10: #{transformer_forward.23} parent=5 // pred_check_branch
      %143 = sbr.rel (%p140) target = $region12
    $region11: #{transformer_forward.23} parent=5 // pred_region
      %s144 = ssub.s32 %s10, 1
      // Predicated region
      $region13: #{transformer_forward.23} parent=11 // pred_check
        %p145 = pneg %p83
      $region14: #{transformer_forward.23} parent=11 // pred_check_branch
        %147 = sbr.rel (%p145) target = $region16
      $region15: #{transformer_forward.23} parent=11 // pred_region
        _
      $region16: #{transformer_forward.23} parent=11 // pred_fallthru
        _
      // Predicated region
      $region17: #{transformer_forward.23} parent=11 // pred_check
        %p148 = pneg %p104
      $region18: #{transformer_forward.23} parent=11 // pred_check_branch
        %150 = sbr.rel (%p148) target = $region20
      $region19: #{transformer_forward.23} parent=11 // pred_region
        _
      $region20: #{transformer_forward.23} parent=11 // pred_fallthru
        _
    $region12: #{transformer_forward.23} parent=5 // pred_fallthru
      _
    %p151 = scmp.lt.s32.totalorder %s10, 2
    // Predicated region
    $region21: #{transformer_forward.23} parent=5 // pred_check
      %p152 = pneg %p151
    $region22: #{transformer_forward.23} parent=5 // pred_check_branch
      %154 = sbr.rel (%p152) target = $region24
    $region23: #{transformer_forward.23} parent=5 // pred_region
      // Predicated region
      $region25: #{transformer_forward.23} parent=23 // pred_check
        %p155 = pneg %p30
      $region26: #{transformer_forward.23} parent=23 // pred_check_branch
        %157 = sbr.rel (%p155) target = $region28
      $region27: #{transformer_forward.23} parent=23 // pred_region
        %p158 = scmp.lt.s32.totalorder %s10, 1
        %s159 = scalar_select %p158, %s10, 1
        %s160 = smul.addr %s159, 8
        %s161 = scalar_lea.vmem %s0, %s160
      $region28: #{transformer_forward.23} parent=23 // pred_fallthru
        _
      // Predicated region
      $region29: #{transformer_forward.23} parent=23 // pred_check
        %p162 = pneg %p56
      $region30: #{transformer_forward.23} parent=23 // pred_check_branch
        %164 = sbr.rel (%p162) target = $region32
      $region31: #{transformer_forward.23} parent=23 // pred_region
        %p165 = scmp.lt.s32.totalorder %s10, 1
        %s166 = scalar_select %p165, %s10, 1
        %s167 = smul.addr %s166, 4
        %s168 = scalar_lea.vmem %s1, %s167
      $region32: #{transformer_forward.23} parent=23 // pred_fallthru
        _
    $region24: #{transformer_forward.23} parent=5 // pred_fallthru
      _
    %p169 = scmp.le.s32.totalorder 1, %s10
    %p170 = scmp.lt.s32.totalorder %s10, 3
    %p171 = pnand %p169, %p170
    %p172 = pneg %p171
    // Predicated region
    $region33: #{transformer_forward.23} parent=5 // pred_check
      _
    $region34: #{transformer_forward.23} parent=5 // pred_check_branch
      %174 = sbr.rel (%p171) target = $region36
    $region35: #{transformer_forward.23} parent=5 // pred_region
      %s175 = ssub.s32 %s10, 1
      %p176 = scmp.lt.s32.totalorder %s15, 1
      %s177 = scalar_select %p176, %s15, 1
      %s178 = smul.addr %s177, 8
      %s179 = scalar_lea.vmem %s0, %s178
      %p180 = pneg %p36
      %p181 = pneg %p33
      %p182 = scmp.lt.s32.totalorder %s15, 1
      %s183 = scalar_select %p182, %s15, 1
      %s184 = smul.addr %s183, 4
      %s185 = scalar_lea.vmem %s1, %s184
      %p186 = pneg %p62
      %p187 = pneg %p59
      %p188 = pneg %p83
      %p189 = pneg %p80
      %p190 = pneg %p104
      %p191 = pneg %p101
      %p192 = pneg %p130
      %p193 = pneg %p127
      %p194 = scmp.lt.s32.totalorder %s15, 1
      %s195 = scalar_select %p194, %s15, 1
      %s196 = smul.addr %s195, 4
      %s197 = scalar_lea.vmem %s4, %s196
      %p198 = scmp.lt.s32.totalorder %s15, 1
      %s199 = scalar_select %p198, %s15, 1
      %s200 = smul.addr %s199, 8
      %s201 = scalar_lea.vmem %s0, %s200
      %p202 = scmp.lt.s32.totalorder %s15, 1
      %s203 = scalar_select %p202, %s15, 1
      %s204 = smul.addr %s203, 4
      %s205 = scalar_lea.vmem %s1, %s204
      %p206 = scmp.lt.s32.totalorder %s15, 1
      %s207 = scalar_select %p206, %s15, 1
      %s208 = smul.addr %s207, 4
      %s209 = scalar_lea.vmem %s4, %s208
      %v211 = vld [vmem:[%s205] sm:$0xf]
      %v212 = vld [vmem:[%s2] sm:$0xff]
      %v213 = vld [vmem:[%s2 + $0x8] sm:$0xf]
      %v214 = vld [vmem:[%s2 + $0xc] sm:$0xff]
      %v215 = vld [vmem:[%s2 + $0x14] sm:$0xf]
      %v216 = vld [vmem:[%s2 + $0x18] sm:$0xff]
      %v217 = vld [vmem:[%s2 + $0x20] sm:$0xf]
      %v218 = vld [vmem:[%s2 + $0x24] sm:$0xff]
      %v219 = vld [vmem:[%s2 + $0x2c] sm:$0xf]
      %v220 = vld [vmem:[%s2 + $0x30] sm:$0xff]
      %v221 = vld [vmem:[%s2 + $0x38] sm:$0xf]
      %v222 = vld [vmem:[%s2 + $0x3c] sm:$0xff]
      %v223 = vld [vmem:[%s2 + $0x44] sm:$0xf]
      %v224 = vld [vmem:[%s2 + $0x48] sm:$0xff]
      %v225 = vld [vmem:[%s2 + $0x50] sm:$0xf]
      %v226 = vld [vmem:[%s2 + $0x54] sm:$0xff]
      %v227 = vld [vmem:[%s2 + $0x5c] sm:$0xf]
      %v228 = vld [vmem:[%s2 + $0x60] sm:$0xff]
      %v229 = vld [vmem:[%s2 + $0x68] sm:$0xf]
      %v230 = vld [vmem:[%s2 + $0x6c] sm:$0xff]
      %v231 = vld [vmem:[%s2 + $0x74] sm:$0xf]
      %v232 = vld [vmem:[%s2 + $0x78] sm:$0xff]
      %v233 = vld [vmem:[%s2 + $0x80] sm:$0xf]
      %v234 = vld [vmem:[%s2 + $0x84] sm:$0xff]
      %v235 = vld [vmem:[%s2 + $0x8c] sm:$0xf]
      %v236 = vld [vmem:[%s2 + $0x90] sm:$0xff]
      %v237 = vld [vmem:[%s2 + $0x98] sm:$0xf]
      %v238 = vld [vmem:[%s2 + $0x9c] sm:$0xff]
      %v239 = vld [vmem:[%s2 + $0xa4] sm:$0xf]
      %v240 = vld [vmem:[%s2 + $0xa8] sm:$0xff]
      %v241 = vld [vmem:[%s2 + $0xb0] sm:$0xf]
      %v242 = vld [vmem:[%s2 + $0xb4] sm:$0xff]
      %v243 = vld [vmem:[%s2 + $0xbc] sm:$0xf]
      %v244 = vld [vmem:[%s3] sm:$0x7]
      %v246 = vlaneseq
      %v247 = vshrl.u32 %v246, 7
      %v248 = vsub.s32 0, %v247
      %v249 = vrot.slane %v244, %v248
      %v250 = vlaneseq
      %v251 = vshrl.u32 %v250, 7
      %v252 = vsub.s32 1, %v251
      %v253 = vrot.slane %v244, %v252
      %v254 = vlaneseq
      %v255 = vshrl.u32 %v254, 7
      %v256 = vsub.s32 2, %v255
      %v257 = vrot.slane %v244, %v256
      %v293 = vunpack.c.l.b16 %v212
      %v294 = vunpack.c.h.b16 %v212
      %v295 = vunpack.c.l.b16 %v213
      %v296 = vunpack.c.l.b16 %v214
      %v297 = vunpack.c.h.b16 %v214
      %v298 = vunpack.c.l.b16 %v215
      %v299 = vunpack.c.l.b16 %v216
      %v300 = vunpack.c.h.b16 %v216
      %v301 = vunpack.c.l.b16 %v217
      %v302 = vunpack.c.l.b16 %v218
      %v303 = vunpack.c.h.b16 %v218
      %v304 = vunpack.c.l.b16 %v219
      %v305 = vunpack.c.l.b16 %v220
      %v306 = vunpack.c.h.b16 %v220
      %v307 = vunpack.c.l.b16 %v221
      %v308 = vunpack.c.l.b16 %v222
      %v309 = vunpack.c.h.b16 %v222
      %v310 = vunpack.c.l.b16 %v223
      %v311 = vunpack.c.l.b16 %v224
      %v312 = vunpack.c.h.b16 %v224
      %v313 = vunpack.c.l.b16 %v225
      %v314 = vunpack.c.l.b16 %v226
      %v315 = vunpack.c.h.b16 %v226
      %v316 = vunpack.c.l.b16 %v227
      %v317 = vunpack.c.l.b16 %v228
      %v318 = vunpack.c.h.b16 %v228
      %v319 = vunpack.c.l.b16 %v229
      %v320 = vunpack.c.l.b16 %v230
      %v321 = vunpack.c.h.b16 %v230
      %v322 = vunpack.c.l.b16 %v231
      %v323 = vunpack.c.l.b16 %v232
      %v324 = vunpack.c.h.b16 %v232
      %v325 = vunpack.c.l.b16 %v233
      %v326 = vunpack.c.l.b16 %v234
      %v327 = vunpack.c.h.b16 %v234
      %v328 = vunpack.c.l.b16 %v235
      %v329 = vunpack.c.l.b16 %v236
      %v330 = vunpack.c.h.b16 %v236
      %v331 = vunpack.c.l.b16 %v237
      %v332 = vunpack.c.l.b16 %v238
      %v333 = vunpack.c.h.b16 %v238
      %v334 = vunpack.c.l.b16 %v239
      %v335 = vunpack.c.l.b16 %v240
      %v336 = vunpack.c.h.b16 %v240
      %v337 = vunpack.c.l.b16 %v241
      %v338 = vunpack.c.l.b16 %v242
      %v339 = vunpack.c.h.b16 %v242
      %v340 = vunpack.c.l.b16 %v243
      %v341 = vpack.c.b16 %v296, %v293
      %v342 = vpack.c.b16 %v297, %v294
      %v343 = vpack.c.b16 %v298, %v295
      %v344 = vpack.c.b16 %v302, %v299
      %v345 = vpack.c.b16 %v303, %v300
      %v346 = vpack.c.b16 %v304, %v301
      %v347 = vpack.c.b16 %v308, %v305
      %v348 = vpack.c.b16 %v309, %v306
      %v349 = vpack.c.b16 %v310, %v307
      %v350 = vpack.c.b16 %v314, %v311
      %v351 = vpack.c.b16 %v315, %v312
      %v352 = vpack.c.b16 %v316, %v313
      %v353 = vpack.c.b16 %v320, %v317
      %v354 = vpack.c.b16 %v321, %v318
      %v355 = vpack.c.b16 %v322, %v319
      %v356 = vpack.c.b16 %v326, %v323
      %v357 = vpack.c.b16 %v327, %v324
      %v358 = vpack.c.b16 %v328, %v325
      %v359 = vpack.c.b16 %v332, %v329
      %v360 = vpack.c.b16 %v333, %v330
      %v361 = vpack.c.b16 %v334, %v331
      %v362 = vpack.c.b16 %v338, %v335
      %v363 = vpack.c.b16 %v339, %v336
      %v364 = vpack.c.b16 %v340, %v337
      %389 = vmatprep.subr.bf16.mxu0 %v342
      %390 = vmatpush1.bf16.msra.mxu0 %v341
      %391 = vmatprep.subr.bf16.mxu0 %v345
      %392 = vmatpush1.bf16.msra.mxu0 %v344
      %393 = vmatprep.subr.bf16.mxu0 %v348
      %394 = vmatpush1.bf16.msra.mxu0 %v347
      %395 = vmatprep.subr.bf16.mxu0 %v351
      %396 = vmatpush1.bf16.msra.mxu0 %v350
      %397 = vmatprep.subr.bf16.mxu0 %v354
      %398 = vmatpush1.bf16.msra.mxu0 %v353
      %399 = vmatprep.subr.bf16.mxu0 %v357
      %400 = vmatpush1.bf16.msra.mxu0 %v356
      %401 = vmatprep.subr.bf16.mxu0 %v360
      %402 = vmatpush1.bf16.msra.mxu0 %v359
      %403 = vmatprep.subr.bf16.mxu0 %v363
      %404 = vmatpush1.bf16.msra.mxu0 %v362
      %405 = vmatprep.subr.bf16.mxu0 0
      %406 = vmatpush1.bf16.msra.mxu0 0
      %407 = vmatprep.subr.bf16.mxu0 0
      %408 = vmatpush1.bf16.msra.mxu0 0
      %409 = vmatprep.subr.bf16.mxu0 0
      %410 = vmatpush1.bf16.msra.mxu0 0
      %411 = vmatprep.subr.bf16.mxu0 0
      %412 = vmatpush1.bf16.msra.mxu0 0
      %413 = vmatprep.subr.bf16.mxu0 0
      %414 = vmatpush1.bf16.msra.mxu0 0
      %415 = vmatprep.subr.bf16.mxu0 0
      %416 = vmatpush1.bf16.msra.mxu0 0
      %417 = vmatprep.subr.bf16.mxu0 0
      %418 = vmatpush1.bf16.msra.mxu0 0
      %419 = vmatprep.subr.bf16.mxu0 0
      %420 = vmatpush1.bf16.msra.mxu0 0
      %421 = vmatprep.mubr.bf16.mxu0 0
      %422 = vmatmul.mubr.bf16.gmra.mrb[0].mxu0 %v211
      %v423 = vpop.f32.mrb[0].mxu0
      %v424 = vadd.f32 %v249, %v423
      %v425 = vpop.f32.mrb[0].mxu0
      %v426 = vadd.f32 %v253, %v425
      %v427 = vpop.f32.mrb[0].mxu0
      %v428 = vpop.f32.mrb[0].mxu0
      %429 = vdwg.mxu0
      %430 = vmatprep.subr.bf16.mxu0 0
      %431 = vmatpush1.bf16.msra.mxu0 %v343
      %432 = vmatprep.subr.bf16.mxu0 0
      %433 = vmatpush1.bf16.msra.mxu0 %v346
      %434 = vmatprep.subr.bf16.mxu0 0
      %435 = vmatpush1.bf16.msra.mxu0 %v349
      %436 = vmatprep.subr.bf16.mxu0 0
      %437 = vmatpush1.bf16.msra.mxu0 %v352
      %438 = vmatprep.subr.bf16.mxu0 0
      %439 = vmatpush1.bf16.msra.mxu0 %v355
      %440 = vmatprep.subr.bf16.mxu0 0
      %441 = vmatpush1.bf16.msra.mxu0 %v358
      %442 = vmatprep.subr.bf16.mxu0 0
      %443 = vmatpush1.bf16.msra.mxu0 %v361
      %444 = vmatprep.subr.bf16.mxu0 0
      %445 = vmatpush1.bf16.msra.mxu0 %v364
      %446 = vmatprep.subr.bf16.mxu0 0
      %447 = vmatpush1.bf16.msra.mxu0 0
      %448 = vmatprep.subr.bf16.mxu0 0
      %449 = vmatpush1.bf16.msra.mxu0 0
      %450 = vmatprep.subr.bf16.mxu0 0
      %451 = vmatpush1.bf16.msra.mxu0 0
      %452 = vmatprep.subr.bf16.mxu0 0
      %453 = vmatpush1.bf16.msra.mxu0 0
      %454 = vmatprep.subr.bf16.mxu0 0
      %455 = vmatpush1.bf16.msra.mxu0 0
      %456 = vmatprep.subr.bf16.mxu0 0
      %457 = vmatpush1.bf16.msra.mxu0 0
      %458 = vmatprep.subr.bf16.mxu0 0
      %459 = vmatpush1.bf16.msra.mxu0 0
      %460 = vmatprep.subr.bf16.mxu0 0
      %461 = vmatpush1.bf16.msra.mxu0 0
      %462 = vmatprep.mubr.bf16.mxu0 0
      %463 = vmatmul.mubr.bf16.gmra.mrb[0].mxu0 %v211
      %v464 = vpop.f32.mrb[0].mxu0
      %v465 = vadd.f32 %v257, %v464
      %v466 = vpop.f32.mrb[0].mxu0
      %v467 = vpop.f32.mrb[0].mxu0
      %v468 = vpop.f32.mrb[0].mxu0
      %469 = vdwg.mxu0
      %v470 = vpack.c.bf16 %v424, %v424
      %v471 = vpack.c.bf16 %v426, %v426
      %v472 = vpack.c.bf16 %v465, %v465
      %v473 = vlaneseq
      %v474 = vshrl.u32 %v473, 7
      %v475 = vlaneseq
      %v476 = vand.u32 %v475, 127
      %vm477 = vcmp.le.s32.totalorder %v476, %v474
      %v478 = vld [vmem:[%s201] sm:$0xff]
      %vm479 = vcmp.ne.s32.totalorder %v478, 4294967295
      %v480 = vsel %vm479, 1, 0
      %481 = vset.pattern.permute.xlu0 0
      %482 = vperm.xlu0 %481, %v480
      %v483 = vpop.permute.xlu0 %482
      %vm484 = vcmp.eq.s32.totalorder %v483, 1
      %vm485 = vmand %vm477, %vm484
      %486 = vst [vmem:[%s209] sm:$0xf] 0
      %vm487 = vcmask 64512
      %v489 = vsel %vm487, %v470, 0
      %v492 = vsel %vm487, %v471, 0
      %494 = vmatprep.subr.bf16.mxu0 0
      %495 = vmatpush1.bf16.xpose.msra.mxu0 %v492
      %496 = vmatprep.subr.bf16.mxu0 0
      %497 = vmatpush1.bf16.xpose.msra.mxu0 0
      %498 = vmatprep.subr.bf16.mxu0 0
      %499 = vmatpush1.bf16.xpose.msra.mxu0 0
      %500 = vmatprep.subr.bf16.mxu0 0
      %501 = vmatpush1.bf16.xpose.msra.mxu0 0
      %502 = vmatprep.subr.bf16.mxu0 0
      %503 = vmatpush1.bf16.xpose.msra.mxu0 0
      %504 = vmatprep.subr.bf16.mxu0 0
      %505 = vmatpush1.bf16.xpose.msra.mxu0 0
      %506 = vmatprep.subr.bf16.mxu0 0
      %507 = vmatpush1.bf16.xpose.msra.mxu0 0
      %508 = vmatprep.subr.bf16.mxu0 0
      %509 = vmatpush1.bf16.xpose.msra.mxu0 0
      %510 = vmatprep.subr.bf16.mxu0 0
      %511 = vmatpush1.bf16.xpose.msra.mxu0 0
      %512 = vmatprep.subr.bf16.mxu0 0
      %513 = vmatpush1.bf16.xpose.msra.mxu0 0
      %514 = vmatprep.subr.bf16.mxu0 0
      %515 = vmatpush1.bf16.xpose.msra.mxu0 0
      %516 = vmatprep.subr.bf16.mxu0 0
      %517 = vmatpush1.bf16.xpose.msra.mxu0 0
      %518 = vmatprep.subr.bf16.mxu0 0
      %519 = vmatpush1.bf16.xpose.msra.mxu0 0
      %520 = vmatprep.subr.bf16.mxu0 0
      %521 = vmatpush1.bf16.xpose.msra.mxu0 0
      %522 = vmatprep.subr.bf16.mxu0 0
      %523 = vmatpush1.bf16.xpose.msra.mxu0 0
      %524 = vmatprep.subr.bf16.mxu0 0
      %525 = vmatpush1.bf16.xpose.msra.mxu0 0
      %526 = vmatprep.mubr.bf16.mxu0 0
      %527 = vmatmul.mubr.bf16.gmra.mrb[0].mxu0 %v489
      %v528 = vpop.f32.mrb[0].mxu0
      %v529 = vadd.f32 0.0, %v528
      %v530 = vpop.f32.mrb[0].mxu0
      %v531 = vpop.f32.mrb[0].mxu0
      %v532 = vpop.f32.mrb[0].mxu0
      %533 = vdwg.mxu0
      %v534 = vmul.f32 %v529, 0.35355338
      %v535 = vsel %vm485, %v534, -1e+09
      %v536 = vsel %vm487, %v535, -inf
      %537 = vmax.xlane.f32.xlu0 %v536
      %v538 = vpop.xlane.xlu0 %537
      %v539 = vsub.f32 %v535, %v538
      %v540 = vmul.f32 %v539, 1.442695
      %v541 = vpow.pop %v540
      %v542 = vsel %vm487, %v541, 0.0
      %543 = vadd.xlane.f32.xlu0 %v542
      %v544 = vpop.xlane.xlu0 %543
      %v545 = vrcp.pop %v544
      %v546 = vmul.f32 %v541, %v545
      %v547 = vpack.c.bf16 %v546, %v546
      %v549 = vsel %vm487, %v547, 0
      %vm551 = vcmask 1043456
      %v553 = vsel %vm551, %v472, 0
      %555 = vmatprep.subr.bf16.mxu0 0
      %556 = vmatpush1.bf16.msra.mxu0 %v553
      %557 = vmatprep.subr.bf16.mxu0 0
      %558 = vmatpush1.bf16.msra.mxu0 0
      %559 = vmatprep.subr.bf16.mxu0 0
      %560 = vmatpush1.bf16.msra.mxu0 0
      %561 = vmatprep.subr.bf16.mxu0 0
      %562 = vmatpush1.bf16.msra.mxu0 0
      %563 = vmatprep.subr.bf16.mxu0 0
      %564 = vmatpush1.bf16.msra.mxu0 0
      %565 = vmatprep.subr.bf16.mxu0 0
      %566 = vmatpush1.bf16.msra.mxu0 0
      %567 = vmatprep.subr.bf16.mxu0 0
      %568 = vmatpush1.bf16.msra.mxu0 0
      %569 = vmatprep.subr.bf16.mxu0 0
      %570 = vmatpush1.bf16.msra.mxu0 0
      %571 = vmatprep.subr.bf16.mxu0 0
      %572 = vmatpush1.bf16.msra.mxu0 0
      %573 = vmatprep.subr.bf16.mxu0 0
      %574 = vmatpush1.bf16.msra.mxu0 0
      %575 = vmatprep.subr.bf16.mxu0 0
      %576 = vmatpush1.bf16.msra.mxu0 0
      %577 = vmatprep.subr.bf16.mxu0 0
      %578 = vmatpush1.bf16.msra.mxu0 0
      %579 = vmatprep.subr.bf16.mxu0 0
      %580 = vmatpush1.bf16.msra.mxu0 0
      %581 = vmatprep.subr.bf16.mxu0 0
      %582 = vmatpush1.bf16.msra.mxu0 0
      %583 = vmatprep.subr.bf16.mxu0 0
      %584 = vmatpush1.bf16.msra.mxu0 0
      %585 = vmatprep.subr.bf16.mxu0 0
      %586 = vmatpush1.bf16.msra.mxu0 0
      %587 = vmatprep.mubr.bf16.mxu0 0
      %588 = vmatmul.mubr.bf16.gmra.mrb[0].mxu0 %v549
      %v589 = vpop.f32.mrb[0].mxu0
      %v590 = vadd.f32 0.0, %v589
      %v591 = vpop.f32.mrb[0].mxu0
      %v592 = vpop.f32.mrb[0].mxu0
      %v593 = vpop.f32.mrb[0].mxu0
      %594 = vdwg.mxu0
      %v595 = vpack.c.bf16 %v590, %v590
      %vm596 = vcmask 60416
      %597 = vst.msk [vmem:[%s209] sm:$0xf] %vm596, %v595
      %599 = vrot.lane.b32.xlu0 %v470, 120
      %v600 = vpop.permute.xlu0 %599
      %602 = vrot.lane.b32.xlu0 %v471, 120
      %v603 = vpop.permute.xlu0 %602
      %v605 = vsel %vm487, %v600, 0
      %v608 = vsel %vm487, %v603, 0
      %610 = vmatprep.subr.bf16.mxu0 0
      %611 = vmatpush1.bf16.xpose.msra.mxu0 %v608
      %612 = vmatprep.subr.bf16.mxu0 0
      %613 = vmatpush1.bf16.xpose.msra.mxu0 0
      %614 = vmatprep.subr.bf16.mxu0 0
      %615 = vmatpush1.bf16.xpose.msra.mxu0 0
      %616 = vmatprep.subr.bf16.mxu0 0
      %617 = vmatpush1.bf16.xpose.msra.mxu0 0
      %618 = vmatprep.subr.bf16.mxu0 0
      %619 = vmatpush1.bf16.xpose.msra.mxu0 0
      %620 = vmatprep.subr.bf16.mxu0 0
      %621 = vmatpush1.bf16.xpose.msra.mxu0 0
      %622 = vmatprep.subr.bf16.mxu0 0
      %623 = vmatpush1.bf16.xpose.msra.mxu0 0
      %624 = vmatprep.subr.bf16.mxu0 0
      %625 = vmatpush1.bf16.xpose.msra.mxu0 0
      %626 = vmatprep.subr.bf16.mxu0 0
      %627 = vmatpush1.bf16.xpose.msra.mxu0 0
      %628 = vmatprep.subr.bf16.mxu0 0
      %629 = vmatpush1.bf16.xpose.msra.mxu0 0
      %630 = vmatprep.subr.bf16.mxu0 0
      %631 = vmatpush1.bf16.xpose.msra.mxu0 0
      %632 = vmatprep.subr.bf16.mxu0 0
      %633 = vmatpush1.bf16.xpose.msra.mxu0 0
      %634 = vmatprep.subr.bf16.mxu0 0
      %635 = vmatpush1.bf16.xpose.msra.mxu0 0
      %636 = vmatprep.subr.bf16.mxu0 0
      %637 = vmatpush1.bf16.xpose.msra.mxu0 0
      %638 = vmatprep.subr.bf16.mxu0 0
      %639 = vmatpush1.bf16.xpose.msra.mxu0 0
      %640 = vmatprep.subr.bf16.mxu0 0
      %641 = vmatpush1.bf16.xpose.msra.mxu0 0
      %642 = vmatprep.mubr.bf16.mxu0 0
      %643 = vmatmul.mubr.bf16.gmra.mrb[0].mxu0 %v605
      %v644 = vpop.f32.mrb[0].mxu0
      %v645 = vadd.f32 0.0, %v644
      %v646 = vpop.f32.mrb[0].mxu0
      %v647 = vpop.f32.mrb[0].mxu0
      %v648 = vpop.f32.mrb[0].mxu0
      %649 = vdwg.mxu0
      %v650 = vmul.f32 %v645, 0.35355338
      %v651 = vsel %vm485, %v650, -1e+09
      %v652 = vsel %vm487, %v651, -inf
      %653 = vmax.xlane.f32.xlu0 %v652
      %v654 = vpop.xlane.xlu0 %653
      %v655 = vsub.f32 %v651, %v654
      %v656 = vmul.f32 %v655, 1.442695
      %v657 = vpow.pop %v656
      %v658 = vsel %vm487, %v657, 0.0
      %659 = vadd.xlane.f32.xlu0 %v658
      %v660 = vpop.xlane.xlu0 %659
      %v661 = vrcp.pop %v660
      %v662 = vmul.f32 %v657, %v661
      %v663 = vpack.c.bf16 %v662, %v662
      %665 = vrot.lane.b32.xlu0 %v472, 120
      %v666 = vpop.permute.xlu0 %665
      %v668 = vsel %vm487, %v663, 0
      %v671 = vsel %vm551, %v666, 0
      %673 = vmatprep.subr.bf16.mxu0 0
      %674 = vmatpush1.bf16.msra.mxu0 %v671
      %675 = vmatprep.subr.bf16.mxu0 0
      %676 = vmatpush1.bf16.msra.mxu0 0
      %677 = vmatprep.subr.bf16.mxu0 0
      %678 = vmatpush1.bf16.msra.mxu0 0
      %679 = vmatprep.subr.bf16.mxu0 0
      %680 = vmatpush1.bf16.msra.mxu0 0
      %681 = vmatprep.subr.bf16.mxu0 0
      %682 = vmatpush1.bf16.msra.mxu0 0
      %683 = vmatprep.subr.bf16.mxu0 0
      %684 = vmatpush1.bf16.msra.mxu0 0
      %685 = vmatprep.subr.bf16.mxu0 0
      %686 = vmatpush1.bf16.msra.mxu0 0
      %687 = vmatprep.subr.bf16.mxu0 0
      %688 = vmatpush1.bf16.msra.mxu0 0
      %689 = vmatprep.subr.bf16.mxu0 0
      %690 = vmatpush1.bf16.msra.mxu0 0
      %691 = vmatprep.subr.bf16.mxu0 0
      %692 = vmatpush1.bf16.msra.mxu0 0
      %693 = vmatprep.subr.bf16.mxu0 0
      %694 = vmatpush1.bf16.msra.mxu0 0
      %695 = vmatprep.subr.bf16.mxu0 0
      %696 = vmatpush1.bf16.msra.mxu0 0
      %697 = vmatprep.subr.bf16.mxu0 0
      %698 = vmatpush1.bf16.msra.mxu0 0
      %699 = vmatprep.subr.bf16.mxu0 0
      %700 = vmatpush1.bf16.msra.mxu0 0
      %701 = vmatprep.subr.bf16.mxu0 0
      %702 = vmatpush1.bf16.msra.mxu0 0
      %703 = vmatprep.subr.bf16.mxu0 0
      %704 = vmatpush1.bf16.msra.mxu0 0
      %705 = vmatprep.mubr.bf16.mxu0 0
      %706 = vmatmul.mubr.bf16.gmra.mrb[0].mxu0 %v668
      %v707 = vpop.f32.mrb[0].mxu0
      %v708 = vadd.f32 0.0, %v707
      %v709 = vpop.f32.mrb[0].mxu0
      %v710 = vpop.f32.mrb[0].mxu0
      %v711 = vpop.f32.mrb[0].mxu0
      %712 = vdwg.mxu0
      %v713 = vpack.c.bf16 %v708, %v708
      %v715 = vunpack.c.l.b16 %v713
      %v716 = vpack.c.b16 %v715, %v715
      %717 = vrot.lane.b32.xlu0 %v716, 8
      %v718 = vpop.permute.xlu0 %717
      %vm720 = vcmask 126016
      %721 = vst.msk [vmem:[%s209] sm:$0xf] %vm720, %v718
      %722 = vrot.lane.b32.xlu0 %v470, 112
      %v723 = vpop.permute.xlu0 %722
      %724 = vrot.lane.b32.xlu0 %v471, 112
      %v725 = vpop.permute.xlu0 %724
      %v727 = vsel %vm487, %v723, 0
      %v730 = vsel %vm487, %v725, 0
      %732 = vmatprep.subr.bf16.mxu0 0
      %733 = vmatpush1.bf16.xpose.msra.mxu0 %v730
      %734 = vmatprep.subr.bf16.mxu0 0
      %735 = vmatpush1.bf16.xpose.msra.mxu0 0
      %736 = vmatprep.subr.bf16.mxu0 0
      %737 = vmatpush1.bf16.xpose.msra.mxu0 0
      %738 = vmatprep.subr.bf16.mxu0 0
      %739 = vmatpush1.bf16.xpose.msra.mxu0 0
      %740 = vmatprep.subr.bf16.mxu0 0
      %741 = vmatpush1.bf16.xpose.msra.mxu0 0
      %742 = vmatprep.subr.bf16.mxu0 0
      %743 = vmatpush1.bf16.xpose.msra.mxu0 0
      %744 = vmatprep.subr.bf16.mxu0 0
      %745 = vmatpush1.bf16.xpose.msra.mxu0 0
      %746 = vmatprep.subr.bf16.mxu0 0
      %747 = vmatpush1.bf16.xpose.msra.mxu0 0
      %748 = vmatprep.subr.bf16.mxu0 0
      %749 = vmatpush1.bf16.xpose.msra.mxu0 0
      %750 = vmatprep.subr.bf16.mxu0 0
      %751 = vmatpush1.bf16.xpose.msra.mxu0 0
      %752 = vmatprep.subr.bf16.mxu0 0
      %753 = vmatpush1.bf16.xpose.msra.mxu0 0
      %754 = vmatprep.subr.bf16.mxu0 0
      %755 = vmatpush1.bf16.xpose.msra.mxu0 0
      %756 = vmatprep.subr.bf16.mxu0 0
      %757 = vmatpush1.bf16.xpose.msra.mxu0 0
      %758 = vmatprep.subr.bf16.mxu0 0
      %759 = vmatpush1.bf16.xpose.msra.mxu0 0
      %760 = vmatprep.subr.bf16.mxu0 0
      %761 = vmatpush1.bf16.xpose.msra.mxu0 0
      %762 = vmatprep.subr.bf16.mxu0 0
      %763 = vmatpush1.bf16.xpose.msra.mxu0 0
      %764 = vmatprep.mubr.bf16.mxu0 0
      %765 = vmatmul.mubr.bf16.gmra.mrb[0].mxu0 %v727
      %v766 = vpop.f32.mrb[0].mxu0
      %v767 = vadd.f32 0.0, %v766
      %v768 = vpop.f32.mrb[0].mxu0
      %v769 = vpop.f32.mrb[0].mxu0
      %v770 = vpop.f32.mrb[0].mxu0
      %771 = vdwg.mxu0
      %v772 = vmul.f32 %v767, 0.35355338
      %v773 = vsel %vm485, %v772, -1e+09
      %v774 = vsel %vm487, %v773, -inf
      %775 = vmax.xlane.f32.xlu0 %v774
      %v776 = vpop.xlane.xlu0 %775
      %v777 = vsub.f32 %v773, %v776
      %v778 = vmul.f32 %v777, 1.442695
      %v779 = vpow.pop %v778
      %v780 = vsel %vm487, %v779, 0.0
      %781 = vadd.xlane.f32.xlu0 %v780
      %v782 = vpop.xlane.xlu0 %781
      %v783 = vrcp.pop %v782
      %v784 = vmul.f32 %v779, %v783
      %v785 = vpack.c.bf16 %v784, %v784
      %786 = vrot.lane.b32.xlu0 %v472, 112
      %v787 = vpop.permute.xlu0 %786
      %v789 = vsel %vm487, %v785, 0
      %v792 = vsel %vm551, %v787, 0
      %794 = vmatprep.subr.bf16.mxu0 0
      %795 = vmatpush1.bf16.msra.mxu0 %v792
      %796 = vmatprep.subr.bf16.mxu0 0
      %797 = vmatpush1.bf16.msra.mxu0 0
      %798 = vmatprep.subr.bf16.mxu0 0
      %799 = vmatpush1.bf16.msra.mxu0 0
      %800 = vmatprep.subr.bf16.mxu0 0
      %801 = vmatpush1.bf16.msra.mxu0 0
      %802 = vmatprep.subr.bf16.mxu0 0
      %803 = vmatpush1.bf16.msra.mxu0 0
      %804 = vmatprep.subr.bf16.mxu0 0
      %805 = vmatpush1.bf16.msra.mxu0 0
      %806 = vmatprep.subr.bf16.mxu0 0
      %807 = vmatpush1.bf16.msra.mxu0 0
      %808 = vmatprep.subr.bf16.mxu0 0
      %809 = vmatpush1.bf16.msra.mxu0 0
      %810 = vmatprep.subr.bf16.mxu0 0
      %811 = vmatpush1.bf16.msra.mxu0 0
      %812 = vmatprep.subr.bf16.mxu0 0
      %813 = vmatpush1.bf16.msra.mxu0 0
      %814 = vmatprep.subr.bf16.mxu0 0
      %815 = vmatpush1.bf16.msra.mxu0 0
      %816 = vmatprep.subr.bf16.mxu0 0
      %817 = vmatpush1.bf16.msra.mxu0 0
      %818 = vmatprep.subr.bf16.mxu0 0
      %819 = vmatpush1.bf16.msra.mxu0 0
      %820 = vmatprep.subr.bf16.mxu0 0
      %821 = vmatpush1.bf16.msra.mxu0 0
      %822 = vmatprep.subr.bf16.mxu0 0
      %823 = vmatpush1.bf16.msra.mxu0 0
      %824 = vmatprep.subr.bf16.mxu0 0
      %825 = vmatpush1.bf16.msra.mxu0 0
      %826 = vmatprep.mubr.bf16.mxu0 0
      %827 = vmatmul.mubr.bf16.gmra.mrb[0].mxu0 %v789
      %v828 = vpop.f32.mrb[0].mxu0
      %v829 = vadd.f32 0.0, %v828
      %v830 = vpop.f32.mrb[0].mxu0
      %v831 = vpop.f32.mrb[0].mxu0
      %v832 = vpop.f32.mrb[0].mxu0
      %833 = vdwg.mxu0
      %v834 = vpack.c.bf16 %v829, %v829
      %v836 = vunpack.c.l.b16 %v834
      %v837 = vpack.c.b16 %v836, %v836
      %838 = vrot.lane.b32.xlu0 %v837, 16
      %v839 = vpop.permute.xlu0 %838
      %vm841 = vcmask 191616
      %842 = vst.msk [vmem:[%s209] sm:$0xf] %vm841, %v839
      %843 = vrot.lane.b32.xlu0 %v470, 104
      %v844 = vpop.permute.xlu0 %843
      %845 = vrot.lane.b32.xlu0 %v471, 104
      %v846 = vpop.permute.xlu0 %845
      %v848 = vsel %vm487, %v844, 0
      %v851 = vsel %vm487, %v846, 0
      %853 = vmatprep.subr.bf16.mxu0 0
      %854 = vmatpush1.bf16.xpose.msra.mxu0 %v851
      %855 = vmatprep.subr.bf16.mxu0 0
      %856 = vmatpush1.bf16.xpose.msra.mxu0 0
      %857 = vmatprep.subr.bf16.mxu0 0
      %858 = vmatpush1.bf16.xpose.msra.mxu0 0
      %859 = vmatprep.subr.bf16.mxu0 0
      %860 = vmatpush1.bf16.xpose.msra.mxu0 0
      %861 = vmatprep.subr.bf16.mxu0 0
      %862 = vmatpush1.bf16.xpose.msra.mxu0 0
      %863 = vmatprep.subr.bf16.mxu0 0
      %864 = vmatpush1.bf16.xpose.msra.mxu0 0
      %865 = vmatprep.subr.bf16.mxu0 0
      %866 = vmatpush1.bf16.xpose.msra.mxu0 0
      %867 = vmatprep.subr.bf16.mxu0 0
      %868 = vmatpush1.bf16.xpose.msra.mxu0 0
      %869 = vmatprep.subr.bf16.mxu0 0
      %870 = vmatpush1.bf16.xpose.msra.mxu0 0
      %871 = vmatprep.subr.bf16.mxu0 0
      %872 = vmatpush1.bf16.xpose.msra.mxu0 0
      %873 = vmatprep.subr.bf16.mxu0 0
      %874 = vmatpush1.bf16.xpose.msra.mxu0 0
      %875 = vmatprep.subr.bf16.mxu0 0
      %876 = vmatpush1.bf16.xpose.msra.mxu0 0
      %877 = vmatprep.subr.bf16.mxu0 0
      %878 = vmatpush1.bf16.xpose.msra.mxu0 0
      %879 = vmatprep.subr.bf16.mxu0 0
      %880 = vmatpush1.bf16.xpose.msra.mxu0 0
      %881 = vmatprep.subr.bf16.mxu0 0
      %882 = vmatpush1.bf16.xpose.msra.mxu0 0
      %883 = vmatprep.subr.bf16.mxu0 0
      %884 = vmatpush1.bf16.xpose.msra.mxu0 0
      %885 = vmatprep.mubr.bf16.mxu0 0
      %886 = vmatmul.mubr.bf16.gmra.mrb[0].mxu0 %v848
      %v887 = vpop.f32.mrb[0].mxu0
      %v888 = vadd.f32 0.0, %v887
      %v889 = vpop.f32.mrb[0].mxu0
      %v890 = vpop.f32.mrb[0].mxu0
      %v891 = vpop.f32.mrb[0].mxu0
      %892 = vdwg.mxu0
      %v893 = vmul.f32 %v888, 0.35355338
      %v894 = vsel %vm485, %v893, -1e+09
      %v895 = vsel %vm487, %v894, -inf
      %896 = vmax.xlane.f32.xlu0 %v895
      %v897 = vpop.xlane.xlu0 %896
      %v898 = vsub.f32 %v894, %v897
      %v899 = vmul.f32 %v898, 1.442695
      %v900 = vpow.pop %v899
      %v901 = vsel %vm487, %v900, 0.0
      %902 = vadd.xlane.f32.xlu0 %v901
      %v903 = vpop.xlane.xlu0 %902
      %v904 = vrcp.pop %v903
      %v905 = vmul.f32 %v900, %v904
      %v906 = vpack.c.bf16 %v905, %v905
      %907 = vrot.lane.b32.xlu0 %v472, 104
      %v908 = vpop.permute.xlu0 %907
      %v910 = vsel %vm487, %v906, 0
      %v913 = vsel %vm551, %v908, 0
      %915 = vmatprep.subr.bf16.mxu0 0
      %916 = vmatpush1.bf16.msra.mxu0 %v913
      %917 = vmatprep.subr.bf16.mxu0 0
      %918 = vmatpush1.bf16.msra.mxu0 0
      %919 = vmatprep.subr.bf16.mxu0 0
      %920 = vmatpush1.bf16.msra.mxu0 0
      %921 = vmatprep.subr.bf16.mxu0 0
      %922 = vmatpush1.bf16.msra.mxu0 0
      %923 = vmatprep.subr.bf16.mxu0 0
      %924 = vmatpush1.bf16.msra.mxu0 0
      %925 = vmatprep.subr.bf16.mxu0 0
      %926 = vmatpush1.bf16.msra.mxu0 0
      %927 = vmatprep.subr.bf16.mxu0 0
      %928 = vmatpush1.bf16.msra.mxu0 0
      %929 = vmatprep.subr.bf16.mxu0 0
      %930 = vmatpush1.bf16.msra.mxu0 0
      %931 = vmatprep.subr.bf16.mxu0 0
      %932 = vmatpush1.bf16.msra.mxu0 0
      %933 = vmatprep.subr.bf16.mxu0 0
      %934 = vmatpush1.bf16.msra.mxu0 0
      %935 = vmatprep.subr.bf16.mxu0 0
      %936 = vmatpush1.bf16.msra.mxu0 0
      %937 = vmatprep.subr.bf16.mxu0 0
      %938 = vmatpush1.bf16.msra.mxu0 0
      %939 = vmatprep.subr.bf16.mxu0 0
      %940 = vmatpush1.bf16.msra.mxu0 0
      %941 = vmatprep.subr.bf16.mxu0 0
      %942 = vmatpush1.bf16.msra.mxu0 0
      %943 = vmatprep.subr.bf16.mxu0 0
      %944 = vmatpush1.bf16.msra.mxu0 0
      %945 = vmatprep.subr.bf16.mxu0 0
      %946 = vmatpush1.bf16.msra.mxu0 0
      %947 = vmatprep.mubr.bf16.mxu0 0
      %948 = vmatmul.mubr.bf16.gmra.mrb[0].mxu0 %v910
      %v949 = vpop.f32.mrb[0].mxu0
      %v950 = vadd.f32 0.0, %v949
      %v951 = vpop.f32.mrb[0].mxu0
      %v952 = vpop.f32.mrb[0].mxu0
      %v953 = vpop.f32.mrb[0].mxu0
      %954 = vdwg.mxu0
      %v955 = vpack.c.bf16 %v950, %v950
      %v957 = vunpack.c.l.b16 %v955
      %v958 = vpack.c.b16 %v957, %v957
      %959 = vrot.lane.b32.xlu0 %v958, 24
      %v960 = vpop.permute.xlu0 %959
      %vm962 = vcmask 257216
      %963 = vst.msk [vmem:[%s209] sm:$0xf] %vm962, %v960
      %p964 = scmp.lt.s32.totalorder %s15, 1
      %s965 = scalar_select %p964, %s15, 1
      %s966 = smul.addr %s965, 4
      %s967 = scalar_lea.vmem %s4, %s966
      // Predicated region
      $region37: #{transformer_forward.23} parent=35 // pred_check
        %p968 = pneg %p127
      $region38: #{transformer_forward.23} parent=35 // pred_check_branch
        %970 = sbr.rel (%p968) target = $region40
      $region39: #{transformer_forward.23} parent=35 // pred_region
        _
      $region40: #{transformer_forward.23} parent=35 // pred_fallthru
        _
    $region36: #{transformer_forward.23} parent=5 // pred_fallthru
      _
    %p971 = scmp.le.s32.totalorder 2, %s10
    // Predicated region
    $region41: #{transformer_forward.23} parent=5 // pred_check
      %p972 = pneg %p971
    $region42: #{transformer_forward.23} parent=5 // pred_check_branch
      %974 = sbr.rel (%p972) target = $region44
    $region43: #{transformer_forward.23} parent=5 // pred_region
      %s975 = ssub.s32 %s10, 2
      // Predicated region
      $region45: #{transformer_forward.23} parent=43 // pred_check
        %p976 = pneg %p133
      $region46: #{transformer_forward.23} parent=43 // pred_check_branch
        %978 = sbr.rel (%p976) target = $region48
      $region47: #{transformer_forward.23} parent=43 // pred_region
        %p979 = scmp.lt.s32.totalorder %s16, 1
        %s980 = scalar_select %p979, %s16, 1
        %s981 = smul.addr %s980, 4
        %s982 = scalar_lea.vmem %s4, %s981
      $region48: #{transformer_forward.23} parent=43 // pred_fallthru
        _
    $region44: #{transformer_forward.23} parent=5 // pred_fallthru
      _
  $region6: #{transformer_forward.23} parent=0 // loop_footer
    %s14 = sadd.s32 1, %s10
  $region7: #{transformer_forward.23} parent=0 // loop_footer_branch
    %9 = sbr.rel target = $region3
  $region8: #{transformer_forward.23} parent=0 // loop_exit
    _

// kernel: transformer_forward.33
$region0: #{transformer_forward.33}
  #allocation0 [shape = 'u32[]', space=smem, size = 0x4, offset = 0x4, fixed_abs, tag = 'smem constant byte address 0x4 - core index']
  #allocation1 [shape = 'u32[144,128]{1,0:T(1,128)}', space=vmem, size = 0x12000, scoped, tag = 'internal scratch']
  %s0 = inlined_call_operand.vmem [shape: bf16[16,128], index: 0, kind: input, shape index: {}]
  %s1 = inlined_call_operand.vmem [shape: bf16[128,128], index: 1, kind: input, shape index: {}]
  %s2 = inlined_call_operand.vmem [shape: f32[1,128], index: 2, kind: input, shape index: {}]
  %s3 = inlined_call_operand.vmem [shape: f32[16,128], index: 3, kind: output, shape index: {}]
  %s4 = sld [smem:[#allocation0]]
  $region26: #{transformer_forward.33} parent=0
    _
  %s6 = ssub.s32 1, %s4
  %s7 = scalar_select 0, %s6, %s4
  // Predicated region
  $region2: #{transformer_forward.33} parent=0 // pred_check
    _
  $region3: #{transformer_forward.33} parent=0 // pred_check_branch
    %9 = sbr.rel (0) target = $region5
  $region4: #{transformer_forward.33} parent=0 // pred_region
    _
  $region5: #{transformer_forward.33} parent=0 // pred_fallthru
    _
  // Predicated region
  $region6: #{transformer_forward.33} parent=0 // pred_check
    _
  $region7: #{transformer_forward.33} parent=0 // pred_check_branch
    %11 = sbr.rel (0) target = $region9
  $region8: #{transformer_forward.33} parent=0 // pred_region
    _
  $region9: #{transformer_forward.33} parent=0 // pred_fallthru
    _
  // Predicated region
  $region10: #{transformer_forward.33} parent=0 // pred_check
    _
  $region11: #{transformer_forward.33} parent=0 // pred_check_branch
    %13 = sbr.rel (0) target = $region13
  $region12: #{transformer_forward.33} parent=0 // pred_region
    _
  $region13: #{transformer_forward.33} parent=0 // pred_fallthru
    _
  %p15 = scmp.eq.s32.totalorder 0, 0
  // Predicated region
  $region14: #{transformer_forward.33} parent=0 // pred_check
    %p16 = pneg %p15
  $region15: #{transformer_forward.33} parent=0 // pred_check_branch
    %18 = sbr.rel (%p16) target = $region17
  $region16: #{transformer_forward.33} parent=0 // pred_region
    %v19 = vld [vmem:[%s2] sm:$0x1]
    %v21 = vlaneseq
    %v22 = vshrl.u32 %v21, 7
    %v23 = vsub.s32 0, %v22
    %v24 = vrot.slane %v19, %v23
    %26 = vst [vmem:[%s3] sm:$0xff] %v24
    %27 = vst [vmem:[%s3 + $0x8] sm:$0xff] %v24
  $region17: #{transformer_forward.33} parent=0 // pred_fallthru
    _
  %v28 = vld [vmem:[%s3] sm:$0xff]
  %v29 = vld [vmem:[%s3 + $0x8] sm:$0xff]
  %v30 = vld [vmem:[%s0] sm:$0xf]
  %v31 = vld [vmem:[%s0 + $0x4] sm:$0xf]
  %v32 = vld [vmem:[%s1] sm:$0xf]
  %v33 = vld [vmem:[%s1 + $0x4] sm:$0xf]
  %v34 = vld [vmem:[%s1 + $0x8] sm:$0xf]
  %v35 = vld [vmem:[%s1 + $0xc] sm:$0xf]
  %v36 = vld [vmem:[%s1 + $0x10] sm:$0xf]
  %v37 = vld [vmem:[%s1 + $0x14] sm:$0xf]
  %v38 = vld [vmem:[%s1 + $0x18] sm:$0xf]
  %v39 = vld [vmem:[%s1 + $0x1c] sm:$0xf]
  %v40 = vld [vmem:[%s1 + $0x20] sm:$0xf]
  %v41 = vld [vmem:[%s1 + $0x24] sm:$0xf]
  %v42 = vld [vmem:[%s1 + $0x28] sm:$0xf]
  %v43 = vld [vmem:[%s1 + $0x2c] sm:$0xf]
  %v44 = vld [vmem:[%s1 + $0x30] sm:$0xf]
  %v45 = vld [vmem:[%s1 + $0x34] sm:$0xf]
  %v46 = vld [vmem:[%s1 + $0x38] sm:$0xf]
  %v47 = vld [vmem:[%s1 + $0x3c] sm:$0xf]
  %v50 = vunpack.c.l.b16 %v30
  %v51 = vunpack.c.l.b16 %v31
  %v52 = vpack.c.b16 %v51, %v50
  %v70 = vunpack.c.l.b16 %v32
  %v71 = vunpack.c.l.b16 %v33
  %v72 = vunpack.c.l.b16 %v34
  %v73 = vunpack.c.l.b16 %v35
  %v74 = vunpack.c.l.b16 %v36
  %v75 = vunpack.c.l.b16 %v37
  %v76 = vunpack.c.l.b16 %v38
  %v77 = vunpack.c.l.b16 %v39
  %v78 = vunpack.c.l.b16 %v40
  %v79 = vunpack.c.l.b16 %v41
  %v80 = vunpack.c.l.b16 %v42
  %v81 = vunpack.c.l.b16 %v43
  %v82 = vunpack.c.l.b16 %v44
  %v83 = vunpack.c.l.b16 %v45
  %v84 = vunpack.c.l.b16 %v46
  %v85 = vunpack.c.l.b16 %v47
  %v86 = vpack.c.b16 %v71, %v70
  %v87 = vpack.c.b16 %v73, %v72
  %v88 = vpack.c.b16 %v75, %v74
  %v89 = vpack.c.b16 %v77, %v76
  %v90 = vpack.c.b16 %v79, %v78
  %v91 = vpack.c.b16 %v81, %v80
  %v92 = vpack.c.b16 %v83, %v82
  %v93 = vpack.c.b16 %v85, %v84
  %102 = vmatprep.subr.bf16.mxu0 0
  %103 = vmatpush1.bf16.msra.mxu0 %v86
  %104 = vmatprep.subr.bf16.mxu0 0
  %105 = vmatpush1.bf16.msra.mxu0 %v87
  %106 = vmatprep.subr.bf16.mxu0 0
  %107 = vmatpush1.bf16.msra.mxu0 %v88
  %108 = vmatprep.subr.bf16.mxu0 0
  %109 = vmatpush1.bf16.msra.mxu0 %v89
  %110 = vmatprep.subr.bf16.mxu0 0
  %111 = vmatpush1.bf16.msra.mxu0 %v90
  %112 = vmatprep.subr.bf16.mxu0 0
  %113 = vmatpush1.bf16.msra.mxu0 %v91
  %114 = vmatprep.subr.bf16.mxu0 0
  %115 = vmatpush1.bf16.msra.mxu0 %v92
  %116 = vmatprep.subr.bf16.mxu0 0
  %117 = vmatpush1.bf16.msra.mxu0 %v93
  %118 = vmatprep.subr.bf16.mxu0 0
  %119 = vmatpush1.bf16.msra.mxu0 0
  %120 = vmatprep.subr.bf16.mxu0 0
  %121 = vmatpush1.bf16.msra.mxu0 0
  %122 = vmatprep.subr.bf16.mxu0 0
  %123 = vmatpush1.bf16.msra.mxu0 0
  %124 = vmatprep.subr.bf16.mxu0 0
  %125 = vmatpush1.bf16.msra.mxu0 0
  %126 = vmatprep.subr.bf16.mxu0 0
  %127 = vmatpush1.bf16.msra.mxu0 0
  %128 = vmatprep.subr.bf16.mxu0 0
  %129 = vmatpush1.bf16.msra.mxu0 0
  %130 = vmatprep.subr.bf16.mxu0 0
  %131 = vmatpush1.bf16.msra.mxu0 0
  %132 = vmatprep.subr.bf16.mxu0 0
  %133 = vmatpush1.bf16.msra.mxu0 0
  %134 = vmatprep.mubr.bf16.mxu0 0
  %135 = vmatmul.mubr.bf16.gmra.mrb[0].mxu0 %v52
  %v136 = vpop.f32.mrb[0].mxu0
  %v137 = vadd.f32 0.0, %v136
  %v138 = vpop.f32.mrb[0].mxu0
  %v139 = vpop.f32.mrb[0].mxu0
  %v140 = vadd.f32 0.0, %v139
  %v141 = vpop.f32.mrb[0].mxu0
  %142 = vdwg.mxu0
  %v143 = vadd.f32 %v28, %v137
  %v144 = vadd.f32 %v29, %v140
  %145 = vst [vmem:[%s3] sm:$0xff] %v143
  %146 = vst [vmem:[%s3 + $0x8] sm:$0xff] %v144
  // Predicated region
  $region18: #{transformer_forward.33} parent=0 // pred_check
    _
  $region19: #{transformer_forward.33} parent=0 // pred_check_branch
    %148 = sbr.rel (0) target = $region21
  $region20: #{transformer_forward.33} parent=0 // pred_region
    _
  $region21: #{transformer_forward.33} parent=0 // pred_fallthru
    _
  // Predicated region
  $region22: #{transformer_forward.33} parent=0 // pred_check
    _
  $region23: #{transformer_forward.33} parent=0 // pred_check_branch
    %150 = sbr.rel (0) target = $region25
  $region24: #{transformer_forward.33} parent=0 // pred_region
    _
  $region25: #{transformer_forward.33} parent=0 // pred_fallthru
    _

// kernel: transformer_forward.25
$region0: #{transformer_forward.25}
  #allocation0 [shape = 'u32[]', space=smem, size = 0x4, offset = 0x4, fixed_abs, tag = 'smem constant byte address 0x4 - core index']
  #allocation1 [shape = 'u32[144,128]{1,0:T(1,128)}', space=vmem, size = 0x12000, scoped, tag = 'internal scratch']
  %s0 = inlined_call_operand.vmem [shape: s32[2,1,8], index: 0, kind: input, shape index: {}]
  %s1 = inlined_call_operand.vmem [shape: bf16[2,8,128], index: 1, kind: input, shape index: {}]
  %s2 = inlined_call_operand.vmem [shape: bf16[2,8,128], index: 2, kind: input, shape index: {}]
  %s3 = inlined_call_operand.vmem [shape: bf16[128,128], index: 3, kind: input, shape index: {}]
  %s4 = inlined_call_operand.vmem [shape: f32[1,128], index: 4, kind: input, shape index: {}]
  %s5 = inlined_call_operand.vmem [shape: bf16[128,256], index: 5, kind: input, shape index: {}]
  %s6 = inlined_call_operand.vmem [shape: f32[1,256], index: 6, kind: input, shape index: {}]
  %s7 = inlined_call_operand.vmem [shape: bf16[2,8,128], index: 7, kind: output, shape index: {}]
  %s8 = sld [smem:[#allocation0]]
  $region61: #{transformer_forward.25} parent=0
    _
  %s10 = ssub.s32 1, %s8
  %s11 = scalar_select 0, %s10, %s8
  loop: start=0, step=1, limit=4
  $region2: #{transformer_forward.25} parent=0 // loop_pre_header
    _
  $region3: #{transformer_forward.25} parent=0 // loop_header
    %s13 = sphi 0, %s17
    %p14 = scmp.ge.s32.totalorder %s13, 4
    %s23 = sphi 0, %s25
    %s26 = sphi 0, %s23
    %s27 = sphi 0, %s26
    %s43 = sphi 0, %s27
    %s49 = sphi 0, %s51
    %s52 = sphi 0, %s49
    %s53 = sphi 0, %s52
    %s69 = sphi 0, %s53
    %s75 = sphi 0, %s77
    %s78 = sphi 0, %s75
    %s79 = sphi 0, %s78
    %s95 = sphi 0, %s79
    %s99 = sphi 0, %s99
    %s101 = sphi 0, %s99
    %s102 = sphi 0, %s101
    %s116 = sphi 0, %s102
    %s120 = sphi 0, %s120
    %s122 = sphi 0, %s120
    %s123 = sphi 0, %s122
    %s137 = sphi 0, %s123
    %s141 = sphi 0, %s141
    %s143 = sphi 0, %s141
    %s144 = sphi 0, %s143
    %s158 = sphi 0, %s144
    %s162 = sphi 0, %s162
    %s164 = sphi 0, %s162
    %s165 = sphi 0, %s164
    %s179 = sphi 0, %s165
    %s185 = sphi 0, %s187
    %s188 = sphi 0, %s185
    %s189 = sphi 0, %s188
    %s205 = sphi 0, %s189
  $region4: #{transformer_forward.25} parent=0 // loop_header_branch
    %16 = sbr.rel (%p14) target = $region8
  $region5: #{transformer_forward.25} parent=0 // loop_body
    %s18 = ssub.s32 %s13, 1
    %s19 = ssub.s32 %s13, 2
    %s20 = sadd.s32 %s13, 1
    %s21 = ssub.s32 %s13, %s20
    %p22 = scmp.eq.s32.totalorder %s21, 0
    %s24 = sadd.s32 %s23, 1
    %s25 = scalar_select %p22, %s23, %s24
    %p28 = pneg %p22
    %p29 = scmp.eq.s32.totalorder %s13, 1
    %p30 = por %p28, %p29
    %p31 = scmp.ne.s32.totalorder %s23, %s26
    %p32 = scmp.eq.s32.totalorder %s13, 0
    %p33 = por %p31, %p32
    %p34 = scmp.ne.s32.totalorder %s23, %s26
    %p35 = scmp.eq.s32.totalorder %s18, 1
    %p36 = por %p34, %p35
    %p37 = scmp.ne.s32.totalorder %s26, %s27
    %p38 = scmp.eq.s32.totalorder %s18, 0
    %p39 = por %p37, %p38
    %p40 = scmp.ne.s32.totalorder %s26, %s27
    %p41 = scmp.eq.s32.totalorder %s19, 1
    %p42 = por %p40, %p41
    %p44 = scmp.ne.s32.totalorder %s27, %s43
    %p45 = scmp.eq.s32.totalorder %s19, 0
    %p46 = por %p44, %p45
    %s47 = ssub.s32 %s13, %s20
    %p48 = scmp.eq.s32.totalorder %s47, 0
    %s50 = sadd.s32 %s49, 1
    %s51 = scalar_select %p48, %s49, %s50
    %p54 = pneg %p48
    %p55 = scmp.eq.s32.totalorder %s13, 1
    %p56 = por %p54, %p55
    %p57 = scmp.ne.s32.totalorder %s49, %s52
    %p58 = scmp.eq.s32.totalorder %s13, 0
    %p59 = por %p57, %p58
    %p60 = scmp.ne.s32.totalorder %s49, %s52
    %p61 = scmp.eq.s32.totalorder %s18, 1
    %p62 = por %p60, %p61
    %p63 = scmp.ne.s32.totalorder %s52, %s53
    %p64 = scmp.eq.s32.totalorder %s18, 0
    %p65 = por %p63, %p64
    %p66 = scmp.ne.s32.totalorder %s52, %s53
    %p67 = scmp.eq.s32.totalorder %s19, 1
    %p68 = por %p66, %p67
    %p70 = scmp.ne.s32.totalorder %s53, %s69
    %p71 = scmp.eq.s32.totalorder %s19, 0
    %p72 = por %p70, %p71
    %s73 = ssub.s32 %s13, %s20
    %p74 = scmp.eq.s32.totalorder %s73, 0
    %s76 = sadd.s32 %s75, 1
    %s77 = scalar_select %p74, %s75, %s76
    %p80 = pneg %p74
    %p81 = scmp.eq.s32.totalorder %s13, 1
    %p82 = por %p80, %p81
    %p83 = scmp.ne.s32.totalorder %s75, %s78
    %p84 = scmp.eq.s32.totalorder %s13, 0
    %p85 = por %p83, %p84
    %p86 = scmp.ne.s32.totalorder %s75, %s78
    %p87 = scmp.eq.s32.totalorder %s18, 1
    %p88 = por %p86, %p87
    %p89 = scmp.ne.s32.totalorder %s78, %s79
    %p90 = scmp.eq.s32.totalorder %s18, 0
    %p91 = por %p89, %p90
    %p92 = scmp.ne.s32.totalorder %s78, %s79
    %p93 = scmp.eq.s32.totalorder %s19, 1
    %p94 = por %p92, %p93
    %p96 = scmp.ne.s32.totalorder %s79, %s95
    %p97 = scmp.eq.s32.totalorder %s19, 0
    %p98 = por %p96, %p97
    %s100 = sadd.s32 %s99, 1
    %p103 = scmp.eq.s32.totalorder %s13, 1
    %p104 = scmp.ne.s32.totalorder %s99, %s101
    %p105 = scmp.eq.s32.totalorder %s13, 0
    %p106 = por %p104, %p105
    %p107 = scmp.ne.s32.totalorder %s99, %s101
    %p108 = scmp.eq.s32.totalorder %s18, 1
    %p109 = por %p107, %p108
    %p110 = scmp.ne.s32.totalorder %s101, %s102
    %p111 = scmp.eq.s32.totalorder %s18, 0
    %p112 = por %p110, %p111
    %p113 = scmp.ne.s32.totalorder %s101, %s102
    %p114 = scmp.eq.s32.totalorder %s19, 1
    %p115 = por %p113, %p114
    %p117 = scmp.ne.s32.totalorder %s102, %s116
    %p118 = scmp.eq.s32.totalorder %s19, 0
    %p119 = por %p117, %p118
    %s121 = sadd.s32 %s120, 1
    %p124 = scmp.eq.s32.totalorder %s13, 1
    %p125 = scmp.ne.s32.totalorder %s120, %s122
    %p126 = scmp.eq.s32.totalorder %s13, 0
    %p127 = por %p125, %p126
    %p128 = scmp.ne.s32.totalorder %s120, %s122
    %p129 = scmp.eq.s32.totalorder %s18, 1
    %p130 = por %p128, %p129
    %p131 = scmp.ne.s32.totalorder %s122, %s123
    %p132 = scmp.eq.s32.totalorder %s18, 0
    %p133 = por %p131, %p132
    %p134 = scmp.ne.s32.totalorder %s122, %s123
    %p135 = scmp.eq.s32.totalorder %s19, 1
    %p136 = por %p134, %p135
    %p138 = scmp.ne.s32.totalorder %s123, %s137
    %p139 = scmp.eq.s32.totalorder %s19, 0
    %p140 = por %p138, %p139
    %s142 = sadd.s32 %s141, 1
    %p145 = scmp.eq.s32.totalorder %s13, 1
    %p146 = scmp.ne.s32.totalorder %s141, %s143
    %p147 = scmp.eq.s32.totalorder %s13, 0
    %p148 = por %p146, %p147
    %p149 = scmp.ne.s32.totalorder %s141, %s143
    %p150 = scmp.eq.s32.totalorder %s18, 1
    %p151 = por %p149, %p150
    %p152 = scmp.ne.s32.totalorder %s143, %s144
    %p153 = scmp.eq.s32.totalorder %s18, 0
    %p154 = por %p152, %p153
    %p155 = scmp.ne.s32.totalorder %s143, %s144
    %p156 = scmp.eq.s32.totalorder %s19, 1
    %p157 = por %p155, %p156
    %p159 = scmp.ne.s32.totalorder %s144, %s158
    %p160 = scmp.eq.s32.totalorder %s19, 0
    %p161 = por %p159, %p160
    %s163 = sadd.s32 %s162, 1
    %p166 = scmp.eq.s32.totalorder %s13, 1
    %p167 = scmp.ne.s32.totalorder %s162, %s164
    %p168 = scmp.eq.s32.totalorder %s13, 0
    %p169 = por %p167, %p168
    %p170 = scmp.ne.s32.totalorder %s162, %s164
    %p171 = scmp.eq.s32.totalorder %s18, 1
    %p172 = por %p170, %p171
    %p173 = scmp.ne.s32.totalorder %s164, %s165
    %p174 = scmp.eq.s32.totalorder %s18, 0
    %p175 = por %p173, %p174
    %p176 = scmp.ne.s32.totalorder %s164, %s165
    %p177 = scmp.eq.s32.totalorder %s19, 1
    %p178 = por %p176, %p177
    %p180 = scmp.ne.s32.totalorder %s165, %s179
    %p181 = scmp.eq.s32.totalorder %s19, 0
    %p182 = por %p180, %p181
    %s183 = ssub.s32 %s13, %s20
    %p184 = scmp.eq.s32.totalorder %s183, 0
    %s186 = sadd.s32 %s185, 1
    %s187 = scalar_select %p184, %s185, %s186
    %p190 = pneg %p184
    %p191 = scmp.eq.s32.totalorder %s13, 1
    %p192 = por %p190, %p191
    %p193 = scmp.ne.s32.totalorder %s185, %s188
    %p194 = scmp.eq.s32.totalorder %s13, 0
    %p195 = por %p193, %p194
    %p196 = scmp.ne.s32.totalorder %s185, %s188
    %p197 = scmp.eq.s32.totalorder %s18, 1
    %p198 = por %p196, %p197
    %p199 = scmp.ne.s32.totalorder %s188, %s189
    %p200 = scmp.eq.s32.totalorder %s18, 0
    %p201 = por %p199, %p200
    %p202 = scmp.ne.s32.totalorder %s188, %s189
    %p203 = scmp.eq.s32.totalorder %s19, 1
    %p204 = por %p202, %p203
    %p206 = scmp.ne.s32.totalorder %s189, %s205
    %p207 = scmp.eq.s32.totalorder %s19, 0
    %p208 = por %p206, %p207
    %p209 = scmp.le.s32.totalorder 1, %s13
    %p210 = scmp.lt.s32.totalorder %s13, 3
    %p211 = pnand %p209, %p210
    %p212 = pneg %p211
    // Predicated region
    $region9: #{transformer_forward.25} parent=5 // pred_check
      _
    $region10: #{transformer_forward.25} parent=5 // pred_check_branch
      %214 = sbr.rel (%p211) target = $region12
    $region11: #{transformer_forward.25} parent=5 // pred_region
      %s215 = ssub.s32 %s13, 1
      // Predicated region
      $region13: #{transformer_forward.25} parent=11 // pred_check
        %p216 = pneg %p112
      $region14: #{transformer_forward.25} parent=11 // pred_check_branch
        %218 = sbr.rel (%p216) target = $region16
      $region15: #{transformer_forward.25} parent=11 // pred_region
        _
      $region16: #{transformer_forward.25} parent=11 // pred_fallthru
        _
      // Predicated region
      $region17: #{transformer_forward.25} parent=11 // pred_check
        %p219 = pneg %p133
      $region18: #{transformer_forward.25} parent=11 // pred_check_branch
        %221 = sbr.rel (%p219) target = $region20
      $region19: #{transformer_forward.25} parent=11 // pred_region
        _
      $region20: #{transformer_forward.25} parent=11 // pred_fallthru
        _
      // Predicated region
      $region21: #{transformer_forward.25} parent=11 // pred_check
        %p222 = pneg %p154
      $region22: #{transformer_forward.25} parent=11 // pred_check_branch
        %224 = sbr.rel (%p222) target = $region24
      $region23: #{transformer_forward.25} parent=11 // pred_region
        _
      $region24: #{transformer_forward.25} parent=11 // pred_fallthru
        _
      // Predicated region
      $region25: #{transformer_forward.25} parent=11 // pred_check
        %p225 = pneg %p175
      $region26: #{transformer_forward.25} parent=11 // pred_check_branch
        %227 = sbr.rel (%p225) target = $region28
      $region27: #{transformer_forward.25} parent=11 // pred_region
        _
      $region28: #{transformer_forward.25} parent=11 // pred_fallthru
        _
    $region12: #{transformer_forward.25} parent=5 // pred_fallthru
      _
    %p228 = scmp.lt.s32.totalorder %s13, 2
    // Predicated region
    $region29: #{transformer_forward.25} parent=5 // pred_check
      %p229 = pneg %p228
    $region30: #{transformer_forward.25} parent=5 // pred_check_branch
      %231 = sbr.rel (%p229) target = $region32
    $region31: #{transformer_forward.25} parent=5 // pred_region
      // Predicated region
      $region33: #{transformer_forward.25} parent=31 // pred_check
        %p232 = pneg %p33
      $region34: #{transformer_forward.25} parent=31 // pred_check_branch
        %234 = sbr.rel (%p232) target = $region36
      $region35: #{transformer_forward.25} parent=31 // pred_region
        %p235 = scmp.lt.s32.totalorder %s13, 1
        %s236 = scalar_select %p235, %s13, 1
        %s237 = scalar_lea.vmem %s0, %s236
      $region36: #{transformer_forward.25} parent=31 // pred_fallthru
        _
      // Predicated region
      $region37: #{transformer_forward.25} parent=31 // pred_check
        %p238 = pneg %p59
      $region38: #{transformer_forward.25} parent=31 // pred_check_branch
        %240 = sbr.rel (%p238) target = $region40
      $region39: #{transformer_forward.25} parent=31 // pred_region
        %p241 = scmp.lt.s32.totalorder %s13, 1
        %s242 = scalar_select %p241, %s13, 1
        %s243 = smul.addr %s242, 4
        %s244 = scalar_lea.vmem %s1, %s243
      $region40: #{transformer_forward.25} parent=31 // pred_fallthru
        _
      // Predicated region
      $region41: #{transformer_forward.25} parent=31 // pred_check
        %p245 = pneg %p85
      $region42: #{transformer_forward.25} parent=31 // pred_check_branch
        %247 = sbr.rel (%p245) target = $region44
      $region43: #{transformer_forward.25} parent=31 // pred_region
        %p248 = scmp.lt.s32.totalorder %s13, 1
        %s249 = scalar_select %p248, %s13, 1
        %s250 = smul.addr %s249, 4
        %s251 = scalar_lea.vmem %s2, %s250
      $region44: #{transformer_forward.25} parent=31 // pred_fallthru
        _
    $region32: #{transformer_forward.25} parent=5 // pred_fallthru
      _
    %p252 = scmp.le.s32.totalorder 1, %s13
    %p253 = scmp.lt.s32.totalorder %s13, 3
    %p254 = pnand %p252, %p253
    %p255 = pneg %p254
    // Predicated region
    $region45: #{transformer_forward.25} parent=5 // pred_check
      _
    $region46: #{transformer_forward.25} parent=5 // pred_check_branch
      %257 = sbr.rel (%p254) target = $region48
    $region47: #{transformer_forward.25} parent=5 // pred_region
      %s258 = ssub.s32 %s13, 1
      %p259 = scmp.lt.s32.totalorder %s18, 1
      %s260 = scalar_select %p259, %s18, 1
      %s261 = scalar_lea.vmem %s0, %s260
      %p262 = pneg %p39
      %p263 = pneg %p36
      %p264 = scmp.lt.s32.totalorder %s18, 1
      %s265 = scalar_select %p264, %s18, 1
      %s266 = smul.addr %s265, 4
      %s267 = scalar_lea.vmem %s1, %s266
      %p268 = pneg %p65
      %p269 = pneg %p62
      %p270 = scmp.lt.s32.totalorder %s18, 1
      %s271 = scalar_select %p270, %s18, 1
      %s272 = smul.addr %s271, 4
      %s273 = scalar_lea.vmem %s2, %s272
      %p274 = pneg %p91
      %p275 = pneg %p88
      %p276 = pneg %p112
      %p277 = pneg %p109
      %p278 = pneg %p133
      %p279 = pneg %p130
      %p280 = pneg %p154
      %p281 = pneg %p151
      %p282 = pneg %p175
      %p283 = pneg %p172
      %p284 = pneg %p201
      %p285 = pneg %p198
      %p286 = scmp.lt.s32.totalorder %s18, 1
      %s287 = scalar_select %p286, %s18, 1
      %s288 = smul.addr %s287, 4
      %s289 = scalar_lea.vmem %s7, %s288
      %p290 = scmp.lt.s32.totalorder %s18, 1
      %s291 = scalar_select %p290, %s18, 1
      %s292 = scalar_lea.vmem %s0, %s291
      %p293 = scmp.lt.s32.totalorder %s18, 1
      %s294 = scalar_select %p293, %s18, 1
      %s295 = smul.addr %s294, 4
      %s296 = scalar_lea.vmem %s1, %s295
      %p297 = scmp.lt.s32.totalorder %s18, 1
      %s298 = scalar_select %p297, %s18, 1
      %s299 = smul.addr %s298, 4
      %s300 = scalar_lea.vmem %s2, %s299
      %p301 = scmp.lt.s32.totalorder %s18, 1
      %s302 = scalar_select %p301, %s18, 1
      %s303 = smul.addr %s302, 4
      %s304 = scalar_lea.vmem %s7, %s303
      %v306 = vld [vmem:[%s296] sm:$0xf]
      %v307 = vld [vmem:[%s300] sm:$0xf]
      %v308 = vld [vmem:[%s3] sm:$0xf]
      %v309 = vld [vmem:[%s3 + $0x4] sm:$0xf]
      %v310 = vld [vmem:[%s3 + $0x8] sm:$0xf]
      %v311 = vld [vmem:[%s3 + $0xc] sm:$0xf]
      %v312 = vld [vmem:[%s3 + $0x10] sm:$0xf]
      %v313 = vld [vmem:[%s3 + $0x14] sm:$0xf]
      %v314 = vld [vmem:[%s3 + $0x18] sm:$0xf]
      %v315 = vld [vmem:[%s3 + $0x1c] sm:$0xf]
      %v316 = vld [vmem:[%s3 + $0x20] sm:$0xf]
      %v317 = vld [vmem:[%s3 + $0x24] sm:$0xf]
      %v318 = vld [vmem:[%s3 + $0x28] sm:$0xf]
      %v319 = vld [vmem:[%s3 + $0x2c] sm:$0xf]
      %v320 = vld [vmem:[%s3 + $0x30] sm:$0xf]
      %v321 = vld [vmem:[%s3 + $0x34] sm:$0xf]
      %v322 = vld [vmem:[%s3 + $0x38] sm:$0xf]
      %v323 = vld [vmem:[%s3 + $0x3c] sm:$0xf]
      %v324 = vld [vmem:[%s4] sm:$0x1]
      %v326 = vlaneseq
      %v327 = vshrl.u32 %v326, 7
      %v328 = vsub.s32 0, %v327
      %v329 = vrot.slane %v324, %v328
      %v347 = vunpack.c.l.b16 %v308
      %v348 = vunpack.c.l.b16 %v309
      %v349 = vunpack.c.l.b16 %v310
      %v350 = vunpack.c.l.b16 %v311
      %v351 = vunpack.c.l.b16 %v312
      %v352 = vunpack.c.l.b16 %v313
      %v353 = vunpack.c.l.b16 %v314
      %v354 = vunpack.c.l.b16 %v315
      %v355 = vunpack.c.l.b16 %v316
      %v356 = vunpack.c.l.b16 %v317
      %v357 = vunpack.c.l.b16 %v318
      %v358 = vunpack.c.l.b16 %v319
      %v359 = vunpack.c.l.b16 %v320
      %v360 = vunpack.c.l.b16 %v321
      %v361 = vunpack.c.l.b16 %v322
      %v362 = vunpack.c.l.b16 %v323
      %v363 = vpack.c.b16 %v348, %v347
      %v364 = vpack.c.b16 %v350, %v349
      %v365 = vpack.c.b16 %v352, %v351
      %v366 = vpack.c.b16 %v354, %v353
      %v367 = vpack.c.b16 %v356, %v355
      %v368 = vpack.c.b16 %v358, %v357
      %v369 = vpack.c.b16 %v360, %v359
      %v370 = vpack.c.b16 %v362, %v361
      %379 = vmatprep.subr.bf16.mxu0 0
      %380 = vmatpush1.bf16.msra.mxu0 %v363
      %381 = vmatprep.subr.bf16.mxu0 0
      %382 = vmatpush1.bf16.msra.mxu0 %v364
      %383 = vmatprep.subr.bf16.mxu0 0
      %384 = vmatpush1.bf16.msra.mxu0 %v365
      %385 = vmatprep.subr.bf16.mxu0 0
      %386 = vmatpush1.bf16.msra.mxu0 %v366
      %387 = vmatprep.subr.bf16.mxu0 0
      %388 = vmatpush1.bf16.msra.mxu0 %v367
      %389 = vmatprep.subr.bf16.mxu0 0
      %390 = vmatpush1.bf16.msra.mxu0 %v368
      %391 = vmatprep.subr.bf16.mxu0 0
      %392 = vmatpush1.bf16.msra.mxu0 %v369
      %393 = vmatprep.subr.bf16.mxu0 0
      %394 = vmatpush1.bf16.msra.mxu0 %v370
      %395 = vmatprep.subr.bf16.mxu0 0
      %396 = vmatpush1.bf16.msra.mxu0 0
      %397 = vmatprep.subr.bf16.mxu0 0
      %398 = vmatpush1.bf16.msra.mxu0 0
      %399 = vmatprep.subr.bf16.mxu0 0
      %400 = vmatpush1.bf16.msra.mxu0 0
      %401 = vmatprep.subr.bf16.mxu0 0
      %402 = vmatpush1.bf16.msra.mxu0 0
      %403 = vmatprep.subr.bf16.mxu0 0
      %404 = vmatpush1.bf16.msra.mxu0 0
      %405 = vmatprep.subr.bf16.mxu0 0
      %406 = vmatpush1.bf16.msra.mxu0 0
      %407 = vmatprep.subr.bf16.mxu0 0
      %408 = vmatpush1.bf16.msra.mxu0 0
      %409 = vmatprep.subr.bf16.mxu0 0
      %410 = vmatpush1.bf16.msra.mxu0 0
      %411 = vmatprep.mubr.bf16.mxu0 0
      %412 = vmatmul.mubr.bf16.gmra.mrb[0].mxu0 %v306
      %v413 = vpop.f32.mrb[0].mxu0
      %v414 = vadd.f32 %v329, %v413
      %v415 = vpop.f32.mrb[0].mxu0
      %v416 = vpop.f32.mrb[0].mxu0
      %v417 = vpop.f32.mrb[0].mxu0
      %418 = vdwg.mxu0
      %v419 = vpack.c.bf16 %v414, %v414
      %v420 = vld [vmem:[%s5] sm:$0xff]
      %v421 = vld [vmem:[%s5 + $0x8] sm:$0xff]
      %v422 = vld [vmem:[%s5 + $0x10] sm:$0xff]
      %v423 = vld [vmem:[%s5 + $0x18] sm:$0xff]
      %v424 = vld [vmem:[%s5 + $0x20] sm:$0xff]
      %v425 = vld [vmem:[%s5 + $0x28] sm:$0xff]
      %v426 = vld [vmem:[%s5 + $0x30] sm:$0xff]
      %v427 = vld [vmem:[%s5 + $0x38] sm:$0xff]
      %v428 = vld [vmem:[%s5 + $0x40] sm:$0xff]
      %v429 = vld [vmem:[%s5 + $0x48] sm:$0xff]
      %v430 = vld [vmem:[%s5 + $0x50] sm:$0xff]
      %v431 = vld [vmem:[%s5 + $0x58] sm:$0xff]
      %v432 = vld [vmem:[%s5 + $0x60] sm:$0xff]
      %v433 = vld [vmem:[%s5 + $0x68] sm:$0xff]
      %v434 = vld [vmem:[%s5 + $0x70] sm:$0xff]
      %v435 = vld [vmem:[%s5 + $0x78] sm:$0xff]
      %v436 = vld [vmem:[%s6] sm:$0x3]
      %v438 = vlaneseq
      %v439 = vshrl.u32 %v438, 7
      %v440 = vsub.s32 0, %v439
      %v441 = vrot.slane %v436, %v440
      %v442 = vlaneseq
      %v443 = vshrl.u32 %v442, 7
      %v444 = vsub.s32 1, %v443
      %v445 = vrot.slane %v436, %v444
      %v464 = vunpack.c.l.b16 %v420
      %v465 = vunpack.c.h.b16 %v420
      %v466 = vunpack.c.l.b16 %v421
      %v467 = vunpack.c.h.b16 %v421
      %v468 = vunpack.c.l.b16 %v422
      %v469 = vunpack.c.h.b16 %v422
      %v470 = vunpack.c.l.b16 %v423
      %v471 = vunpack.c.h.b16 %v423
      %v472 = vunpack.c.l.b16 %v424
      %v473 = vunpack.c.h.b16 %v424
      %v474 = vunpack.c.l.b16 %v425
      %v475 = vunpack.c.h.b16 %v425
      %v476 = vunpack.c.l.b16 %v426
      %v477 = vunpack.c.h.b16 %v426
      %v478 = vunpack.c.l.b16 %v427
      %v479 = vunpack.c.h.b16 %v427
      %v480 = vunpack.c.l.b16 %v428
      %v481 = vunpack.c.h.b16 %v428
      %v482 = vunpack.c.l.b16 %v429
      %v483 = vunpack.c.h.b16 %v429
      %v484 = vunpack.c.l.b16 %v430
      %v485 = vunpack.c.h.b16 %v430
      %v486 = vunpack.c.l.b16 %v431
      %v487 = vunpack.c.h.b16 %v431
      %v488 = vunpack.c.l.b16 %v432
      %v489 = vunpack.c.h.b16 %v432
      %v490 = vunpack.c.l.b16 %v433
      %v491 = vunpack.c.h.b16 %v433
      %v492 = vunpack.c.l.b16 %v434
      %v493 = vunpack.c.h.b16 %v434
      %v494 = vunpack.c.l.b16 %v435
      %v495 = vunpack.c.h.b16 %v435
      %v496 = vpack.c.b16 %v466, %v464
      %v497 = vpack.c.b16 %v467, %v465
      %v498 = vpack.c.b16 %v470, %v468
      %v499 = vpack.c.b16 %v471, %v469
      %v500 = vpack.c.b16 %v474, %v472
      %v501 = vpack.c.b16 %v475, %v473
      %v502 = vpack.c.b16 %v478, %v476
      %v503 = vpack.c.b16 %v479, %v477
      %v504 = vpack.c.b16 %v482, %v480
      %v505 = vpack.c.b16 %v483, %v481
      %v506 = vpack.c.b16 %v486, %v484
      %v507 = vpack.c.b16 %v487, %v485
      %v508 = vpack.c.b16 %v490, %v488
      %v509 = vpack.c.b16 %v491, %v489
      %v510 = vpack.c.b16 %v494, %v492
      %v511 = vpack.c.b16 %v495, %v493
      %528 = vmatprep.subr.bf16.mxu0 %v497
      %529 = vmatpush1.bf16.msra.mxu0 %v496
      %530 = vmatprep.subr.bf16.mxu0 %v499
      %531 = vmatpush1.bf16.msra.mxu0 %v498
      %532 = vmatprep.subr.bf16.mxu0 %v501
      %533 = vmatpush1.bf16.msra.mxu0 %v500
      %534 = vmatprep.subr.bf16.mxu0 %v503
      %535 = vmatpush1.bf16.msra.mxu0 %v502
      %536 = vmatprep.subr.bf16.mxu0 %v505
      %537 = vmatpush1.bf16.msra.mxu0 %v504
      %538 = vmatprep.subr.bf16.mxu0 %v507
      %539 = vmatpush1.bf16.msra.mxu0 %v506
      %540 = vmatprep.subr.bf16.mxu0 %v509
      %541 = vmatpush1.bf16.msra.mxu0 %v508
      %542 = vmatprep.subr.bf16.mxu0 %v511
      %543 = vmatpush1.bf16.msra.mxu0 %v510
      %544 = vmatprep.subr.bf16.mxu0 0
      %545 = vmatpush1.bf16.msra.mxu0 0
      %546 = vmatprep.subr.bf16.mxu0 0
      %547 = vmatpush1.bf16.msra.mxu0 0
      %548 = vmatprep.subr.bf16.mxu0 0
      %549 = vmatpush1.bf16.msra.mxu0 0
      %550 = vmatprep.subr.bf16.mxu0 0
      %551 = vmatpush1.bf16.msra.mxu0 0
      %552 = vmatprep.subr.bf16.mxu0 0
      %553 = vmatpush1.bf16.msra.mxu0 0
      %554 = vmatprep.subr.bf16.mxu0 0
      %555 = vmatpush1.bf16.msra.mxu0 0
      %556 = vmatprep.subr.bf16.mxu0 0
      %557 = vmatpush1.bf16.msra.mxu0 0
      %558 = vmatprep.subr.bf16.mxu0 0
      %559 = vmatpush1.bf16.msra.mxu0 0
      %560 = vmatprep.mubr.bf16.mxu0 0
      %561 = vmatmul.mubr.bf16.gmra.mrb[0].mxu0 %v307
      %v562 = vpop.f32.mrb[0].mxu0
      %v563 = vadd.f32 %v441, %v562
      %v564 = vpop.f32.mrb[0].mxu0
      %v565 = vadd.f32 %v445, %v564
      %v566 = vpop.f32.mrb[0].mxu0
      %v567 = vpop.f32.mrb[0].mxu0
      %568 = vdwg.mxu0
      %v569 = vpack.c.bf16 %v563, %v563
      %v570 = vpack.c.bf16 %v565, %v565
      %v571 = vld [vmem:[%s292] sm:$0x1]
      %vm572 = vcmp.ne.s32.totalorder %v571, 4294967295
      %573 = vst [vmem:[%s304] sm:$0xf] 0
      %vm574 = vcmask 64512
      %v576 = vsel %vm574, %v419, 0
      %v579 = vsel %vm574, %v569, 0
      %581 = vmatprep.subr.bf16.mxu0 0
      %582 = vmatpush1.bf16.xpose.msra.mxu0 %v579
      %583 = vmatprep.subr.bf16.mxu0 0
      %584 = vmatpush1.bf16.xpose.msra.mxu0 0
      %585 = vmatprep.subr.bf16.mxu0 0
      %586 = vmatpush1.bf16.xpose.msra.mxu0 0
      %587 = vmatprep.subr.bf16.mxu0 0
      %588 = vmatpush1.bf16.xpose.msra.mxu0 0
      %589 = vmatprep.subr.bf16.mxu0 0
      %590 = vmatpush1.bf16.xpose.msra.mxu0 0
      %591 = vmatprep.subr.bf16.mxu0 0
      %592 = vmatpush1.bf16.xpose.msra.mxu0 0
      %593 = vmatprep.subr.bf16.mxu0 0
      %594 = vmatpush1.bf16.xpose.msra.mxu0 0
      %595 = vmatprep.subr.bf16.mxu0 0
      %596 = vmatpush1.bf16.xpose.msra.mxu0 0
      %597 = vmatprep.subr.bf16.mxu0 0
      %598 = vmatpush1.bf16.xpose.msra.mxu0 0
      %599 = vmatprep.subr.bf16.mxu0 0
      %600 = vmatpush1.bf16.xpose.msra.mxu0 0
      %601 = vmatprep.subr.bf16.mxu0 0
      %602 = vmatpush1.bf16.xpose.msra.mxu0 0
      %603 = vmatprep.subr.bf16.mxu0 0
      %604 = vmatpush1.bf16.xpose.msra.mxu0 0
      %605 = vmatprep.subr.bf16.mxu0 0
      %606 = vmatpush1.bf16.xpose.msra.mxu0 0
      %607 = vmatprep.subr.bf16.mxu0 0
      %608 = vmatpush1.bf16.xpose.msra.mxu0 0
      %609 = vmatprep.subr.bf16.mxu0 0
      %610 = vmatpush1.bf16.xpose.msra.mxu0 0
      %611 = vmatprep.subr.bf16.mxu0 0
      %612 = vmatpush1.bf16.xpose.msra.mxu0 0
      %613 = vmatprep.mubr.bf16.mxu0 0
      %614 = vmatmul.mubr.bf16.gmra.mrb[0].mxu0 %v576
      %v615 = vpop.f32.mrb[0].mxu0
      %v616 = vadd.f32 0.0, %v615
      %v617 = vpop.f32.mrb[0].mxu0
      %v618 = vpop.f32.mrb[0].mxu0
      %v619 = vpop.f32.mrb[0].mxu0
      %620 = vdwg.mxu0
      %v621 = vmul.f32 %v616, 0.35355338
      %v622 = vsel %vm572, 1, 0
      %v623 = vlaneseq
      %v624 = vshrl.u32 %v623, 7
      %v625 = vsub.s32 0, %v624
      %v626 = vrot.slane %v622, %v625
      %vm627 = vcmp.eq.s32.totalorder %v626, 1
      %v628 = vsel %vm627, %v621, -1e+09
      %v629 = vsel %vm574, %v628, -inf
      %630 = vmax.xlane.f32.xlu0 %v629
      %v631 = vpop.xlane.xlu0 %630
      %v632 = vsub.f32 %v628, %v631
      %v633 = vmul.f32 %v632, 1.442695
      %v634 = vpow.pop %v633
      %v635 = vsel %vm574, %v634, 0.0
      %636 = vadd.xlane.f32.xlu0 %v635
      %v637 = vpop.xlane.xlu0 %636
      %v638 = vrcp.pop %v637
      %v639 = vmul.f32 %v634, %v638
      %v640 = vpack.c.bf16 %v639, %v639
      %v642 = vsel %vm574, %v640, 0
      %vm644 = vcmask 1043456
      %v646 = vsel %vm644, %v570, 0
      %648 = vmatprep.subr.bf16.mxu0 0
      %649 = vmatpush1.bf16.msra.mxu0 %v646
      %650 = vmatprep.subr.bf16.mxu0 0
      %651 = vmatpush1.bf16.msra.mxu0 0
      %652 = vmatprep.subr.bf16.mxu0 0
      %653 = vmatpush1.bf16.msra.mxu0 0
      %654 = vmatprep.subr.bf16.mxu0 0
      %655 = vmatpush1.bf16.msra.mxu0 0
      %656 = vmatprep.subr.bf16.mxu0 0
      %657 = vmatpush1.bf16.msra.mxu0 0
      %658 = vmatprep.subr.bf16.mxu0 0
      %659 = vmatpush1.bf16.msra.mxu0 0
      %660 = vmatprep.subr.bf16.mxu0 0
      %661 = vmatpush1.bf16.msra.mxu0 0
      %662 = vmatprep.subr.bf16.mxu0 0
      %663 = vmatpush1.bf16.msra.mxu0 0
      %664 = vmatprep.subr.bf16.mxu0 0
      %665 = vmatpush1.bf16.msra.mxu0 0
      %666 = vmatprep.subr.bf16.mxu0 0
      %667 = vmatpush1.bf16.msra.mxu0 0
      %668 = vmatprep.subr.bf16.mxu0 0
      %669 = vmatpush1.bf16.msra.mxu0 0
      %670 = vmatprep.subr.bf16.mxu0 0
      %671 = vmatpush1.bf16.msra.mxu0 0
      %672 = vmatprep.subr.bf16.mxu0 0
      %673 = vmatpush1.bf16.msra.mxu0 0
      %674 = vmatprep.subr.bf16.mxu0 0
      %675 = vmatpush1.bf16.msra.mxu0 0
      %676 = vmatprep.subr.bf16.mxu0 0
      %677 = vmatpush1.bf16.msra.mxu0 0
      %678 = vmatprep.subr.bf16.mxu0 0
      %679 = vmatpush1.bf16.msra.mxu0 0
      %680 = vmatprep.mubr.bf16.mxu0 0
      %681 = vmatmul.mubr.bf16.gmra.mrb[0].mxu0 %v642
      %v682 = vpop.f32.mrb[0].mxu0
      %v683 = vadd.f32 0.0, %v682
      %v684 = vpop.f32.mrb[0].mxu0
      %v685 = vpop.f32.mrb[0].mxu0
      %v686 = vpop.f32.mrb[0].mxu0
      %687 = vdwg.mxu0
      %v688 = vpack.c.bf16 %v683, %v683
      %vm689 = vcmask 60416
      %690 = vst.msk [vmem:[%s304] sm:$0xf] %vm689, %v688
      %692 = vrot.lane.b32.xlu0 %v419, 120
      %v693 = vpop.permute.xlu0 %692
      %695 = vrot.lane.b32.xlu0 %v569, 120
      %v696 = vpop.permute.xlu0 %695
      %v698 = vsel %vm574, %v693, 0
      %v701 = vsel %vm574, %v696, 0
      %703 = vmatprep.subr.bf16.mxu0 0
      %704 = vmatpush1.bf16.xpose.msra.mxu0 %v701
      %705 = vmatprep.subr.bf16.mxu0 0
      %706 = vmatpush1.bf16.xpose.msra.mxu0 0
      %707 = vmatprep.subr.bf16.mxu0 0
      %708 = vmatpush1.bf16.xpose.msra.mxu0 0
      %709 = vmatprep.subr.bf16.mxu0 0
      %710 = vmatpush1.bf16.xpose.msra.mxu0 0
      %711 = vmatprep.subr.bf16.mxu0 0
      %712 = vmatpush1.bf16.xpose.msra.mxu0 0
      %713 = vmatprep.subr.bf16.mxu0 0
      %714 = vmatpush1.bf16.xpose.msra.mxu0 0
      %715 = vmatprep.subr.bf16.mxu0 0
      %716 = vmatpush1.bf16.xpose.msra.mxu0 0
      %717 = vmatprep.subr.bf16.mxu0 0
      %718 = vmatpush1.bf16.xpose.msra.mxu0 0
      %719 = vmatprep.subr.bf16.mxu0 0
      %720 = vmatpush1.bf16.xpose.msra.mxu0 0
      %721 = vmatprep.subr.bf16.mxu0 0
      %722 = vmatpush1.bf16.xpose.msra.mxu0 0
      %723 = vmatprep.subr.bf16.mxu0 0
      %724 = vmatpush1.bf16.xpose.msra.mxu0 0
      %725 = vmatprep.subr.bf16.mxu0 0
      %726 = vmatpush1.bf16.xpose.msra.mxu0 0
      %727 = vmatprep.subr.bf16.mxu0 0
      %728 = vmatpush1.bf16.xpose.msra.mxu0 0
      %729 = vmatprep.subr.bf16.mxu0 0
      %730 = vmatpush1.bf16.xpose.msra.mxu0 0
      %731 = vmatprep.subr.bf16.mxu0 0
      %732 = vmatpush1.bf16.xpose.msra.mxu0 0
      %733 = vmatprep.subr.bf16.mxu0 0
      %734 = vmatpush1.bf16.xpose.msra.mxu0 0
      %735 = vmatprep.mubr.bf16.mxu0 0
      %736 = vmatmul.mubr.bf16.gmra.mrb[0].mxu0 %v698
      %v737 = vpop.f32.mrb[0].mxu0
      %v738 = vadd.f32 0.0, %v737
      %v739 = vpop.f32.mrb[0].mxu0
      %v740 = vpop.f32.mrb[0].mxu0
      %v741 = vpop.f32.mrb[0].mxu0
      %742 = vdwg.mxu0
      %v743 = vmul.f32 %v738, 0.35355338
      %v744 = vsel %vm627, %v743, -1e+09
      %v745 = vsel %vm574, %v744, -inf
      %746 = vmax.xlane.f32.xlu0 %v745
      %v747 = vpop.xlane.xlu0 %746
      %v748 = vsub.f32 %v744, %v747
      %v749 = vmul.f32 %v748, 1.442695
      %v750 = vpow.pop %v749
      %v751 = vsel %vm574, %v750, 0.0
      %752 = vadd.xlane.f32.xlu0 %v751
      %v753 = vpop.xlane.xlu0 %752
      %v754 = vrcp.pop %v753
      %v755 = vmul.f32 %v750, %v754
      %v756 = vpack.c.bf16 %v755, %v755
      %758 = vrot.lane.b32.xlu0 %v570, 120
      %v759 = vpop.permute.xlu0 %758
      %v761 = vsel %vm574, %v756, 0
      %v764 = vsel %vm644, %v759, 0
      %766 = vmatprep.subr.bf16.mxu0 0
      %767 = vmatpush1.bf16.msra.mxu0 %v764
      %768 = vmatprep.subr.bf16.mxu0 0
      %769 = vmatpush1.bf16.msra.mxu0 0
      %770 = vmatprep.subr.bf16.mxu0 0
      %771 = vmatpush1.bf16.msra.mxu0 0
      %772 = vmatprep.subr.bf16.mxu0 0
      %773 = vmatpush1.bf16.msra.mxu0 0
      %774 = vmatprep.subr.bf16.mxu0 0
      %775 = vmatpush1.bf16.msra.mxu0 0
      %776 = vmatprep.subr.bf16.mxu0 0
      %777 = vmatpush1.bf16.msra.mxu0 0
      %778 = vmatprep.subr.bf16.mxu0 0
      %779 = vmatpush1.bf16.msra.mxu0 0
      %780 = vmatprep.subr.bf16.mxu0 0
      %781 = vmatpush1.bf16.msra.mxu0 0
      %782 = vmatprep.subr.bf16.mxu0 0
      %783 = vmatpush1.bf16.msra.mxu0 0
      %784 = vmatprep.subr.bf16.mxu0 0
      %785 = vmatpush1.bf16.msra.mxu0 0
      %786 = vmatprep.subr.bf16.mxu0 0
      %787 = vmatpush1.bf16.msra.mxu0 0
      %788 = vmatprep.subr.bf16.mxu0 0
      %789 = vmatpush1.bf16.msra.mxu0 0
      %790 = vmatprep.subr.bf16.mxu0 0
      %791 = vmatpush1.bf16.msra.mxu0 0
      %792 = vmatprep.subr.bf16.mxu0 0
      %793 = vmatpush1.bf16.msra.mxu0 0
      %794 = vmatprep.subr.bf16.mxu0 0
      %795 = vmatpush1.bf16.msra.mxu0 0
      %796 = vmatprep.subr.bf16.mxu0 0
      %797 = vmatpush1.bf16.msra.mxu0 0
      %798 = vmatprep.mubr.bf16.mxu0 0
      %799 = vmatmul.mubr.bf16.gmra.mrb[0].mxu0 %v761
      %v800 = vpop.f32.mrb[0].mxu0
      %v801 = vadd.f32 0.0, %v800
      %v802 = vpop.f32.mrb[0].mxu0
      %v803 = vpop.f32.mrb[0].mxu0
      %v804 = vpop.f32.mrb[0].mxu0
      %805 = vdwg.mxu0
      %v806 = vpack.c.bf16 %v801, %v801
      %v808 = vunpack.c.l.b16 %v806
      %v809 = vpack.c.b16 %v808, %v808
      %810 = vrot.lane.b32.xlu0 %v809, 8
      %v811 = vpop.permute.xlu0 %810
      %vm813 = vcmask 126016
      %814 = vst.msk [vmem:[%s304] sm:$0xf] %vm813, %v811
      %815 = vrot.lane.b32.xlu0 %v419, 112
      %v816 = vpop.permute.xlu0 %815
      %817 = vrot.lane.b32.xlu0 %v569, 112
      %v818 = vpop.permute.xlu0 %817
      %v820 = vsel %vm574, %v816, 0
      %v823 = vsel %vm574, %v818, 0
      %825 = vmatprep.subr.bf16.mxu0 0
      %826 = vmatpush1.bf16.xpose.msra.mxu0 %v823
      %827 = vmatprep.subr.bf16.mxu0 0
      %828 = vmatpush1.bf16.xpose.msra.mxu0 0
      %829 = vmatprep.subr.bf16.mxu0 0
      %830 = vmatpush1.bf16.xpose.msra.mxu0 0
      %831 = vmatprep.subr.bf16.mxu0 0
      %832 = vmatpush1.bf16.xpose.msra.mxu0 0
      %833 = vmatprep.subr.bf16.mxu0 0
      %834 = vmatpush1.bf16.xpose.msra.mxu0 0
      %835 = vmatprep.subr.bf16.mxu0 0
      %836 = vmatpush1.bf16.xpose.msra.mxu0 0
      %837 = vmatprep.subr.bf16.mxu0 0
      %838 = vmatpush1.bf16.xpose.msra.mxu0 0
      %839 = vmatprep.subr.bf16.mxu0 0
      %840 = vmatpush1.bf16.xpose.msra.mxu0 0
      %841 = vmatprep.subr.bf16.mxu0 0
      %842 = vmatpush1.bf16.xpose.msra.mxu0 0
      %843 = vmatprep.subr.bf16.mxu0 0
      %844 = vmatpush1.bf16.xpose.msra.mxu0 0
      %845 = vmatprep.subr.bf16.mxu0 0
      %846 = vmatpush1.bf16.xpose.msra.mxu0 0
      %847 = vmatprep.subr.bf16.mxu0 0
      %848 = vmatpush1.bf16.xpose.msra.mxu0 0
      %849 = vmatprep.subr.bf16.mxu0 0
      %850 = vmatpush1.bf16.xpose.msra.mxu0 0
      %851 = vmatprep.subr.bf16.mxu0 0
      %852 = vmatpush1.bf16.xpose.msra.mxu0 0
      %853 = vmatprep.subr.bf16.mxu0 0
      %854 = vmatpush1.bf16.xpose.msra.mxu0 0
      %855 = vmatprep.subr.bf16.mxu0 0
      %856 = vmatpush1.bf16.xpose.msra.mxu0 0
      %857 = vmatprep.mubr.bf16.mxu0 0
      %858 = vmatmul.mubr.bf16.gmra.mrb[0].mxu0 %v820
      %v859 = vpop.f32.mrb[0].mxu0
      %v860 = vadd.f32 0.0, %v859
      %v861 = vpop.f32.mrb[0].mxu0
      %v862 = vpop.f32.mrb[0].mxu0
      %v863 = vpop.f32.mrb[0].mxu0
      %864 = vdwg.mxu0
      %v865 = vmul.f32 %v860, 0.35355338
      %v866 = vsel %vm627, %v865, -1e+09
      %v867 = vsel %vm574, %v866, -inf
      %868 = vmax.xlane.f32.xlu0 %v867
      %v869 = vpop.xlane.xlu0 %868
      %v870 = vsub.f32 %v866, %v869
      %v871 = vmul.f32 %v870, 1.442695
      %v872 = vpow.pop %v871
      %v873 = vsel %vm574, %v872, 0.0
      %874 = vadd.xlane.f32.xlu0 %v873
      %v875 = vpop.xlane.xlu0 %874
      %v876 = vrcp.pop %v875
      %v877 = vmul.f32 %v872, %v876
      %v878 = vpack.c.bf16 %v877, %v877
      %879 = vrot.lane.b32.xlu0 %v570, 112
      %v880 = vpop.permute.xlu0 %879
      %v882 = vsel %vm574, %v878, 0
      %v885 = vsel %vm644, %v880, 0
      %887 = vmatprep.subr.bf16.mxu0 0
      %888 = vmatpush1.bf16.msra.mxu0 %v885
      %889 = vmatprep.subr.bf16.mxu0 0
      %890 = vmatpush1.bf16.msra.mxu0 0
      %891 = vmatprep.subr.bf16.mxu0 0
      %892 = vmatpush1.bf16.msra.mxu0 0
      %893 = vmatprep.subr.bf16.mxu0 0
      %894 = vmatpush1.bf16.msra.mxu0 0
      %895 = vmatprep.subr.bf16.mxu0 0
      %896 = vmatpush1.bf16.msra.mxu0 0
      %897 = vmatprep.subr.bf16.mxu0 0
      %898 = vmatpush1.bf16.msra.mxu0 0
      %899 = vmatprep.subr.bf16.mxu0 0
      %900 = vmatpush1.bf16.msra.mxu0 0
      %901 = vmatprep.subr.bf16.mxu0 0
      %902 = vmatpush1.bf16.msra.mxu0 0
      %903 = vmatprep.subr.bf16.mxu0 0
      %904 = vmatpush1.bf16.msra.mxu0 0
      %905 = vmatprep.subr.bf16.mxu0 0
      %906 = vmatpush1.bf16.msra.mxu0 0
      %907 = vmatprep.subr.bf16.mxu0 0
      %908 = vmatpush1.bf16.msra.mxu0 0
      %909 = vmatprep.subr.bf16.mxu0 0
      %910 = vmatpush1.bf16.msra.mxu0 0
      %911 = vmatprep.subr.bf16.mxu0 0
      %912 = vmatpush1.bf16.msra.mxu0 0
      %913 = vmatprep.subr.bf16.mxu0 0
      %914 = vmatpush1.bf16.msra.mxu0 0
      %915 = vmatprep.subr.bf16.mxu0 0
      %916 = vmatpush1.bf16.msra.mxu0 0
      %917 = vmatprep.subr.bf16.mxu0 0
      %918 = vmatpush1.bf16.msra.mxu0 0
      %919 = vmatprep.mubr.bf16.mxu0 0
      %920 = vmatmul.mubr.bf16.gmra.mrb[0].mxu0 %v882
      %v921 = vpop.f32.mrb[0].mxu0
      %v922 = vadd.f32 0.0, %v921
      %v923 = vpop.f32.mrb[0].mxu0
      %v924 = vpop.f32.mrb[0].mxu0
      %v925 = vpop.f32.mrb[0].mxu0
      %926 = vdwg.mxu0
      %v927 = vpack.c.bf16 %v922, %v922
      %v929 = vunpack.c.l.b16 %v927
      %v930 = vpack.c.b16 %v929, %v929
      %931 = vrot.lane.b32.xlu0 %v930, 16
      %v932 = vpop.permute.xlu0 %931
      %vm934 = vcmask 191616
      %935 = vst.msk [vmem:[%s304] sm:$0xf] %vm934, %v932
      %936 = vrot.lane.b32.xlu0 %v419, 104
      %v937 = vpop.permute.xlu0 %936
      %938 = vrot.lane.b32.xlu0 %v569, 104
      %v939 = vpop.permute.xlu0 %938
      %v941 = vsel %vm574, %v937, 0
      %v944 = vsel %vm574, %v939, 0
      %946 = vmatprep.subr.bf16.mxu0 0
      %947 = vmatpush1.bf16.xpose.msra.mxu0 %v944
      %948 = vmatprep.subr.bf16.mxu0 0
      %949 = vmatpush1.bf16.xpose.msra.mxu0 0
      %950 = vmatprep.subr.bf16.mxu0 0
      %951 = vmatpush1.bf16.xpose.msra.mxu0 0
      %952 = vmatprep.subr.bf16.mxu0 0
      %953 = vmatpush1.bf16.xpose.msra.mxu0 0
      %954 = vmatprep.subr.bf16.mxu0 0
      %955 = vmatpush1.bf16.xpose.msra.mxu0 0
      %956 = vmatprep.subr.bf16.mxu0 0
      %957 = vmatpush1.bf16.xpose.msra.mxu0 0
      %958 = vmatprep.subr.bf16.mxu0 0
      %959 = vmatpush1.bf16.xpose.msra.mxu0 0
      %960 = vmatprep.subr.bf16.mxu0 0
      %961 = vmatpush1.bf16.xpose.msra.mxu0 0
      %962 = vmatprep.subr.bf16.mxu0 0
      %963 = vmatpush1.bf16.xpose.msra.mxu0 0
      %964 = vmatprep.subr.bf16.mxu0 0
      %965 = vmatpush1.bf16.xpose.msra.mxu0 0
      %966 = vmatprep.subr.bf16.mxu0 0
      %967 = vmatpush1.bf16.xpose.msra.mxu0 0
      %968 = vmatprep.subr.bf16.mxu0 0
      %969 = vmatpush1.bf16.xpose.msra.mxu0 0
      %970 = vmatprep.subr.bf16.mxu0 0
      %971 = vmatpush1.bf16.xpose.msra.mxu0 0
      %972 = vmatprep.subr.bf16.mxu0 0
      %973 = vmatpush1.bf16.xpose.msra.mxu0 0
      %974 = vmatprep.subr.bf16.mxu0 0
      %975 = vmatpush1.bf16.xpose.msra.mxu0 0
      %976 = vmatprep.subr.bf16.mxu0 0
      %977 = vmatpush1.bf16.xpose.msra.mxu0 0
      %978 = vmatprep.mubr.bf16.mxu0 0
      %979 = vmatmul.mubr.bf16.gmra.mrb[0].mxu0 %v941
      %v980 = vpop.f32.mrb[0].mxu0
      %v981 = vadd.f32 0.0, %v980
      %v982 = vpop.f32.mrb[0].mxu0
      %v983 = vpop.f32.mrb[0].mxu0
      %v984 = vpop.f32.mrb[0].mxu0
      %985 = vdwg.mxu0
      %v986 = vmul.f32 %v981, 0.35355338
      %v987 = vsel %vm627, %v986, -1e+09
      %v988 = vsel %vm574, %v987, -inf
      %989 = vmax.xlane.f32.xlu0 %v988
      %v990 = vpop.xlane.xlu0 %989
      %v991 = vsub.f32 %v987, %v990
      %v992 = vmul.f32 %v991, 1.442695
      %v993 = vpow.pop %v992
      %v994 = vsel %vm574, %v993, 0.0
      %995 = vadd.xlane.f32.xlu0 %v994
      %v996 = vpop.xlane.xlu0 %995
      %v997 = vrcp.pop %v996
      %v998 = vmul.f32 %v993, %v997
      %v999 = vpack.c.bf16 %v998, %v998
      %1000 = vrot.lane.b32.xlu0 %v570, 104
      %v1001 = vpop.permute.xlu0 %1000
      %v1003 = vsel %vm574, %v999, 0
      %v1006 = vsel %vm644, %v1001, 0
      %1008 = vmatprep.subr.bf16.mxu0 0
      %1009 = vmatpush1.bf16.msra.mxu0 %v1006
      %1010 = vmatprep.subr.bf16.mxu0 0
      %1011 = vmatpush1.bf16.msra.mxu0 0
      %1012 = vmatprep.subr.bf16.mxu0 0
      %1013 = vmatpush1.bf16.msra.mxu0 0
      %1014 = vmatprep.subr.bf16.mxu0 0
      %1015 = vmatpush1.bf16.msra.mxu0 0
      %1016 = vmatprep.subr.bf16.mxu0 0
      %1017 = vmatpush1.bf16.msra.mxu0 0
      %1018 = vmatprep.subr.bf16.mxu0 0
      %1019 = vmatpush1.bf16.msra.mxu0 0
      %1020 = vmatprep.subr.bf16.mxu0 0
      %1021 = vmatpush1.bf16.msra.mxu0 0
      %1022 = vmatprep.subr.bf16.mxu0 0
      %1023 = vmatpush1.bf16.msra.mxu0 0
      %1024 = vmatprep.subr.bf16.mxu0 0
      %1025 = vmatpush1.bf16.msra.mxu0 0
      %1026 = vmatprep.subr.bf16.mxu0 0
      %1027 = vmatpush1.bf16.msra.mxu0 0
      %1028 = vmatprep.subr.bf16.mxu0 0
      %1029 = vmatpush1.bf16.msra.mxu0 0
      %1030 = vmatprep.subr.bf16.mxu0 0
      %1031 = vmatpush1.bf16.msra.mxu0 0
      %1032 = vmatprep.subr.bf16.mxu0 0
      %1033 = vmatpush1.bf16.msra.mxu0 0
      %1034 = vmatprep.subr.bf16.mxu0 0
      %1035 = vmatpush1.bf16.msra.mxu0 0
      %1036 = vmatprep.subr.bf16.mxu0 0
      %1037 = vmatpush1.bf16.msra.mxu0 0
      %1038 = vmatprep.subr.bf16.mxu0 0
      %1039 = vmatpush1.bf16.msra.mxu0 0
      %1040 = vmatprep.mubr.bf16.mxu0 0
      %1041 = vmatmul.mubr.bf16.gmra.mrb[0].mxu0 %v1003
      %v1042 = vpop.f32.mrb[0].mxu0
      %v1043 = vadd.f32 0.0, %v1042
      %v1044 = vpop.f32.mrb[0].mxu0
      %v1045 = vpop.f32.mrb[0].mxu0
      %v1046 = vpop.f32.mrb[0].mxu0
      %1047 = vdwg.mxu0
      %v1048 = vpack.c.bf16 %v1043, %v1043
      %v1050 = vunpack.c.l.b16 %v1048
      %v1051 = vpack.c.b16 %v1050, %v1050
      %1052 = vrot.lane.b32.xlu0 %v1051, 24
      %v1053 = vpop.permute.xlu0 %1052
      %vm1055 = vcmask 257216
      %1056 = vst.msk [vmem:[%s304] sm:$0xf] %vm1055, %v1053
      %p1057 = scmp.lt.s32.totalorder %s18, 1
      %s1058 = scalar_select %p1057, %s18, 1
      %s1059 = smul.addr %s1058, 4
      %s1060 = scalar_lea.vmem %s7, %s1059
      // Predicated region
      $region49: #{transformer_forward.25} parent=47 // pred_check
        %p1061 = pneg %p198
      $region50: #{transformer_forward.25} parent=47 // pred_check_branch
        %1063 = sbr.rel (%p1061) target = $region52
      $region51: #{transformer_forward.25} parent=47 // pred_region
        _
      $region52: #{transformer_forward.25} parent=47 // pred_fallthru
        _
    $region48: #{transformer_forward.25} parent=5 // pred_fallthru
      _
    %p1064 = scmp.le.s32.totalorder 2, %s13
    // Predicated region
    $region53: #{transformer_forward.25} parent=5 // pred_check
      %p1065 = pneg %p1064
    $region54: #{transformer_forward.25} parent=5 // pred_check_branch
      %1067 = sbr.rel (%p1065) target = $region56
    $region55: #{transformer_forward.25} parent=5 // pred_region
      %s1068 = ssub.s32 %s13, 2
      // Predicated region
      $region57: #{transformer_forward.25} parent=55 // pred_check
        %p1069 = pneg %p204
      $region58: #{transformer_forward.25} parent=55 // pred_check_branch
        %1071 = sbr.rel (%p1069) target = $region60
      $region59: #{transformer_forward.25} parent=55 // pred_region
        %p1072 = scmp.lt.s32.totalorder %s19, 1
        %s1073 = scalar_select %p1072, %s19, 1
        %s1074 = smul.addr %s1073, 4
        %s1075 = scalar_lea.vmem %s7, %s1074
      $region60: #{transformer_forward.25} parent=55 // pred_fallthru
        _
    $region56: #{transformer_forward.25} parent=5 // pred_fallthru
      _
  $region6: #{transformer_forward.25} parent=0 // loop_footer
    %s17 = sadd.s32 1, %s13
  $region7: #{transformer_forward.25} parent=0 // loop_footer_branch
    %12 = sbr.rel target = $region3
  $region8: #{transformer_forward.25} parent=0 // loop_exit
    _

</llo_original>
